<compile_context>
chip_gen: v7x
topology: tpu7x:2x2x1
jax: 0.10.0
libtpu: 0.0.40
codegen_flags: <defaults>
</compile_context>

<pallas_src>
import jax
import jax.numpy as jnp
from jax import lax
from jax.experimental import pallas as pl
from jax.experimental.pallas import tpu as pltpu

LANE = 128
SUBLANE = 8


def _round_up(n, m):
    return ((n + m - 1) // m) * m


def _pad2d(x, rows, cols):
    r, c = x.shape
    return jnp.pad(x, ((0, rows - r), (0, cols - c)))


def _sigmoid(x):
    # Same formulation in kernel and reference (exp -> EUP, divide -> VPU).
    return 1.0 / (1.0 + jnp.exp(-x))


# ----------------------------------------------------------------------------
# One-time parameter preparation (hoisted out of the per-call path).
# ----------------------------------------------------------------------------
def prepare_ode_one_cell_params(w_ih, b_ih, w_hh, b_hh, w_ly, b_ly, y_type, *,
                                k_in_total, k_h, k_out):
    """Transpose to row-major matmul layout and pad every feature axis to a
    multiple of 128 lanes.  GRU gate blocks (r, z, n) are placed at lane
    offsets g*Kh so in-kernel gate slices are 128-lane aligned."""
    Kin = _round_up(k_in_total, LANE)
    Kh = _round_up(k_h, LANE)
    Ko = _round_up(k_out, LANE)

    wih_t = jnp.zeros((Kin, 3 * Kh), jnp.float32)
    whh_t = jnp.zeros((Kh, 3 * Kh), jnp.float32)
    bih = jnp.zeros((1, 3 * Kh), jnp.float32)
    bhh = jnp.zeros((1, 3 * Kh), jnp.float32)
    for g in range(3):                                  # PyTorch gate order r,z,n
        src = slice(g * k_h, (g + 1) * k_h)
        dst = slice(g * Kh, g * Kh + k_h)
        wih_t = wih_t.at[:k_in_total, dst].set(w_ih[src, :].T)
        whh_t = whh_t.at[:k_h, dst].set(w_hh[src, :].T)
        bih = bih.at[0, dst].set(b_ih[src])
        bhh = bhh.at[0, dst].set(b_hh[src])

    wly_t = jnp.zeros((Kh, Ko), jnp.float32).at[:k_h, :k_out].set(w_ly.T)
    bly = jnp.zeros((1, Ko), jnp.float32).at[0, :k_out].set(b_ly)
    # Padded y channels get type 2 ('n') with Ly_out == 0 -> stay exactly 0.
    ytype = jnp.full((1, Ko), 2, jnp.int32).at[0, :k_out].set(
        jnp.asarray(y_type, jnp.int32))

    return dict(wih_t=wih_t, bih=bih, whh_t=whh_t, bhh=bhh,
                wly_t=wly_t, bly=bly, ytype=ytype,
                dims=(k_in_total, k_h, k_out, Kin, Kh, Ko))


# ----------------------------------------------------------------------------
# Kernel: fused GRU-ODE (fixed-step RK4) + Ly + y_type update.
# ----------------------------------------------------------------------------
def _make_kernel(n_steps, step_h):
    def kernel(x_ref, h0_ref, y0_ref, wih_ref, bih_ref, whh_ref, bhh_ref,
               wly_ref, bly_ref, ytype_ref, dt_ref, ynew_ref, hnew_ref):
        Kh = whh_ref.shape[0]

        # Input-side gate pre-activations are constant over the whole ODE
        # integration (x does not change): one MXU pass, hoisted out of RK4.
        gi = jnp.dot(x_ref[...], wih_ref[...],
                     preferred_element_type=jnp.float32) + bih_ref[...]
        gi_r = gi[:, 0 * Kh:1 * Kh]
        gi_z = gi[:, 1 * Kh:2 * Kh]
        gi_n = gi[:, 2 * Kh:3 * Kh]

        whh = whh_ref[...]
        bhh = bhh_ref[...]

        def dh_dt(h):
            # f(t, h) = GRUCell(x, h) - h   (derivate_correct, factor = 1)
            gh = jnp.dot(h, whh, preferred_element_type=jnp.float32) + bhh
            r = _sigmoid(gi_r + gh[:, 0 * Kh:1 * Kh])
            z = _sigmoid(gi_z + gh[:, 1 * Kh:2 * Kh])
            n = jnp.tanh(gi_n + r * gh[:, 2 * Kh:3 * Kh])
            h_new = (1.0 - z) * n + z * h
            return h_new - h

        def rk4_step(_, h):
            k1 = dh_dt(h)
            k2 = dh_dt(h + (0.5 * step_h) * k1)
            k3 = dh_dt(h + (0.5 * step_h) * k2)
            k4 = dh_dt(h + step_h * k3)
            return h + (step_h / 6.0) * (k1 + 2.0 * k2 + 2.0 * k3 + k4)

        # h stays resident on-chip for the whole integration (no HBM traffic
        # per solver step).  Unrolled so the LLO scheduler sees the loop body.
        h = lax.fori_loop(0, n_steps, rk4_step,
                          h0_ref[...].astype(jnp.float32), unroll=True)

        # y update: per output channel selected by y_type (0='d', 1='s', 2='n')
        ly = jnp.dot(h, wly_ref[...],
                     preferred_element_type=jnp.float32) + bly_ref[...]
        yt = y0_ref[...].astype(jnp.float32)
        dt = dt_ref[...]                  # (1, 1) -> broadcast
        ytype = ytype_ref[...]            # (1, Ko) -> broadcast
        y_new = jnp.where(ytype == 0, ly,
                          jnp.where(ytype == 1,
                                    yt + (ly - yt) * dt,
                                    yt + ly * dt))

        ynew_ref[...] = y_new.astype(ynew_ref.dtype)
        hnew_ref[...] = h.astype(hnew_ref.dtype)

    return kernel


def _choose_tm(batch_rounded):
    # Multiple-of-8 batch tile; >=2 grid steps when the batch allows it (v7x
    # megacore); capped at 128 rows to keep RK4 vreg pressure reasonable.
    if batch_rounded <= 8:
        return 8
    tm = min(128, batch_rounded // 2)
    return max(SUBLANE, (tm // SUBLANE) * SUBLANE)


def ode_one_cell_forward(state, xt, dt, params, *, n_steps=4, t1=0.1):
    """Fused ODEOneCell.forward: returns concat([y_new, h_new], -1)."""
    k_in_total, k_h, k_out, Kin, Kh, Ko = params["dims"]
    B = state.shape[0]
    assert state.shape[1] == k_out + k_h
    assert xt.shape == (B, k_in_total)

    tm = _choose_tm(_round_up(B, SUBLANE))
    Bp = _round_up(B, tm)
    grid = (Bp // tm,)

    # Per-call layout plumbing: split the packed state and present lane-dense
    # (multiple-of-128) slabs so every kernel load/store is a full-vreg op.
    yt = _pad2d(state[:, :k_out], Bp, Ko)
    ht = _pad2d(state[:, k_out:], Bp, Kh)
    x = _pad2d(xt, Bp, Kin)
    dt_arr = jnp.asarray(dt, jnp.float32).reshape(1, 1)

    kernel = _make_kernel(n_steps=n_steps, step_h=float(t1) / float(n_steps))

    def row_spec(cols):
        return pl.BlockSpec((tm, cols), lambda i: (i, 0))

    def const_spec(r, c):
        return pl.BlockSpec((r, c), lambda i: (0, 0))

    y_new, h_new = pl.pallas_call(
        kernel,
        out_shape=(jax.ShapeDtypeStruct((Bp, Ko), jnp.float32),
                   jax.ShapeDtypeStruct((Bp, Kh), jnp.float32)),
        grid_spec=pltpu.PrefetchScalarGridSpec(
            num_scalar_prefetch=0,
            grid=grid,
            in_specs=[
                row_spec(Kin),                 # x tile
                row_spec(Kh),                  # h0 tile
                row_spec(Ko),                  # y0 tile
                const_spec(Kin, 3 * Kh),       # W_ih^T (resident)
                const_spec(1, 3 * Kh),         # b_ih
                const_spec(Kh, 3 * Kh),        # W_hh^T (resident)
                const_spec(1, 3 * Kh),         # b_hh
                const_spec(Kh, Ko),            # W_Ly^T (resident)
                const_spec(1, Ko),             # b_Ly
                const_spec(1, Ko),             # y_type
                const_spec(1, 1),              # dt
            ],
            out_specs=[row_spec(Ko), row_spec(Kh)],
        ),
        compiler_params=pltpu.CompilerParams(
            dimension_semantics=("parallel",),
            vmem_limit_bytes=32 * 1024 * 1024,
        ),
    )(x, ht, yt, params["wih_t"], params["bih"], params["whh_t"],
      params["bhh"], params["wly_t"], params["bly"], params["ytype"], dt_arr)

    return jnp.concatenate([y_new[:B, :k_out], h_new[:B, :k_h]], axis=-1)


# ----------------------------------------------------------------------------
# Pure-JAX reference (unpadded), same fixed-step RK4.
# ----------------------------------------------------------------------------
def reference_forward(state, xt, dt, raw_params, y_type, *, k_out, n_steps, t1):
    w_ih, b_ih, w_hh, b_hh, w_ly, b_ly = raw_params
    yt = state[:, :k_out]
    h = state[:, k_out:]

    def gru_cell(x, hh):
        gi = x @ w_ih.T + b_ih
        gh = hh @ w_hh.T + b_hh
        i_r, i_z, i_n = jnp.split(gi, 3, axis=-1)
        h_r, h_z, h_n = jnp.split(gh, 3, axis=-1)
        r = _sigmoid(i_r + h_r)
        z = _sigmoid(i_z + h_z)
        n = jnp.tanh(i_n + r * h_n)
        return (1.0 - z) * n + z * hh

    f = lambda hh: gru_cell(xt, hh) - hh
    step = t1 / n_steps
    for _ in range(n_steps):
        k1 = f(h)
        k2 = f(h + 0.5 * step * k1)
        k3 = f(h + 0.5 * step * k2)
        k4 = f(h + step * k3)
        h = h + (step / 6.0) * (k1 + 2.0 * k2 + 2.0 * k3 + k4)

    ly = h @ w_ly.T + b_ly
    yt_arr = jnp.asarray(y_type, jnp.int32)
    y_new = jnp.where(yt_arr == 0, ly,
                      jnp.where(yt_arr == 1,
                                yt + (ly - yt) * dt,
                                yt + ly * dt))
    return jnp.concatenate([y_new, h], axis=-1)


if __name__ == "__main__":
    key = jax.random.PRNGKey(0)

    B = 8
    k_in, k_expand_in = 4, 4
    k_in_total = k_in + k_expand_in          # GRUCell input size
    k_h = 32
    k_out = 8
    y_type_chars = ['d', 's', 'n', 'd', 's', 'n', 'd', 's']
    y_type = [0 if c == 'd' else (1 if c == 's' else 2) for c in y_type_chars]
    dt = 0.05
    N_STEPS = 4                               # fixed-step RK4 over t in [0, 0.1]
    T1 = 0.1

    ks = jax.random.split(key, 8)
    bound = 1.0 / jnp.sqrt(k_h)               # PyTorch GRUCell / Linear init bound
    w_ih = jax.random.uniform(ks[0], (3 * k_h, k_in_total), jnp.float32, -bound, bound)
    w_hh = jax.random.uniform(ks[1], (3 * k_h, k_h), jnp.float32, -bound, bound)
    b_ih = jax.random.uniform(ks[2], (3 * k_h,), jnp.float32, -bound, bound)
    b_hh = jax.random.uniform(ks[3], (3 * k_h,), jnp.float32, -bound, bound)
    w_ly = jax.random.uniform(ks[4], (k_out, k_h), jnp.float32, -bound, bound)
    b_ly = jax.random.uniform(ks[5], (k_out,), jnp.float32, -bound, bound)

    state = jax.random.normal(ks[6], (B, k_out + k_h), dtype=jnp.float32)
    xt = jax.random.normal(ks[7], (B, k_in_total), dtype=jnp.float32)

    # One-time parameter layout prep (hoisted out of the per-step path).
    params = prepare_ode_one_cell_params(
        w_ih, b_ih, w_hh, b_hh, w_ly, b_ly, y_type,
        k_in_total=k_in_total, k_h=k_h, k_out=k_out)

    out = ode_one_cell_forward(state, xt, dt, params, n_steps=N_STEPS, t1=T1)
    out = jax.block_until_ready(out)

    ref = reference_forward(state, xt, dt,
                            (w_ih, b_ih, w_hh, b_hh, w_ly, b_ly),
                            y_type, k_out=k_out, n_steps=N_STEPS, t1=T1)

    assert out.shape == (B, k_out + k_h)
    assert jnp.allclose(out, ref, atol=5e-4, rtol=5e-4), "mismatch vs reference"

    print("KERNEL_OK")
</pallas_src>

<mosaic_0001>
module attributes {stable_mosaic.version = 11 : i64} {
  func.func @kernel(%arg0: i32, %arg1: memref<8x128xf32, #tpu.memory_space<vmem>>, %arg2: memref<8x128xf32, #tpu.memory_space<vmem>>, %arg3: memref<8x128xf32, #tpu.memory_space<vmem>>, %arg4: memref<128x384xf32, #tpu.memory_space<vmem>>, %arg5: memref<1x384xf32, #tpu.memory_space<vmem>>, %arg6: memref<128x384xf32, #tpu.memory_space<vmem>>, %arg7: memref<1x384xf32, #tpu.memory_space<vmem>>, %arg8: memref<128x128xf32, #tpu.memory_space<vmem>>, %arg9: memref<1x128xf32, #tpu.memory_space<vmem>>, %arg10: memref<1x128xi32, #tpu.memory_space<vmem>>, %arg11: memref<1x1xf32, #tpu.memory_space<vmem>>, %arg12: memref<8x128xf32, #tpu.memory_space<vmem>>, %arg13: memref<8x128xf32, #tpu.memory_space<vmem>>) attributes {dimension_semantics = [#tpu.dimension_semantics<parallel>], iteration_bounds = array<i64: 1>, scalar_prefetch = 0 : i64, scratch_operands = 0 : i64, tpu.core_type = #tpu.core_type<tc>, window_params = [{transform_indices = @transform_0, window_bounds = array<i64: 8, 128>}, {transform_indices = @transform_1, window_bounds = array<i64: 8, 128>}, {transform_indices = @transform_2, window_bounds = array<i64: 8, 128>}, {pipeline_mode = #tpu.pipeline_mode<synchronous>, transform_indices = @transform_3, window_bounds = array<i64: 128, 384>}, {pipeline_mode = #tpu.pipeline_mode<synchronous>, transform_indices = @transform_4, window_bounds = array<i64: 1, 384>}, {pipeline_mode = #tpu.pipeline_mode<synchronous>, transform_indices = @transform_5, window_bounds = array<i64: 128, 384>}, {pipeline_mode = #tpu.pipeline_mode<synchronous>, transform_indices = @transform_6, window_bounds = array<i64: 1, 384>}, {pipeline_mode = #tpu.pipeline_mode<synchronous>, transform_indices = @transform_7, window_bounds = array<i64: 128, 128>}, {pipeline_mode = #tpu.pipeline_mode<synchronous>, transform_indices = @transform_8, window_bounds = array<i64: 1, 128>}, {pipeline_mode = #tpu.pipeline_mode<synchronous>, transform_indices = @transform_9, window_bounds = array<i64: 1, 128>}, {pipeline_mode = #tpu.pipeline_mode<synchronous>, transform_indices = @transform_10, window_bounds = array<i64: 1, 1>}, {transform_indices = @transform_11, window_bounds = array<i64: 8, 128>}, {transform_indices = @transform_12, window_bounds = array<i64: 8, 128>}]} {
    %c0 = arith.constant 0 : index
    %c0_0 = arith.constant 0 : index
    %0 = vector.load %arg1[%c0, %c0_0] : memref<8x128xf32, #tpu.memory_space<vmem>>, vector<8x128xf32>
    %c0_1 = arith.constant 0 : index
    %c0_2 = arith.constant 0 : index
    %1 = vector.load %arg4[%c0_1, %c0_2] : memref<128x384xf32, #tpu.memory_space<vmem>>, vector<128x384xf32>
    %cst = arith.constant dense<0.000000e+00> : vector<8x384xf32>
    %2 = tpu.matmul %0, %1, %cst {dimension_numbers = #tpu.dot_dimension_numbers<[1], [0], [0], [1], [0, 0, 1, 1], [], []>} : vector<8x128xf32>, vector<128x384xf32>, vector<8x384xf32> -> vector<8x384xf32>
    %c0_3 = arith.constant 0 : index
    %c0_4 = arith.constant 0 : index
    %3 = vector.load %arg5[%c0_3, %c0_4] : memref<1x384xf32, #tpu.memory_space<vmem>>, vector<1x384xf32>
    %4 = vector.broadcast %3 : vector<1x384xf32> to vector<8x384xf32>
    %5 = arith.addf %2, %4 : vector<8x384xf32>
    %6 = vector.extract_strided_slice %5 {offsets = [0, 0], sizes = [8, 128], strides = [1, 1]} : vector<8x384xf32> to vector<8x128xf32>
    %7 = vector.extract_strided_slice %5 {offsets = [0, 128], sizes = [8, 128], strides = [1, 1]} : vector<8x384xf32> to vector<8x128xf32>
    %8 = vector.extract_strided_slice %5 {offsets = [0, 256], sizes = [8, 128], strides = [1, 1]} : vector<8x384xf32> to vector<8x128xf32>
    %c0_5 = arith.constant 0 : index
    %c0_6 = arith.constant 0 : index
    %9 = vector.load %arg6[%c0_5, %c0_6] : memref<128x384xf32, #tpu.memory_space<vmem>>, vector<128x384xf32>
    %c0_7 = arith.constant 0 : index
    %c0_8 = arith.constant 0 : index
    %10 = vector.load %arg7[%c0_7, %c0_8] : memref<1x384xf32, #tpu.memory_space<vmem>>, vector<1x384xf32>
    %c0_9 = arith.constant 0 : index
    %c0_10 = arith.constant 0 : index
    %11 = vector.load %arg2[%c0_9, %c0_10] : memref<8x128xf32, #tpu.memory_space<vmem>>, vector<8x128xf32>
    %c0_i32 = arith.constant 0 : i32
    %cst_11 = arith.constant dense<0.000000e+00> : vector<8x384xf32>
    %12 = tpu.matmul %11, %9, %cst_11 {dimension_numbers = #tpu.dot_dimension_numbers<[1], [0], [0], [1], [0, 0, 1, 1], [], []>} : vector<8x128xf32>, vector<128x384xf32>, vector<8x384xf32> -> vector<8x384xf32>
    %13 = vector.broadcast %10 : vector<1x384xf32> to vector<8x384xf32>
    %14 = arith.addf %12, %13 : vector<8x384xf32>
    %15 = vector.extract_strided_slice %14 {offsets = [0, 0], sizes = [8, 128], strides = [1, 1]} : vector<8x384xf32> to vector<8x128xf32>
    %16 = arith.addf %6, %15 : vector<8x128xf32>
    %cst_12 = arith.constant 0.000000e+00 : f32
    %17 = vector.broadcast %cst_12 : f32 to vector<8x128xf32>
    %18 = arith.subf %17, %16 : vector<8x128xf32>
    %19 = math.exp %18 : vector<8x128xf32>
    %cst_13 = arith.constant 1.000000e+00 : f32
    %20 = vector.broadcast %cst_13 : f32 to vector<8x128xf32>
    %21 = arith.addf %20, %19 : vector<8x128xf32>
    %cst_14 = arith.constant 1.000000e+00 : f32
    %22 = vector.broadcast %cst_14 : f32 to vector<8x128xf32>
    %23 = arith.divf %22, %21 : vector<8x128xf32>
    %24 = vector.extract_strided_slice %14 {offsets = [0, 128], sizes = [8, 128], strides = [1, 1]} : vector<8x384xf32> to vector<8x128xf32>
    %25 = arith.addf %7, %24 : vector<8x128xf32>
    %cst_15 = arith.constant 0.000000e+00 : f32
    %26 = vector.broadcast %cst_15 : f32 to vector<8x128xf32>
    %27 = arith.subf %26, %25 : vector<8x128xf32>
    %28 = math.exp %27 : vector<8x128xf32>
    %cst_16 = arith.constant 1.000000e+00 : f32
    %29 = vector.broadcast %cst_16 : f32 to vector<8x128xf32>
    %30 = arith.addf %29, %28 : vector<8x128xf32>
    %cst_17 = arith.constant 1.000000e+00 : f32
    %31 = vector.broadcast %cst_17 : f32 to vector<8x128xf32>
    %32 = arith.divf %31, %30 : vector<8x128xf32>
    %33 = vector.extract_strided_slice %14 {offsets = [0, 256], sizes = [8, 128], strides = [1, 1]} : vector<8x384xf32> to vector<8x128xf32>
    %34 = arith.mulf %23, %33 : vector<8x128xf32>
    %35 = arith.addf %8, %34 : vector<8x128xf32>
    %36 = math.tanh %35 : vector<8x128xf32>
    %cst_18 = arith.constant 1.000000e+00 : f32
    %37 = vector.broadcast %cst_18 : f32 to vector<8x128xf32>
    %38 = arith.subf %37, %32 : vector<8x128xf32>
    %39 = arith.mulf %38, %36 : vector<8x128xf32>
    %40 = arith.mulf %32, %11 : vector<8x128xf32>
    %41 = arith.addf %39, %40 : vector<8x128xf32>
    %42 = arith.subf %41, %11 : vector<8x128xf32>
    %cst_19 = arith.constant 1.250000e-02 : f32
    %43 = vector.broadcast %cst_19 : f32 to vector<8x128xf32>
    %44 = arith.mulf %43, %42 : vector<8x128xf32>
    %45 = arith.addf %11, %44 : vector<8x128xf32>
    %cst_20 = arith.constant dense<0.000000e+00> : vector<8x384xf32>
    %46 = tpu.matmul %45, %9, %cst_20 {dimension_numbers = #tpu.dot_dimension_numbers<[1], [0], [0], [1], [0, 0, 1, 1], [], []>} : vector<8x128xf32>, vector<128x384xf32>, vector<8x384xf32> -> vector<8x384xf32>
    %47 = vector.broadcast %10 : vector<1x384xf32> to vector<8x384xf32>
    %48 = arith.addf %46, %47 : vector<8x384xf32>
    %49 = vector.extract_strided_slice %48 {offsets = [0, 0], sizes = [8, 128], strides = [1, 1]} : vector<8x384xf32> to vector<8x128xf32>
    %50 = arith.addf %6, %49 : vector<8x128xf32>
    %cst_21 = arith.constant 0.000000e+00 : f32
    %51 = vector.broadcast %cst_21 : f32 to vector<8x128xf32>
    %52 = arith.subf %51, %50 : vector<8x128xf32>
    %53 = math.exp %52 : vector<8x128xf32>
    %cst_22 = arith.constant 1.000000e+00 : f32
    %54 = vector.broadcast %cst_22 : f32 to vector<8x128xf32>
    %55 = arith.addf %54, %53 : vector<8x128xf32>
    %cst_23 = arith.constant 1.000000e+00 : f32
    %56 = vector.broadcast %cst_23 : f32 to vector<8x128xf32>
    %57 = arith.divf %56, %55 : vector<8x128xf32>
    %58 = vector.extract_strided_slice %48 {offsets = [0, 128], sizes = [8, 128], strides = [1, 1]} : vector<8x384xf32> to vector<8x128xf32>
    %59 = arith.addf %7, %58 : vector<8x128xf32>
    %cst_24 = arith.constant 0.000000e+00 : f32
    %60 = vector.broadcast %cst_24 : f32 to vector<8x128xf32>
    %61 = arith.subf %60, %59 : vector<8x128xf32>
    %62 = math.exp %61 : vector<8x128xf32>
    %cst_25 = arith.constant 1.000000e+00 : f32
    %63 = vector.broadcast %cst_25 : f32 to vector<8x128xf32>
    %64 = arith.addf %63, %62 : vector<8x128xf32>
    %cst_26 = arith.constant 1.000000e+00 : f32
    %65 = vector.broadcast %cst_26 : f32 to vector<8x128xf32>
    %66 = arith.divf %65, %64 : vector<8x128xf32>
    %67 = vector.extract_strided_slice %48 {offsets = [0, 256], sizes = [8, 128], strides = [1, 1]} : vector<8x384xf32> to vector<8x128xf32>
    %68 = arith.mulf %57, %67 : vector<8x128xf32>
    %69 = arith.addf %8, %68 : vector<8x128xf32>
    %70 = math.tanh %69 : vector<8x128xf32>
    %cst_27 = arith.constant 1.000000e+00 : f32
    %71 = vector.broadcast %cst_27 : f32 to vector<8x128xf32>
    %72 = arith.subf %71, %66 : vector<8x128xf32>
    %73 = arith.mulf %72, %70 : vector<8x128xf32>
    %74 = arith.mulf %66, %45 : vector<8x128xf32>
    %75 = arith.addf %73, %74 : vector<8x128xf32>
    %76 = arith.subf %75, %45 : vector<8x128xf32>
    %cst_28 = arith.constant 1.250000e-02 : f32
    %77 = vector.broadcast %cst_28 : f32 to vector<8x128xf32>
    %78 = arith.mulf %77, %76 : vector<8x128xf32>
    %79 = arith.addf %11, %78 : vector<8x128xf32>
    %cst_29 = arith.constant dense<0.000000e+00> : vector<8x384xf32>
    %80 = tpu.matmul %79, %9, %cst_29 {dimension_numbers = #tpu.dot_dimension_numbers<[1], [0], [0], [1], [0, 0, 1, 1], [], []>} : vector<8x128xf32>, vector<128x384xf32>, vector<8x384xf32> -> vector<8x384xf32>
    %81 = vector.broadcast %10 : vector<1x384xf32> to vector<8x384xf32>
    %82 = arith.addf %80, %81 : vector<8x384xf32>
    %83 = vector.extract_strided_slice %82 {offsets = [0, 0], sizes = [8, 128], strides = [1, 1]} : vector<8x384xf32> to vector<8x128xf32>
    %84 = arith.addf %6, %83 : vector<8x128xf32>
    %cst_30 = arith.constant 0.000000e+00 : f32
    %85 = vector.broadcast %cst_30 : f32 to vector<8x128xf32>
    %86 = arith.subf %85, %84 : vector<8x128xf32>
    %87 = math.exp %86 : vector<8x128xf32>
    %cst_31 = arith.constant 1.000000e+00 : f32
    %88 = vector.broadcast %cst_31 : f32 to vector<8x128xf32>
    %89 = arith.addf %88, %87 : vector<8x128xf32>
    %cst_32 = arith.constant 1.000000e+00 : f32
    %90 = vector.broadcast %cst_32 : f32 to vector<8x128xf32>
    %91 = arith.divf %90, %89 : vector<8x128xf32>
    %92 = vector.extract_strided_slice %82 {offsets = [0, 128], sizes = [8, 128], strides = [1, 1]} : vector<8x384xf32> to vector<8x128xf32>
    %93 = arith.addf %7, %92 : vector<8x128xf32>
    %cst_33 = arith.constant 0.000000e+00 : f32
    %94 = vector.broadcast %cst_33 : f32 to vector<8x128xf32>
    %95 = arith.subf %94, %93 : vector<8x128xf32>
    %96 = math.exp %95 : vector<8x128xf32>
    %cst_34 = arith.constant 1.000000e+00 : f32
    %97 = vector.broadcast %cst_34 : f32 to vector<8x128xf32>
    %98 = arith.addf %97, %96 : vector<8x128xf32>
    %cst_35 = arith.constant 1.000000e+00 : f32
    %99 = vector.broadcast %cst_35 : f32 to vector<8x128xf32>
    %100 = arith.divf %99, %98 : vector<8x128xf32>
    %101 = vector.extract_strided_slice %82 {offsets = [0, 256], sizes = [8, 128], strides = [1, 1]} : vector<8x384xf32> to vector<8x128xf32>
    %102 = arith.mulf %91, %101 : vector<8x128xf32>
    %103 = arith.addf %8, %102 : vector<8x128xf32>
    %104 = math.tanh %103 : vector<8x128xf32>
    %cst_36 = arith.constant 1.000000e+00 : f32
    %105 = vector.broadcast %cst_36 : f32 to vector<8x128xf32>
    %106 = arith.subf %105, %100 : vector<8x128xf32>
    %107 = arith.mulf %106, %104 : vector<8x128xf32>
    %108 = arith.mulf %100, %79 : vector<8x128xf32>
    %109 = arith.addf %107, %108 : vector<8x128xf32>
    %110 = arith.subf %109, %79 : vector<8x128xf32>
    %cst_37 = arith.constant 2.500000e-02 : f32
    %111 = vector.broadcast %cst_37 : f32 to vector<8x128xf32>
    %112 = arith.mulf %111, %110 : vector<8x128xf32>
    %113 = arith.addf %11, %112 : vector<8x128xf32>
    %cst_38 = arith.constant dense<0.000000e+00> : vector<8x384xf32>
    %114 = tpu.matmul %113, %9, %cst_38 {dimension_numbers = #tpu.dot_dimension_numbers<[1], [0], [0], [1], [0, 0, 1, 1], [], []>} : vector<8x128xf32>, vector<128x384xf32>, vector<8x384xf32> -> vector<8x384xf32>
    %115 = vector.broadcast %10 : vector<1x384xf32> to vector<8x384xf32>
    %116 = arith.addf %114, %115 : vector<8x384xf32>
    %117 = vector.extract_strided_slice %116 {offsets = [0, 0], sizes = [8, 128], strides = [1, 1]} : vector<8x384xf32> to vector<8x128xf32>
    %118 = arith.addf %6, %117 : vector<8x128xf32>
    %cst_39 = arith.constant 0.000000e+00 : f32
    %119 = vector.broadcast %cst_39 : f32 to vector<8x128xf32>
    %120 = arith.subf %119, %118 : vector<8x128xf32>
    %121 = math.exp %120 : vector<8x128xf32>
    %cst_40 = arith.constant 1.000000e+00 : f32
    %122 = vector.broadcast %cst_40 : f32 to vector<8x128xf32>
    %123 = arith.addf %122, %121 : vector<8x128xf32>
    %cst_41 = arith.constant 1.000000e+00 : f32
    %124 = vector.broadcast %cst_41 : f32 to vector<8x128xf32>
    %125 = arith.divf %124, %123 : vector<8x128xf32>
    %126 = vector.extract_strided_slice %116 {offsets = [0, 128], sizes = [8, 128], strides = [1, 1]} : vector<8x384xf32> to vector<8x128xf32>
    %127 = arith.addf %7, %126 : vector<8x128xf32>
    %cst_42 = arith.constant 0.000000e+00 : f32
    %128 = vector.broadcast %cst_42 : f32 to vector<8x128xf32>
    %129 = arith.subf %128, %127 : vector<8x128xf32>
    %130 = math.exp %129 : vector<8x128xf32>
    %cst_43 = arith.constant 1.000000e+00 : f32
    %131 = vector.broadcast %cst_43 : f32 to vector<8x128xf32>
    %132 = arith.addf %131, %130 : vector<8x128xf32>
    %cst_44 = arith.constant 1.000000e+00 : f32
    %133 = vector.broadcast %cst_44 : f32 to vector<8x128xf32>
    %134 = arith.divf %133, %132 : vector<8x128xf32>
    %135 = vector.extract_strided_slice %116 {offsets = [0, 256], sizes = [8, 128], strides = [1, 1]} : vector<8x384xf32> to vector<8x128xf32>
    %136 = arith.mulf %125, %135 : vector<8x128xf32>
    %137 = arith.addf %8, %136 : vector<8x128xf32>
    %138 = math.tanh %137 : vector<8x128xf32>
    %cst_45 = arith.constant 1.000000e+00 : f32
    %139 = vector.broadcast %cst_45 : f32 to vector<8x128xf32>
    %140 = arith.subf %139, %134 : vector<8x128xf32>
    %141 = arith.mulf %140, %138 : vector<8x128xf32>
    %142 = arith.mulf %134, %113 : vector<8x128xf32>
    %143 = arith.addf %141, %142 : vector<8x128xf32>
    %144 = arith.subf %143, %113 : vector<8x128xf32>
    %cst_46 = arith.constant 2.000000e+00 : f32
    %145 = vector.broadcast %cst_46 : f32 to vector<8x128xf32>
    %146 = arith.mulf %145, %76 : vector<8x128xf32>
    %147 = arith.addf %42, %146 : vector<8x128xf32>
    %cst_47 = arith.constant 2.000000e+00 : f32
    %148 = vector.broadcast %cst_47 : f32 to vector<8x128xf32>
    %149 = arith.mulf %148, %110 : vector<8x128xf32>
    %150 = arith.addf %147, %149 : vector<8x128xf32>
    %151 = arith.addf %150, %144 : vector<8x128xf32>
    %cst_48 = arith.constant 0.00416666688 : f32
    %152 = vector.broadcast %cst_48 : f32 to vector<8x128xf32>
    %153 = arith.mulf %152, %151 : vector<8x128xf32>
    %154 = arith.addf %11, %153 : vector<8x128xf32>
    %c1_i32 = arith.constant 1 : i32
    %cst_49 = arith.constant dense<0.000000e+00> : vector<8x384xf32>
    %155 = tpu.matmul %154, %9, %cst_49 {dimension_numbers = #tpu.dot_dimension_numbers<[1], [0], [0], [1], [0, 0, 1, 1], [], []>} : vector<8x128xf32>, vector<128x384xf32>, vector<8x384xf32> -> vector<8x384xf32>
    %156 = vector.broadcast %10 : vector<1x384xf32> to vector<8x384xf32>
    %157 = arith.addf %155, %156 : vector<8x384xf32>
    %158 = vector.extract_strided_slice %157 {offsets = [0, 0], sizes = [8, 128], strides = [1, 1]} : vector<8x384xf32> to vector<8x128xf32>
    %159 = arith.addf %6, %158 : vector<8x128xf32>
    %cst_50 = arith.constant 0.000000e+00 : f32
    %160 = vector.broadcast %cst_50 : f32 to vector<8x128xf32>
    %161 = arith.subf %160, %159 : vector<8x128xf32>
    %162 = math.exp %161 : vector<8x128xf32>
    %cst_51 = arith.constant 1.000000e+00 : f32
    %163 = vector.broadcast %cst_51 : f32 to vector<8x128xf32>
    %164 = arith.addf %163, %162 : vector<8x128xf32>
    %cst_52 = arith.constant 1.000000e+00 : f32
    %165 = vector.broadcast %cst_52 : f32 to vector<8x128xf32>
    %166 = arith.divf %165, %164 : vector<8x128xf32>
    %167 = vector.extract_strided_slice %157 {offsets = [0, 128], sizes = [8, 128], strides = [1, 1]} : vector<8x384xf32> to vector<8x128xf32>
    %168 = arith.addf %7, %167 : vector<8x128xf32>
    %cst_53 = arith.constant 0.000000e+00 : f32
    %169 = vector.broadcast %cst_53 : f32 to vector<8x128xf32>
    %170 = arith.subf %169, %168 : vector<8x128xf32>
    %171 = math.exp %170 : vector<8x128xf32>
    %cst_54 = arith.constant 1.000000e+00 : f32
    %172 = vector.broadcast %cst_54 : f32 to vector<8x128xf32>
    %173 = arith.addf %172, %171 : vector<8x128xf32>
    %cst_55 = arith.constant 1.000000e+00 : f32
    %174 = vector.broadcast %cst_55 : f32 to vector<8x128xf32>
    %175 = arith.divf %174, %173 : vector<8x128xf32>
    %176 = vector.extract_strided_slice %157 {offsets = [0, 256], sizes = [8, 128], strides = [1, 1]} : vector<8x384xf32> to vector<8x128xf32>
    %177 = arith.mulf %166, %176 : vector<8x128xf32>
    %178 = arith.addf %8, %177 : vector<8x128xf32>
    %179 = math.tanh %178 : vector<8x128xf32>
    %cst_56 = arith.constant 1.000000e+00 : f32
    %180 = vector.broadcast %cst_56 : f32 to vector<8x128xf32>
    %181 = arith.subf %180, %175 : vector<8x128xf32>
    %182 = arith.mulf %181, %179 : vector<8x128xf32>
    %183 = arith.mulf %175, %154 : vector<8x128xf32>
    %184 = arith.addf %182, %183 : vector<8x128xf32>
    %185 = arith.subf %184, %154 : vector<8x128xf32>
    %cst_57 = arith.constant 1.250000e-02 : f32
    %186 = vector.broadcast %cst_57 : f32 to vector<8x128xf32>
    %187 = arith.mulf %186, %185 : vector<8x128xf32>
    %188 = arith.addf %154, %187 : vector<8x128xf32>
    %cst_58 = arith.constant dense<0.000000e+00> : vector<8x384xf32>
    %189 = tpu.matmul %188, %9, %cst_58 {dimension_numbers = #tpu.dot_dimension_numbers<[1], [0], [0], [1], [0, 0, 1, 1], [], []>} : vector<8x128xf32>, vector<128x384xf32>, vector<8x384xf32> -> vector<8x384xf32>
    %190 = vector.broadcast %10 : vector<1x384xf32> to vector<8x384xf32>
    %191 = arith.addf %189, %190 : vector<8x384xf32>
    %192 = vector.extract_strided_slice %191 {offsets = [0, 0], sizes = [8, 128], strides = [1, 1]} : vector<8x384xf32> to vector<8x128xf32>
    %193 = arith.addf %6, %192 : vector<8x128xf32>
    %cst_59 = arith.constant 0.000000e+00 : f32
    %194 = vector.broadcast %cst_59 : f32 to vector<8x128xf32>
    %195 = arith.subf %194, %193 : vector<8x128xf32>
    %196 = math.exp %195 : vector<8x128xf32>
    %cst_60 = arith.constant 1.000000e+00 : f32
    %197 = vector.broadcast %cst_60 : f32 to vector<8x128xf32>
    %198 = arith.addf %197, %196 : vector<8x128xf32>
    %cst_61 = arith.constant 1.000000e+00 : f32
    %199 = vector.broadcast %cst_61 : f32 to vector<8x128xf32>
    %200 = arith.divf %199, %198 : vector<8x128xf32>
    %201 = vector.extract_strided_slice %191 {offsets = [0, 128], sizes = [8, 128], strides = [1, 1]} : vector<8x384xf32> to vector<8x128xf32>
    %202 = arith.addf %7, %201 : vector<8x128xf32>
    %cst_62 = arith.constant 0.000000e+00 : f32
    %203 = vector.broadcast %cst_62 : f32 to vector<8x128xf32>
    %204 = arith.subf %203, %202 : vector<8x128xf32>
    %205 = math.exp %204 : vector<8x128xf32>
    %cst_63 = arith.constant 1.000000e+00 : f32
    %206 = vector.broadcast %cst_63 : f32 to vector<8x128xf32>
    %207 = arith.addf %206, %205 : vector<8x128xf32>
    %cst_64 = arith.constant 1.000000e+00 : f32
    %208 = vector.broadcast %cst_64 : f32 to vector<8x128xf32>
    %209 = arith.divf %208, %207 : vector<8x128xf32>
    %210 = vector.extract_strided_slice %191 {offsets = [0, 256], sizes = [8, 128], strides = [1, 1]} : vector<8x384xf32> to vector<8x128xf32>
    %211 = arith.mulf %200, %210 : vector<8x128xf32>
    %212 = arith.addf %8, %211 : vector<8x128xf32>
    %213 = math.tanh %212 : vector<8x128xf32>
    %cst_65 = arith.constant 1.000000e+00 : f32
    %214 = vector.broadcast %cst_65 : f32 to vector<8x128xf32>
    %215 = arith.subf %214, %209 : vector<8x128xf32>
    %216 = arith.mulf %215, %213 : vector<8x128xf32>
    %217 = arith.mulf %209, %188 : vector<8x128xf32>
    %218 = arith.addf %216, %217 : vector<8x128xf32>
    %219 = arith.subf %218, %188 : vector<8x128xf32>
    %cst_66 = arith.constant 1.250000e-02 : f32
    %220 = vector.broadcast %cst_66 : f32 to vector<8x128xf32>
    %221 = arith.mulf %220, %219 : vector<8x128xf32>
    %222 = arith.addf %154, %221 : vector<8x128xf32>
    %cst_67 = arith.constant dense<0.000000e+00> : vector<8x384xf32>
    %223 = tpu.matmul %222, %9, %cst_67 {dimension_numbers = #tpu.dot_dimension_numbers<[1], [0], [0], [1], [0, 0, 1, 1], [], []>} : vector<8x128xf32>, vector<128x384xf32>, vector<8x384xf32> -> vector<8x384xf32>
    %224 = vector.broadcast %10 : vector<1x384xf32> to vector<8x384xf32>
    %225 = arith.addf %223, %224 : vector<8x384xf32>
    %226 = vector.extract_strided_slice %225 {offsets = [0, 0], sizes = [8, 128], strides = [1, 1]} : vector<8x384xf32> to vector<8x128xf32>
    %227 = arith.addf %6, %226 : vector<8x128xf32>
    %cst_68 = arith.constant 0.000000e+00 : f32
    %228 = vector.broadcast %cst_68 : f32 to vector<8x128xf32>
    %229 = arith.subf %228, %227 : vector<8x128xf32>
    %230 = math.exp %229 : vector<8x128xf32>
    %cst_69 = arith.constant 1.000000e+00 : f32
    %231 = vector.broadcast %cst_69 : f32 to vector<8x128xf32>
    %232 = arith.addf %231, %230 : vector<8x128xf32>
    %cst_70 = arith.constant 1.000000e+00 : f32
    %233 = vector.broadcast %cst_70 : f32 to vector<8x128xf32>
    %234 = arith.divf %233, %232 : vector<8x128xf32>
    %235 = vector.extract_strided_slice %225 {offsets = [0, 128], sizes = [8, 128], strides = [1, 1]} : vector<8x384xf32> to vector<8x128xf32>
    %236 = arith.addf %7, %235 : vector<8x128xf32>
    %cst_71 = arith.constant 0.000000e+00 : f32
    %237 = vector.broadcast %cst_71 : f32 to vector<8x128xf32>
    %238 = arith.subf %237, %236 : vector<8x128xf32>
    %239 = math.exp %238 : vector<8x128xf32>
    %cst_72 = arith.constant 1.000000e+00 : f32
    %240 = vector.broadcast %cst_72 : f32 to vector<8x128xf32>
    %241 = arith.addf %240, %239 : vector<8x128xf32>
    %cst_73 = arith.constant 1.000000e+00 : f32
    %242 = vector.broadcast %cst_73 : f32 to vector<8x128xf32>
    %243 = arith.divf %242, %241 : vector<8x128xf32>
    %244 = vector.extract_strided_slice %225 {offsets = [0, 256], sizes = [8, 128], strides = [1, 1]} : vector<8x384xf32> to vector<8x128xf32>
    %245 = arith.mulf %234, %244 : vector<8x128xf32>
    %246 = arith.addf %8, %245 : vector<8x128xf32>
    %247 = math.tanh %246 : vector<8x128xf32>
    %cst_74 = arith.constant 1.000000e+00 : f32
    %248 = vector.broadcast %cst_74 : f32 to vector<8x128xf32>
    %249 = arith.subf %248, %243 : vector<8x128xf32>
    %250 = arith.mulf %249, %247 : vector<8x128xf32>
    %251 = arith.mulf %243, %222 : vector<8x128xf32>
    %252 = arith.addf %250, %251 : vector<8x128xf32>
    %253 = arith.subf %252, %222 : vector<8x128xf32>
    %cst_75 = arith.constant 2.500000e-02 : f32
    %254 = vector.broadcast %cst_75 : f32 to vector<8x128xf32>
    %255 = arith.mulf %254, %253 : vector<8x128xf32>
    %256 = arith.addf %154, %255 : vector<8x128xf32>
    %cst_76 = arith.constant dense<0.000000e+00> : vector<8x384xf32>
    %257 = tpu.matmul %256, %9, %cst_76 {dimension_numbers = #tpu.dot_dimension_numbers<[1], [0], [0], [1], [0, 0, 1, 1], [], []>} : vector<8x128xf32>, vector<128x384xf32>, vector<8x384xf32> -> vector<8x384xf32>
    %258 = vector.broadcast %10 : vector<1x384xf32> to vector<8x384xf32>
    %259 = arith.addf %257, %258 : vector<8x384xf32>
    %260 = vector.extract_strided_slice %259 {offsets = [0, 0], sizes = [8, 128], strides = [1, 1]} : vector<8x384xf32> to vector<8x128xf32>
    %261 = arith.addf %6, %260 : vector<8x128xf32>
    %cst_77 = arith.constant 0.000000e+00 : f32
    %262 = vector.broadcast %cst_77 : f32 to vector<8x128xf32>
    %263 = arith.subf %262, %261 : vector<8x128xf32>
    %264 = math.exp %263 : vector<8x128xf32>
    %cst_78 = arith.constant 1.000000e+00 : f32
    %265 = vector.broadcast %cst_78 : f32 to vector<8x128xf32>
    %266 = arith.addf %265, %264 : vector<8x128xf32>
    %cst_79 = arith.constant 1.000000e+00 : f32
    %267 = vector.broadcast %cst_79 : f32 to vector<8x128xf32>
    %268 = arith.divf %267, %266 : vector<8x128xf32>
    %269 = vector.extract_strided_slice %259 {offsets = [0, 128], sizes = [8, 128], strides = [1, 1]} : vector<8x384xf32> to vector<8x128xf32>
    %270 = arith.addf %7, %269 : vector<8x128xf32>
    %cst_80 = arith.constant 0.000000e+00 : f32
    %271 = vector.broadcast %cst_80 : f32 to vector<8x128xf32>
    %272 = arith.subf %271, %270 : vector<8x128xf32>
    %273 = math.exp %272 : vector<8x128xf32>
    %cst_81 = arith.constant 1.000000e+00 : f32
    %274 = vector.broadcast %cst_81 : f32 to vector<8x128xf32>
    %275 = arith.addf %274, %273 : vector<8x128xf32>
    %cst_82 = arith.constant 1.000000e+00 : f32
    %276 = vector.broadcast %cst_82 : f32 to vector<8x128xf32>
    %277 = arith.divf %276, %275 : vector<8x128xf32>
    %278 = vector.extract_strided_slice %259 {offsets = [0, 256], sizes = [8, 128], strides = [1, 1]} : vector<8x384xf32> to vector<8x128xf32>
    %279 = arith.mulf %268, %278 : vector<8x128xf32>
    %280 = arith.addf %8, %279 : vector<8x128xf32>
    %281 = math.tanh %280 : vector<8x128xf32>
    %cst_83 = arith.constant 1.000000e+00 : f32
    %282 = vector.broadcast %cst_83 : f32 to vector<8x128xf32>
    %283 = arith.subf %282, %277 : vector<8x128xf32>
    %284 = arith.mulf %283, %281 : vector<8x128xf32>
    %285 = arith.mulf %277, %256 : vector<8x128xf32>
    %286 = arith.addf %284, %285 : vector<8x128xf32>
    %287 = arith.subf %286, %256 : vector<8x128xf32>
    %cst_84 = arith.constant 2.000000e+00 : f32
    %288 = vector.broadcast %cst_84 : f32 to vector<8x128xf32>
    %289 = arith.mulf %288, %219 : vector<8x128xf32>
    %290 = arith.addf %185, %289 : vector<8x128xf32>
    %cst_85 = arith.constant 2.000000e+00 : f32
    %291 = vector.broadcast %cst_85 : f32 to vector<8x128xf32>
    %292 = arith.mulf %291, %253 : vector<8x128xf32>
    %293 = arith.addf %290, %292 : vector<8x128xf32>
    %294 = arith.addf %293, %287 : vector<8x128xf32>
    %cst_86 = arith.constant 0.00416666688 : f32
    %295 = vector.broadcast %cst_86 : f32 to vector<8x128xf32>
    %296 = arith.mulf %295, %294 : vector<8x128xf32>
    %297 = arith.addf %154, %296 : vector<8x128xf32>
    %c2_i32 = arith.constant 2 : i32
    %cst_87 = arith.constant dense<0.000000e+00> : vector<8x384xf32>
    %298 = tpu.matmul %297, %9, %cst_87 {dimension_numbers = #tpu.dot_dimension_numbers<[1], [0], [0], [1], [0, 0, 1, 1], [], []>} : vector<8x128xf32>, vector<128x384xf32>, vector<8x384xf32> -> vector<8x384xf32>
    %299 = vector.broadcast %10 : vector<1x384xf32> to vector<8x384xf32>
    %300 = arith.addf %298, %299 : vector<8x384xf32>
    %301 = vector.extract_strided_slice %300 {offsets = [0, 0], sizes = [8, 128], strides = [1, 1]} : vector<8x384xf32> to vector<8x128xf32>
    %302 = arith.addf %6, %301 : vector<8x128xf32>
    %cst_88 = arith.constant 0.000000e+00 : f32
    %303 = vector.broadcast %cst_88 : f32 to vector<8x128xf32>
    %304 = arith.subf %303, %302 : vector<8x128xf32>
    %305 = math.exp %304 : vector<8x128xf32>
    %cst_89 = arith.constant 1.000000e+00 : f32
    %306 = vector.broadcast %cst_89 : f32 to vector<8x128xf32>
    %307 = arith.addf %306, %305 : vector<8x128xf32>
    %cst_90 = arith.constant 1.000000e+00 : f32
    %308 = vector.broadcast %cst_90 : f32 to vector<8x128xf32>
    %309 = arith.divf %308, %307 : vector<8x128xf32>
    %310 = vector.extract_strided_slice %300 {offsets = [0, 128], sizes = [8, 128], strides = [1, 1]} : vector<8x384xf32> to vector<8x128xf32>
    %311 = arith.addf %7, %310 : vector<8x128xf32>
    %cst_91 = arith.constant 0.000000e+00 : f32
    %312 = vector.broadcast %cst_91 : f32 to vector<8x128xf32>
    %313 = arith.subf %312, %311 : vector<8x128xf32>
    %314 = math.exp %313 : vector<8x128xf32>
    %cst_92 = arith.constant 1.000000e+00 : f32
    %315 = vector.broadcast %cst_92 : f32 to vector<8x128xf32>
    %316 = arith.addf %315, %314 : vector<8x128xf32>
    %cst_93 = arith.constant 1.000000e+00 : f32
    %317 = vector.broadcast %cst_93 : f32 to vector<8x128xf32>
    %318 = arith.divf %317, %316 : vector<8x128xf32>
    %319 = vector.extract_strided_slice %300 {offsets = [0, 256], sizes = [8, 128], strides = [1, 1]} : vector<8x384xf32> to vector<8x128xf32>
    %320 = arith.mulf %309, %319 : vector<8x128xf32>
    %321 = arith.addf %8, %320 : vector<8x128xf32>
    %322 = math.tanh %321 : vector<8x128xf32>
    %cst_94 = arith.constant 1.000000e+00 : f32
    %323 = vector.broadcast %cst_94 : f32 to vector<8x128xf32>
    %324 = arith.subf %323, %318 : vector<8x128xf32>
    %325 = arith.mulf %324, %322 : vector<8x128xf32>
    %326 = arith.mulf %318, %297 : vector<8x128xf32>
    %327 = arith.addf %325, %326 : vector<8x128xf32>
    %328 = arith.subf %327, %297 : vector<8x128xf32>
    %cst_95 = arith.constant 1.250000e-02 : f32
    %329 = vector.broadcast %cst_95 : f32 to vector<8x128xf32>
    %330 = arith.mulf %329, %328 : vector<8x128xf32>
    %331 = arith.addf %297, %330 : vector<8x128xf32>
    %cst_96 = arith.constant dense<0.000000e+00> : vector<8x384xf32>
    %332 = tpu.matmul %331, %9, %cst_96 {dimension_numbers = #tpu.dot_dimension_numbers<[1], [0], [0], [1], [0, 0, 1, 1], [], []>} : vector<8x128xf32>, vector<128x384xf32>, vector<8x384xf32> -> vector<8x384xf32>
    %333 = vector.broadcast %10 : vector<1x384xf32> to vector<8x384xf32>
    %334 = arith.addf %332, %333 : vector<8x384xf32>
    %335 = vector.extract_strided_slice %334 {offsets = [0, 0], sizes = [8, 128], strides = [1, 1]} : vector<8x384xf32> to vector<8x128xf32>
    %336 = arith.addf %6, %335 : vector<8x128xf32>
    %cst_97 = arith.constant 0.000000e+00 : f32
    %337 = vector.broadcast %cst_97 : f32 to vector<8x128xf32>
    %338 = arith.subf %337, %336 : vector<8x128xf32>
    %339 = math.exp %338 : vector<8x128xf32>
    %cst_98 = arith.constant 1.000000e+00 : f32
    %340 = vector.broadcast %cst_98 : f32 to vector<8x128xf32>
    %341 = arith.addf %340, %339 : vector<8x128xf32>
    %cst_99 = arith.constant 1.000000e+00 : f32
    %342 = vector.broadcast %cst_99 : f32 to vector<8x128xf32>
    %343 = arith.divf %342, %341 : vector<8x128xf32>
    %344 = vector.extract_strided_slice %334 {offsets = [0, 128], sizes = [8, 128], strides = [1, 1]} : vector<8x384xf32> to vector<8x128xf32>
    %345 = arith.addf %7, %344 : vector<8x128xf32>
    %cst_100 = arith.constant 0.000000e+00 : f32
    %346 = vector.broadcast %cst_100 : f32 to vector<8x128xf32>
    %347 = arith.subf %346, %345 : vector<8x128xf32>
    %348 = math.exp %347 : vector<8x128xf32>
    %cst_101 = arith.constant 1.000000e+00 : f32
    %349 = vector.broadcast %cst_101 : f32 to vector<8x128xf32>
    %350 = arith.addf %349, %348 : vector<8x128xf32>
    %cst_102 = arith.constant 1.000000e+00 : f32
    %351 = vector.broadcast %cst_102 : f32 to vector<8x128xf32>
    %352 = arith.divf %351, %350 : vector<8x128xf32>
    %353 = vector.extract_strided_slice %334 {offsets = [0, 256], sizes = [8, 128], strides = [1, 1]} : vector<8x384xf32> to vector<8x128xf32>
    %354 = arith.mulf %343, %353 : vector<8x128xf32>
    %355 = arith.addf %8, %354 : vector<8x128xf32>
    %356 = math.tanh %355 : vector<8x128xf32>
    %cst_103 = arith.constant 1.000000e+00 : f32
    %357 = vector.broadcast %cst_103 : f32 to vector<8x128xf32>
    %358 = arith.subf %357, %352 : vector<8x128xf32>
    %359 = arith.mulf %358, %356 : vector<8x128xf32>
    %360 = arith.mulf %352, %331 : vector<8x128xf32>
    %361 = arith.addf %359, %360 : vector<8x128xf32>
    %362 = arith.subf %361, %331 : vector<8x128xf32>
    %cst_104 = arith.constant 1.250000e-02 : f32
    %363 = vector.broadcast %cst_104 : f32 to vector<8x128xf32>
    %364 = arith.mulf %363, %362 : vector<8x128xf32>
    %365 = arith.addf %297, %364 : vector<8x128xf32>
    %cst_105 = arith.constant dense<0.000000e+00> : vector<8x384xf32>
    %366 = tpu.matmul %365, %9, %cst_105 {dimension_numbers = #tpu.dot_dimension_numbers<[1], [0], [0], [1], [0, 0, 1, 1], [], []>} : vector<8x128xf32>, vector<128x384xf32>, vector<8x384xf32> -> vector<8x384xf32>
    %367 = vector.broadcast %10 : vector<1x384xf32> to vector<8x384xf32>
    %368 = arith.addf %366, %367 : vector<8x384xf32>
    %369 = vector.extract_strided_slice %368 {offsets = [0, 0], sizes = [8, 128], strides = [1, 1]} : vector<8x384xf32> to vector<8x128xf32>
    %370 = arith.addf %6, %369 : vector<8x128xf32>
    %cst_106 = arith.constant 0.000000e+00 : f32
    %371 = vector.broadcast %cst_106 : f32 to vector<8x128xf32>
    %372 = arith.subf %371, %370 : vector<8x128xf32>
    %373 = math.exp %372 : vector<8x128xf32>
    %cst_107 = arith.constant 1.000000e+00 : f32
    %374 = vector.broadcast %cst_107 : f32 to vector<8x128xf32>
    %375 = arith.addf %374, %373 : vector<8x128xf32>
    %cst_108 = arith.constant 1.000000e+00 : f32
    %376 = vector.broadcast %cst_108 : f32 to vector<8x128xf32>
    %377 = arith.divf %376, %375 : vector<8x128xf32>
    %378 = vector.extract_strided_slice %368 {offsets = [0, 128], sizes = [8, 128], strides = [1, 1]} : vector<8x384xf32> to vector<8x128xf32>
    %379 = arith.addf %7, %378 : vector<8x128xf32>
    %cst_109 = arith.constant 0.000000e+00 : f32
    %380 = vector.broadcast %cst_109 : f32 to vector<8x128xf32>
    %381 = arith.subf %380, %379 : vector<8x128xf32>
    %382 = math.exp %381 : vector<8x128xf32>
    %cst_110 = arith.constant 1.000000e+00 : f32
    %383 = vector.broadcast %cst_110 : f32 to vector<8x128xf32>
    %384 = arith.addf %383, %382 : vector<8x128xf32>
    %cst_111 = arith.constant 1.000000e+00 : f32
    %385 = vector.broadcast %cst_111 : f32 to vector<8x128xf32>
    %386 = arith.divf %385, %384 : vector<8x128xf32>
    %387 = vector.extract_strided_slice %368 {offsets = [0, 256], sizes = [8, 128], strides = [1, 1]} : vector<8x384xf32> to vector<8x128xf32>
    %388 = arith.mulf %377, %387 : vector<8x128xf32>
    %389 = arith.addf %8, %388 : vector<8x128xf32>
    %390 = math.tanh %389 : vector<8x128xf32>
    %cst_112 = arith.constant 1.000000e+00 : f32
    %391 = vector.broadcast %cst_112 : f32 to vector<8x128xf32>
    %392 = arith.subf %391, %386 : vector<8x128xf32>
    %393 = arith.mulf %392, %390 : vector<8x128xf32>
    %394 = arith.mulf %386, %365 : vector<8x128xf32>
    %395 = arith.addf %393, %394 : vector<8x128xf32>
    %396 = arith.subf %395, %365 : vector<8x128xf32>
    %cst_113 = arith.constant 2.500000e-02 : f32
    %397 = vector.broadcast %cst_113 : f32 to vector<8x128xf32>
    %398 = arith.mulf %397, %396 : vector<8x128xf32>
    %399 = arith.addf %297, %398 : vector<8x128xf32>
    %cst_114 = arith.constant dense<0.000000e+00> : vector<8x384xf32>
    %400 = tpu.matmul %399, %9, %cst_114 {dimension_numbers = #tpu.dot_dimension_numbers<[1], [0], [0], [1], [0, 0, 1, 1], [], []>} : vector<8x128xf32>, vector<128x384xf32>, vector<8x384xf32> -> vector<8x384xf32>
    %401 = vector.broadcast %10 : vector<1x384xf32> to vector<8x384xf32>
    %402 = arith.addf %400, %401 : vector<8x384xf32>
    %403 = vector.extract_strided_slice %402 {offsets = [0, 0], sizes = [8, 128], strides = [1, 1]} : vector<8x384xf32> to vector<8x128xf32>
    %404 = arith.addf %6, %403 : vector<8x128xf32>
    %cst_115 = arith.constant 0.000000e+00 : f32
    %405 = vector.broadcast %cst_115 : f32 to vector<8x128xf32>
    %406 = arith.subf %405, %404 : vector<8x128xf32>
    %407 = math.exp %406 : vector<8x128xf32>
    %cst_116 = arith.constant 1.000000e+00 : f32
    %408 = vector.broadcast %cst_116 : f32 to vector<8x128xf32>
    %409 = arith.addf %408, %407 : vector<8x128xf32>
    %cst_117 = arith.constant 1.000000e+00 : f32
    %410 = vector.broadcast %cst_117 : f32 to vector<8x128xf32>
    %411 = arith.divf %410, %409 : vector<8x128xf32>
    %412 = vector.extract_strided_slice %402 {offsets = [0, 128], sizes = [8, 128], strides = [1, 1]} : vector<8x384xf32> to vector<8x128xf32>
    %413 = arith.addf %7, %412 : vector<8x128xf32>
    %cst_118 = arith.constant 0.000000e+00 : f32
    %414 = vector.broadcast %cst_118 : f32 to vector<8x128xf32>
    %415 = arith.subf %414, %413 : vector<8x128xf32>
    %416 = math.exp %415 : vector<8x128xf32>
    %cst_119 = arith.constant 1.000000e+00 : f32
    %417 = vector.broadcast %cst_119 : f32 to vector<8x128xf32>
    %418 = arith.addf %417, %416 : vector<8x128xf32>
    %cst_120 = arith.constant 1.000000e+00 : f32
    %419 = vector.broadcast %cst_120 : f32 to vector<8x128xf32>
    %420 = arith.divf %419, %418 : vector<8x128xf32>
    %421 = vector.extract_strided_slice %402 {offsets = [0, 256], sizes = [8, 128], strides = [1, 1]} : vector<8x384xf32> to vector<8x128xf32>
    %422 = arith.mulf %411, %421 : vector<8x128xf32>
    %423 = arith.addf %8, %422 : vector<8x128xf32>
    %424 = math.tanh %423 : vector<8x128xf32>
    %cst_121 = arith.constant 1.000000e+00 : f32
    %425 = vector.broadcast %cst_121 : f32 to vector<8x128xf32>
    %426 = arith.subf %425, %420 : vector<8x128xf32>
    %427 = arith.mulf %426, %424 : vector<8x128xf32>
    %428 = arith.mulf %420, %399 : vector<8x128xf32>
    %429 = arith.addf %427, %428 : vector<8x128xf32>
    %430 = arith.subf %429, %399 : vector<8x128xf32>
    %cst_122 = arith.constant 2.000000e+00 : f32
    %431 = vector.broadcast %cst_122 : f32 to vector<8x128xf32>
    %432 = arith.mulf %431, %362 : vector<8x128xf32>
    %433 = arith.addf %328, %432 : vector<8x128xf32>
    %cst_123 = arith.constant 2.000000e+00 : f32
    %434 = vector.broadcast %cst_123 : f32 to vector<8x128xf32>
    %435 = arith.mulf %434, %396 : vector<8x128xf32>
    %436 = arith.addf %433, %435 : vector<8x128xf32>
    %437 = arith.addf %436, %430 : vector<8x128xf32>
    %cst_124 = arith.constant 0.00416666688 : f32
    %438 = vector.broadcast %cst_124 : f32 to vector<8x128xf32>
    %439 = arith.mulf %438, %437 : vector<8x128xf32>
    %440 = arith.addf %297, %439 : vector<8x128xf32>
    %c3_i32 = arith.constant 3 : i32
    %cst_125 = arith.constant dense<0.000000e+00> : vector<8x384xf32>
    %441 = tpu.matmul %440, %9, %cst_125 {dimension_numbers = #tpu.dot_dimension_numbers<[1], [0], [0], [1], [0, 0, 1, 1], [], []>} : vector<8x128xf32>, vector<128x384xf32>, vector<8x384xf32> -> vector<8x384xf32>
    %442 = vector.broadcast %10 : vector<1x384xf32> to vector<8x384xf32>
    %443 = arith.addf %441, %442 : vector<8x384xf32>
    %444 = vector.extract_strided_slice %443 {offsets = [0, 0], sizes = [8, 128], strides = [1, 1]} : vector<8x384xf32> to vector<8x128xf32>
    %445 = arith.addf %6, %444 : vector<8x128xf32>
    %cst_126 = arith.constant 0.000000e+00 : f32
    %446 = vector.broadcast %cst_126 : f32 to vector<8x128xf32>
    %447 = arith.subf %446, %445 : vector<8x128xf32>
    %448 = math.exp %447 : vector<8x128xf32>
    %cst_127 = arith.constant 1.000000e+00 : f32
    %449 = vector.broadcast %cst_127 : f32 to vector<8x128xf32>
    %450 = arith.addf %449, %448 : vector<8x128xf32>
    %cst_128 = arith.constant 1.000000e+00 : f32
    %451 = vector.broadcast %cst_128 : f32 to vector<8x128xf32>
    %452 = arith.divf %451, %450 : vector<8x128xf32>
    %453 = vector.extract_strided_slice %443 {offsets = [0, 128], sizes = [8, 128], strides = [1, 1]} : vector<8x384xf32> to vector<8x128xf32>
    %454 = arith.addf %7, %453 : vector<8x128xf32>
    %cst_129 = arith.constant 0.000000e+00 : f32
    %455 = vector.broadcast %cst_129 : f32 to vector<8x128xf32>
    %456 = arith.subf %455, %454 : vector<8x128xf32>
    %457 = math.exp %456 : vector<8x128xf32>
    %cst_130 = arith.constant 1.000000e+00 : f32
    %458 = vector.broadcast %cst_130 : f32 to vector<8x128xf32>
    %459 = arith.addf %458, %457 : vector<8x128xf32>
    %cst_131 = arith.constant 1.000000e+00 : f32
    %460 = vector.broadcast %cst_131 : f32 to vector<8x128xf32>
    %461 = arith.divf %460, %459 : vector<8x128xf32>
    %462 = vector.extract_strided_slice %443 {offsets = [0, 256], sizes = [8, 128], strides = [1, 1]} : vector<8x384xf32> to vector<8x128xf32>
    %463 = arith.mulf %452, %462 : vector<8x128xf32>
    %464 = arith.addf %8, %463 : vector<8x128xf32>
    %465 = math.tanh %464 : vector<8x128xf32>
    %cst_132 = arith.constant 1.000000e+00 : f32
    %466 = vector.broadcast %cst_132 : f32 to vector<8x128xf32>
    %467 = arith.subf %466, %461 : vector<8x128xf32>
    %468 = arith.mulf %467, %465 : vector<8x128xf32>
    %469 = arith.mulf %461, %440 : vector<8x128xf32>
    %470 = arith.addf %468, %469 : vector<8x128xf32>
    %471 = arith.subf %470, %440 : vector<8x128xf32>
    %cst_133 = arith.constant 1.250000e-02 : f32
    %472 = vector.broadcast %cst_133 : f32 to vector<8x128xf32>
    %473 = arith.mulf %472, %471 : vector<8x128xf32>
    %474 = arith.addf %440, %473 : vector<8x128xf32>
    %cst_134 = arith.constant dense<0.000000e+00> : vector<8x384xf32>
    %475 = tpu.matmul %474, %9, %cst_134 {dimension_numbers = #tpu.dot_dimension_numbers<[1], [0], [0], [1], [0, 0, 1, 1], [], []>} : vector<8x128xf32>, vector<128x384xf32>, vector<8x384xf32> -> vector<8x384xf32>
    %476 = vector.broadcast %10 : vector<1x384xf32> to vector<8x384xf32>
    %477 = arith.addf %475, %476 : vector<8x384xf32>
    %478 = vector.extract_strided_slice %477 {offsets = [0, 0], sizes = [8, 128], strides = [1, 1]} : vector<8x384xf32> to vector<8x128xf32>
    %479 = arith.addf %6, %478 : vector<8x128xf32>
    %cst_135 = arith.constant 0.000000e+00 : f32
    %480 = vector.broadcast %cst_135 : f32 to vector<8x128xf32>
    %481 = arith.subf %480, %479 : vector<8x128xf32>
    %482 = math.exp %481 : vector<8x128xf32>
    %cst_136 = arith.constant 1.000000e+00 : f32
    %483 = vector.broadcast %cst_136 : f32 to vector<8x128xf32>
    %484 = arith.addf %483, %482 : vector<8x128xf32>
    %cst_137 = arith.constant 1.000000e+00 : f32
    %485 = vector.broadcast %cst_137 : f32 to vector<8x128xf32>
    %486 = arith.divf %485, %484 : vector<8x128xf32>
    %487 = vector.extract_strided_slice %477 {offsets = [0, 128], sizes = [8, 128], strides = [1, 1]} : vector<8x384xf32> to vector<8x128xf32>
    %488 = arith.addf %7, %487 : vector<8x128xf32>
    %cst_138 = arith.constant 0.000000e+00 : f32
    %489 = vector.broadcast %cst_138 : f32 to vector<8x128xf32>
    %490 = arith.subf %489, %488 : vector<8x128xf32>
    %491 = math.exp %490 : vector<8x128xf32>
    %cst_139 = arith.constant 1.000000e+00 : f32
    %492 = vector.broadcast %cst_139 : f32 to vector<8x128xf32>
    %493 = arith.addf %492, %491 : vector<8x128xf32>
    %cst_140 = arith.constant 1.000000e+00 : f32
    %494 = vector.broadcast %cst_140 : f32 to vector<8x128xf32>
    %495 = arith.divf %494, %493 : vector<8x128xf32>
    %496 = vector.extract_strided_slice %477 {offsets = [0, 256], sizes = [8, 128], strides = [1, 1]} : vector<8x384xf32> to vector<8x128xf32>
    %497 = arith.mulf %486, %496 : vector<8x128xf32>
    %498 = arith.addf %8, %497 : vector<8x128xf32>
    %499 = math.tanh %498 : vector<8x128xf32>
    %cst_141 = arith.constant 1.000000e+00 : f32
    %500 = vector.broadcast %cst_141 : f32 to vector<8x128xf32>
    %501 = arith.subf %500, %495 : vector<8x128xf32>
    %502 = arith.mulf %501, %499 : vector<8x128xf32>
    %503 = arith.mulf %495, %474 : vector<8x128xf32>
    %504 = arith.addf %502, %503 : vector<8x128xf32>
    %505 = arith.subf %504, %474 : vector<8x128xf32>
    %cst_142 = arith.constant 1.250000e-02 : f32
    %506 = vector.broadcast %cst_142 : f32 to vector<8x128xf32>
    %507 = arith.mulf %506, %505 : vector<8x128xf32>
    %508 = arith.addf %440, %507 : vector<8x128xf32>
    %cst_143 = arith.constant dense<0.000000e+00> : vector<8x384xf32>
    %509 = tpu.matmul %508, %9, %cst_143 {dimension_numbers = #tpu.dot_dimension_numbers<[1], [0], [0], [1], [0, 0, 1, 1], [], []>} : vector<8x128xf32>, vector<128x384xf32>, vector<8x384xf32> -> vector<8x384xf32>
    %510 = vector.broadcast %10 : vector<1x384xf32> to vector<8x384xf32>
    %511 = arith.addf %509, %510 : vector<8x384xf32>
    %512 = vector.extract_strided_slice %511 {offsets = [0, 0], sizes = [8, 128], strides = [1, 1]} : vector<8x384xf32> to vector<8x128xf32>
    %513 = arith.addf %6, %512 : vector<8x128xf32>
    %cst_144 = arith.constant 0.000000e+00 : f32
    %514 = vector.broadcast %cst_144 : f32 to vector<8x128xf32>
    %515 = arith.subf %514, %513 : vector<8x128xf32>
    %516 = math.exp %515 : vector<8x128xf32>
    %cst_145 = arith.constant 1.000000e+00 : f32
    %517 = vector.broadcast %cst_145 : f32 to vector<8x128xf32>
    %518 = arith.addf %517, %516 : vector<8x128xf32>
    %cst_146 = arith.constant 1.000000e+00 : f32
    %519 = vector.broadcast %cst_146 : f32 to vector<8x128xf32>
    %520 = arith.divf %519, %518 : vector<8x128xf32>
    %521 = vector.extract_strided_slice %511 {offsets = [0, 128], sizes = [8, 128], strides = [1, 1]} : vector<8x384xf32> to vector<8x128xf32>
    %522 = arith.addf %7, %521 : vector<8x128xf32>
    %cst_147 = arith.constant 0.000000e+00 : f32
    %523 = vector.broadcast %cst_147 : f32 to vector<8x128xf32>
    %524 = arith.subf %523, %522 : vector<8x128xf32>
    %525 = math.exp %524 : vector<8x128xf32>
    %cst_148 = arith.constant 1.000000e+00 : f32
    %526 = vector.broadcast %cst_148 : f32 to vector<8x128xf32>
    %527 = arith.addf %526, %525 : vector<8x128xf32>
    %cst_149 = arith.constant 1.000000e+00 : f32
    %528 = vector.broadcast %cst_149 : f32 to vector<8x128xf32>
    %529 = arith.divf %528, %527 : vector<8x128xf32>
    %530 = vector.extract_strided_slice %511 {offsets = [0, 256], sizes = [8, 128], strides = [1, 1]} : vector<8x384xf32> to vector<8x128xf32>
    %531 = arith.mulf %520, %530 : vector<8x128xf32>
    %532 = arith.addf %8, %531 : vector<8x128xf32>
    %533 = math.tanh %532 : vector<8x128xf32>
    %cst_150 = arith.constant 1.000000e+00 : f32
    %534 = vector.broadcast %cst_150 : f32 to vector<8x128xf32>
    %535 = arith.subf %534, %529 : vector<8x128xf32>
    %536 = arith.mulf %535, %533 : vector<8x128xf32>
    %537 = arith.mulf %529, %508 : vector<8x128xf32>
    %538 = arith.addf %536, %537 : vector<8x128xf32>
    %539 = arith.subf %538, %508 : vector<8x128xf32>
    %cst_151 = arith.constant 2.500000e-02 : f32
    %540 = vector.broadcast %cst_151 : f32 to vector<8x128xf32>
    %541 = arith.mulf %540, %539 : vector<8x128xf32>
    %542 = arith.addf %440, %541 : vector<8x128xf32>
    %cst_152 = arith.constant dense<0.000000e+00> : vector<8x384xf32>
    %543 = tpu.matmul %542, %9, %cst_152 {dimension_numbers = #tpu.dot_dimension_numbers<[1], [0], [0], [1], [0, 0, 1, 1], [], []>} : vector<8x128xf32>, vector<128x384xf32>, vector<8x384xf32> -> vector<8x384xf32>
    %544 = vector.broadcast %10 : vector<1x384xf32> to vector<8x384xf32>
    %545 = arith.addf %543, %544 : vector<8x384xf32>
    %546 = vector.extract_strided_slice %545 {offsets = [0, 0], sizes = [8, 128], strides = [1, 1]} : vector<8x384xf32> to vector<8x128xf32>
    %547 = arith.addf %6, %546 : vector<8x128xf32>
    %cst_153 = arith.constant 0.000000e+00 : f32
    %548 = vector.broadcast %cst_153 : f32 to vector<8x128xf32>
    %549 = arith.subf %548, %547 : vector<8x128xf32>
    %550 = math.exp %549 : vector<8x128xf32>
    %cst_154 = arith.constant 1.000000e+00 : f32
    %551 = vector.broadcast %cst_154 : f32 to vector<8x128xf32>
    %552 = arith.addf %551, %550 : vector<8x128xf32>
    %cst_155 = arith.constant 1.000000e+00 : f32
    %553 = vector.broadcast %cst_155 : f32 to vector<8x128xf32>
    %554 = arith.divf %553, %552 : vector<8x128xf32>
    %555 = vector.extract_strided_slice %545 {offsets = [0, 128], sizes = [8, 128], strides = [1, 1]} : vector<8x384xf32> to vector<8x128xf32>
    %556 = arith.addf %7, %555 : vector<8x128xf32>
    %cst_156 = arith.constant 0.000000e+00 : f32
    %557 = vector.broadcast %cst_156 : f32 to vector<8x128xf32>
    %558 = arith.subf %557, %556 : vector<8x128xf32>
    %559 = math.exp %558 : vector<8x128xf32>
    %cst_157 = arith.constant 1.000000e+00 : f32
    %560 = vector.broadcast %cst_157 : f32 to vector<8x128xf32>
    %561 = arith.addf %560, %559 : vector<8x128xf32>
    %cst_158 = arith.constant 1.000000e+00 : f32
    %562 = vector.broadcast %cst_158 : f32 to vector<8x128xf32>
    %563 = arith.divf %562, %561 : vector<8x128xf32>
    %564 = vector.extract_strided_slice %545 {offsets = [0, 256], sizes = [8, 128], strides = [1, 1]} : vector<8x384xf32> to vector<8x128xf32>
    %565 = arith.mulf %554, %564 : vector<8x128xf32>
    %566 = arith.addf %8, %565 : vector<8x128xf32>
    %567 = math.tanh %566 : vector<8x128xf32>
    %cst_159 = arith.constant 1.000000e+00 : f32
    %568 = vector.broadcast %cst_159 : f32 to vector<8x128xf32>
    %569 = arith.subf %568, %563 : vector<8x128xf32>
    %570 = arith.mulf %569, %567 : vector<8x128xf32>
    %571 = arith.mulf %563, %542 : vector<8x128xf32>
    %572 = arith.addf %570, %571 : vector<8x128xf32>
    %573 = arith.subf %572, %542 : vector<8x128xf32>
    %cst_160 = arith.constant 2.000000e+00 : f32
    %574 = vector.broadcast %cst_160 : f32 to vector<8x128xf32>
    %575 = arith.mulf %574, %505 : vector<8x128xf32>
    %576 = arith.addf %471, %575 : vector<8x128xf32>
    %cst_161 = arith.constant 2.000000e+00 : f32
    %577 = vector.broadcast %cst_161 : f32 to vector<8x128xf32>
    %578 = arith.mulf %577, %539 : vector<8x128xf32>
    %579 = arith.addf %576, %578 : vector<8x128xf32>
    %580 = arith.addf %579, %573 : vector<8x128xf32>
    %cst_162 = arith.constant 0.00416666688 : f32
    %581 = vector.broadcast %cst_162 : f32 to vector<8x128xf32>
    %582 = arith.mulf %581, %580 : vector<8x128xf32>
    %583 = arith.addf %440, %582 : vector<8x128xf32>
    %c0_163 = arith.constant 0 : index
    %c0_164 = arith.constant 0 : index
    %584 = vector.load %arg8[%c0_163, %c0_164] : memref<128x128xf32, #tpu.memory_space<vmem>>, vector<128x128xf32>
    %cst_165 = arith.constant dense<0.000000e+00> : vector<8x128xf32>
    %585 = tpu.matmul %583, %584, %cst_165 {dimension_numbers = #tpu.dot_dimension_numbers<[1], [0], [0], [1], [0, 0, 1, 1], [], []>} : vector<8x128xf32>, vector<128x128xf32>, vector<8x128xf32> -> vector<8x128xf32>
    %c0_166 = arith.constant 0 : index
    %c0_167 = arith.constant 0 : index
    %586 = vector.load %arg9[%c0_166, %c0_167] : memref<1x128xf32, #tpu.memory_space<vmem>>, vector<1x128xf32>
    %587 = vector.broadcast %586 : vector<1x128xf32> to vector<8x128xf32>
    %588 = arith.addf %585, %587 : vector<8x128xf32>
    %c0_168 = arith.constant 0 : index
    %c0_169 = arith.constant 0 : index
    %589 = vector.load %arg3[%c0_168, %c0_169] : memref<8x128xf32, #tpu.memory_space<vmem>>, vector<8x128xf32>
    %c0_170 = arith.constant 0 : index
    %c0_171 = arith.constant 0 : index
    %590 = vector.load %arg11[%c0_170, %c0_171] : memref<1x1xf32, #tpu.memory_space<vmem>>, vector<1x1xf32>
    %c0_172 = arith.constant 0 : index
    %c0_173 = arith.constant 0 : index
    %591 = vector.load %arg10[%c0_172, %c0_173] : memref<1x128xi32, #tpu.memory_space<vmem>>, vector<1x128xi32>
    %c0_i32_174 = arith.constant 0 : i32
    %592 = vector.broadcast %c0_i32_174 : i32 to vector<1x128xi32>
    %593 = arith.cmpi eq, %591, %592 : vector<1x128xi32>
    %c1_i32_175 = arith.constant 1 : i32
    %594 = vector.broadcast %c1_i32_175 : i32 to vector<1x128xi32>
    %595 = arith.cmpi eq, %591, %594 : vector<1x128xi32>
    %596 = arith.subf %588, %589 : vector<8x128xf32>
    %597 = vector.broadcast %590 : vector<1x1xf32> to vector<8x128xf32>
    %598 = arith.mulf %596, %597 : vector<8x128xf32>
    %599 = arith.addf %589, %598 : vector<8x128xf32>
    %600 = vector.broadcast %590 : vector<1x1xf32> to vector<8x128xf32>
    %601 = arith.mulf %588, %600 : vector<8x128xf32>
    %602 = arith.addf %589, %601 : vector<8x128xf32>
    %603 = vector.shape_cast %595 : vector<1x128xi1> to vector<1x128xi1>
    %604 = vector.broadcast %603 : vector<1x128xi1> to vector<8x128xi1>
    %605 = arith.select %604, %599, %602 : vector<8x128xi1>, vector<8x128xf32>
    %606 = vector.shape_cast %593 : vector<1x128xi1> to vector<1x128xi1>
    %607 = vector.broadcast %606 : vector<1x128xi1> to vector<8x128xi1>
    %608 = arith.select %607, %588, %605 : vector<8x128xi1>, vector<8x128xf32>
    %c0_176 = arith.constant 0 : index
    %c0_177 = arith.constant 0 : index
    %609 = vector.load %arg12[%c0_176, %c0_177] : memref<8x128xf32, #tpu.memory_space<vmem>>, vector<8x128xf32>
    tpu.vector_store %arg12[%c0_176, %c0_177], %608 {strides = array<i32>} : memref<8x128xf32, #tpu.memory_space<vmem>>, vector<8x128xf32>,
    %c0_178 = arith.constant 0 : index
    %c0_179 = arith.constant 0 : index
    %610 = vector.load %arg13[%c0_178, %c0_179] : memref<8x128xf32, #tpu.memory_space<vmem>>, vector<8x128xf32>
    tpu.vector_store %arg13[%c0_178, %c0_179], %583 {strides = array<i32>} : memref<8x128xf32, #tpu.memory_space<vmem>>, vector<8x128xf32>,
    return
  }
  func.func @transform_0(%arg0: i32) -> (i32, i32) {
    %c0_i32 = arith.constant 0 : i32
    %c0_i32_0 = arith.constant 0 : i32
    return %arg0, %c0_i32 : i32, i32
  }
  func.func @transform_1(%arg0: i32) -> (i32, i32) {
    %c0_i32 = arith.constant 0 : i32
    %c0_i32_0 = arith.constant 0 : i32
    return %arg0, %c0_i32 : i32, i32
  }
  func.func @transform_2(%arg0: i32) -> (i32, i32) {
    %c0_i32 = arith.constant 0 : i32
    %c0_i32_0 = arith.constant 0 : i32
    return %arg0, %c0_i32 : i32, i32
  }
  func.func @transform_3(%arg0: i32) -> (i32, i32) {
    %c0_i32 = arith.constant 0 : i32
    %c0_i32_0 = arith.constant 0 : i32
    %c0_i32_1 = arith.constant 0 : i32
    return %c0_i32, %c0_i32_0 : i32, i32
  }
  func.func @transform_4(%arg0: i32) -> (i32, i32) {
    %c0_i32 = arith.constant 0 : i32
    %c0_i32_0 = arith.constant 0 : i32
    %c0_i32_1 = arith.constant 0 : i32
    return %c0_i32, %c0_i32_0 : i32, i32
  }
  func.func @transform_5(%arg0: i32) -> (i32, i32) {
    %c0_i32 = arith.constant 0 : i32
    %c0_i32_0 = arith.constant 0 : i32
    %c0_i32_1 = arith.constant 0 : i32
    return %c0_i32, %c0_i32_0 : i32, i32
  }
  func.func @transform_6(%arg0: i32) -> (i32, i32) {
    %c0_i32 = arith.constant 0 : i32
    %c0_i32_0 = arith.constant 0 : i32
    %c0_i32_1 = arith.constant 0 : i32
    return %c0_i32, %c0_i32_0 : i32, i32
  }
  func.func @transform_7(%arg0: i32) -> (i32, i32) {
    %c0_i32 = arith.constant 0 : i32
    %c0_i32_0 = arith.constant 0 : i32
    %c0_i32_1 = arith.constant 0 : i32
    return %c0_i32, %c0_i32_0 : i32, i32
  }
  func.func @transform_8(%arg0: i32) -> (i32, i32) {
    %c0_i32 = arith.constant 0 : i32
    %c0_i32_0 = arith.constant 0 : i32
    %c0_i32_1 = arith.constant 0 : i32
    return %c0_i32, %c0_i32_0 : i32, i32
  }
  func.func @transform_9(%arg0: i32) -> (i32, i32) {
    %c0_i32 = arith.constant 0 : i32
    %c0_i32_0 = arith.constant 0 : i32
    %c0_i32_1 = arith.constant 0 : i32
    return %c0_i32, %c0_i32_0 : i32, i32
  }
  func.func @transform_10(%arg0: i32) -> (i32, i32) {
    %c0_i32 = arith.constant 0 : i32
    %c0_i32_0 = arith.constant 0 : i32
    %c0_i32_1 = arith.constant 0 : i32
    return %c0_i32, %c0_i32_0 : i32, i32
  }
  func.func @transform_11(%arg0: i32) -> (i32, i32) {
    %c0_i32 = arith.constant 0 : i32
    %c0_i32_0 = arith.constant 0 : i32
    return %arg0, %c0_i32 : i32, i32
  }
  func.func @transform_12(%arg0: i32) -> (i32, i32) {
    %c0_i32 = arith.constant 0 : i32
    %c0_i32_0 = arith.constant 0 : i32
    return %arg0, %c0_i32 : i32, i32
  }
}

</mosaic_0001>

<llo_original>
// kernel: tpu_custom_call.1
$region0: #{tpu_custom_call.1}
  #allocation0 [shape = 'u32[]', space=smem, size = 0x4, offset = 0x4, fixed_abs, tag = 'smem constant byte address 0x4 - core index']
  #allocation1 [shape = 'u32[144,128]{1,0:T(1,128)}', space=vmem, size = 0x12000, scoped, tag = 'internal scratch']
  #allocation2 [shape = 'f32[1,1]{1,0:T(1,128)S(1)}', space=vmem, size = 0x200, scoped, tag = 'scoped memory for tpu_custom_call.1']
  %s0 = inlined_call_operand.hbm [shape: f32[8,128], index: 0, kind: input, shape index: {}]
  %s1 = inlined_call_operand.hbm [shape: f32[8,128], index: 1, kind: input, shape index: {}]
  %s2 = inlined_call_operand.vmem [shape: f32[8,128], index: 2, kind: input, shape index: {}]
  %s3 = inlined_call_operand.hbm [shape: f32[128,384], index: 3, kind: input, shape index: {}]
  %s4 = inlined_call_operand.vmem [shape: f32[1,384], index: 4, kind: input, shape index: {}]
  %s5 = inlined_call_operand.hbm [shape: f32[128,384], index: 5, kind: input, shape index: {}]
  %s6 = inlined_call_operand.vmem [shape: f32[1,384], index: 6, kind: input, shape index: {}]
  %s7 = inlined_call_operand.hbm [shape: f32[128,128], index: 7, kind: input, shape index: {}]
  %s8 = inlined_call_operand.vmem [shape: f32[1,128], index: 8, kind: input, shape index: {}]
  %s9 = inlined_call_operand.vmem [shape: s32[1,128], index: 9, kind: input, shape index: {}]
  %s10 = inlined_call_operand.<no memory space> [shape: f32[1,1], index: 10, kind: input, shape index: {}]
  %s11 = inlined_call_operand.hbm [shape: f32[8,128], index: 11, kind: output, shape index: {0}]
  %s12 = inlined_call_operand.hbm [shape: f32[8,128], index: 12, kind: output, shape index: {1}]
  %13 = xla_tuple %s11, %s12
  %s14 = sld [smem:[#allocation0]]
  $region82: #{tpu_custom_call.1} parent=0
    _
  %s16 = ssub.s32 1, %s14
  %s17 = scalar_select 0, %s16, %s14
  %v18 = vstv %s10
  %19 = vst [vmem:[#allocation2] sm:$0x1] %v18
  $region1: #{tpu_custom_call.1} parent=0
    #allocation3 [shape = 'u8[4096]{0}', space=vmem, size = 0x1000, scoped, tag = 'input window, operand 0, single buffered']
    #allocation4 [shape = 's32[1]{0}', space=sflag, size = 0x4, scoped, tag = 'scoped memory for tpu_custom_call.1']
    #allocation5 [shape = 's32[1]{0}', space=sflag, size = 0x4, scoped, tag = 'scoped memory for tpu_custom_call.1']
    #allocation6 [shape = 'u8[4096]{0}', space=vmem, size = 0x1000, scoped, tag = 'input window, operand 1, single buffered']
    #allocation7 [shape = 's32[1]{0}', space=sflag, size = 0x4, scoped, tag = 'scoped memory for tpu_custom_call.1']
    #allocation8 [shape = 'u8[196608]{0}', space=vmem, size = 0x30000, scoped, tag = 'input window, operand 3, single buffered']
    #allocation9 [shape = 'u8[196608]{0}', space=vmem, size = 0x30000, scoped, tag = 'input window, operand 5, single buffered']
    #allocation10 [shape = 's32[1]{0}', space=sflag, size = 0x4, scoped, tag = 'scoped memory for tpu_custom_call.1']
    #allocation11 [shape = 'u8[65536]{0}', space=vmem, size = 0x10000, scoped, tag = 'input window, operand 7, single buffered']
    #allocation12 [shape = 'u8[4096]{0}', space=vmem, size = 0x1000, scoped, tag = 'output window, operand 0, single buffered']
    #allocation13 [shape = 'u8[4096]{0}', space=vmem, size = 0x1000, scoped, tag = 'output window, operand 1, single buffered']
    #allocation14 [shape = 's32[1]{0}', space=sflag, size = 0x4, scoped, tag = 'scoped memory for tpu_custom_call.1']
    %20 = vsyncpa [#allocation4], 0
    %21 = vsyncpa [#allocation7], 0
    %22 = vsyncpa [#allocation10], 0
    %23 = vsyncpa [#allocation5], 0
    %24 = vsyncpa [#allocation14], 0
    // Predicated region
    $region2: #{tpu_custom_call.1} parent=1 // pred_check
      _
    $region3: #{tpu_custom_call.1} parent=1 // pred_check_branch
      %26 = sbr.rel (0) target = $region5
    $region4: #{tpu_custom_call.1} parent=1 // pred_region
      %s28 = ssub.s32 128, 128
      %29 = vsyncadd [#allocation4], %s28
      %s31 = sshll.u32 [#allocation3], 4
      %s32 = int_to_ptr.vmem [resolvable:$true] %s31
      %34 = dma.hbm_to_vmem [thread:$0]  %s0, 128, %s32, [#allocation4]
    $region5: #{tpu_custom_call.1} parent=1 // pred_fallthru
      _
    // Predicated region
    $region6: #{tpu_custom_call.1} parent=1 // pred_check
      _
    $region7: #{tpu_custom_call.1} parent=1 // pred_check_branch
      %36 = sbr.rel (0) target = $region9
    $region8: #{tpu_custom_call.1} parent=1 // pred_region
      %s38 = ssub.s32 128, 128
      %39 = vsyncadd [#allocation7], %s38
      %s41 = sshll.u32 [#allocation6], 4
      %s42 = int_to_ptr.vmem [resolvable:$true] %s41
      %44 = dma.hbm_to_vmem [thread:$0]  %s1, 128, %s42, [#allocation7]
    $region9: #{tpu_custom_call.1} parent=1 // pred_fallthru
      _
    // Predicated region
    $region10: #{tpu_custom_call.1} parent=1 // pred_check
      _
    $region11: #{tpu_custom_call.1} parent=1 // pred_check_branch
      %46 = sbr.rel (0) target = $region13
    $region12: #{tpu_custom_call.1} parent=1 // pred_region
      _
    $region13: #{tpu_custom_call.1} parent=1 // pred_fallthru
      _
    // Predicated region
    $region14: #{tpu_custom_call.1} parent=1 // pred_check
      _
    $region15: #{tpu_custom_call.1} parent=1 // pred_check_branch
      %48 = sbr.rel (0) target = $region17
    $region16: #{tpu_custom_call.1} parent=1 // pred_region
      %s50 = ssub.s32 6144, 6144
      %51 = vsyncadd [#allocation7], %s50
      %s52 = sshll.u32 [#allocation8], 4
      %s53 = int_to_ptr.vmem [resolvable:$true] %s52
      %58 = dma.hbm_to_vmem [thread:$0]  %s3, 6144, %s53, [#allocation7], 384, 384, 24
    $region17: #{tpu_custom_call.1} parent=1 // pred_fallthru
      _
    // Predicated region
    $region18: #{tpu_custom_call.1} parent=1 // pred_check
      _
    $region19: #{tpu_custom_call.1} parent=1 // pred_check_branch
      %60 = sbr.rel (0) target = $region21
    $region20: #{tpu_custom_call.1} parent=1 // pred_region
      _
    $region21: #{tpu_custom_call.1} parent=1 // pred_fallthru
      _
    // Predicated region
    $region22: #{tpu_custom_call.1} parent=1 // pred_check
      _
    $region23: #{tpu_custom_call.1} parent=1 // pred_check_branch
      %62 = sbr.rel (0) target = $region25
    $region24: #{tpu_custom_call.1} parent=1 // pred_region
      %s64 = ssub.s32 6144, 6144
      %65 = vsyncadd [#allocation10], %s64
      %s66 = sshll.u32 [#allocation9], 4
      %s67 = int_to_ptr.vmem [resolvable:$true] %s66
      %72 = dma.hbm_to_vmem [thread:$0]  %s5, 6144, %s67, [#allocation10], 384, 384, 24
    $region25: #{tpu_custom_call.1} parent=1 // pred_fallthru
      _
    // Predicated region
    $region26: #{tpu_custom_call.1} parent=1 // pred_check
      _
    $region27: #{tpu_custom_call.1} parent=1 // pred_check_branch
      %74 = sbr.rel (0) target = $region29
    $region28: #{tpu_custom_call.1} parent=1 // pred_region
      _
    $region29: #{tpu_custom_call.1} parent=1 // pred_fallthru
      _
    // Predicated region
    $region30: #{tpu_custom_call.1} parent=1 // pred_check
      _
    $region31: #{tpu_custom_call.1} parent=1 // pred_check_branch
      %76 = sbr.rel (0) target = $region33
    $region32: #{tpu_custom_call.1} parent=1 // pred_region
      %s78 = ssub.s32 2048, 2048
      %79 = vsyncadd [#allocation10], %s78
      %s80 = sshll.u32 [#allocation11], 4
      %s81 = int_to_ptr.vmem [resolvable:$true] %s80
      %86 = dma.hbm_to_vmem [thread:$0]  %s7, 2048, %s81, [#allocation10], 128, 128, 8
    $region33: #{tpu_custom_call.1} parent=1 // pred_fallthru
      _
    // Predicated region
    $region34: #{tpu_custom_call.1} parent=1 // pred_check
      _
    $region35: #{tpu_custom_call.1} parent=1 // pred_check_branch
      %88 = sbr.rel (0) target = $region37
    $region36: #{tpu_custom_call.1} parent=1 // pred_region
      _
    $region37: #{tpu_custom_call.1} parent=1 // pred_fallthru
      _
    // Predicated region
    $region38: #{tpu_custom_call.1} parent=1 // pred_check
      _
    $region39: #{tpu_custom_call.1} parent=1 // pred_check_branch
      %90 = sbr.rel (0) target = $region41
    $region40: #{tpu_custom_call.1} parent=1 // pred_region
      _
    $region41: #{tpu_custom_call.1} parent=1 // pred_fallthru
      _
    // Predicated region
    $region42: #{tpu_custom_call.1} parent=1 // pred_check
      _
    $region43: #{tpu_custom_call.1} parent=1 // pred_check_branch
      %92 = sbr.rel (0) target = $region45
    $region44: #{tpu_custom_call.1} parent=1 // pred_region
      _
    $region45: #{tpu_custom_call.1} parent=1 // pred_fallthru
      _
    // Predicated region
    $region46: #{tpu_custom_call.1} parent=1 // pred_check
      _
    $region47: #{tpu_custom_call.1} parent=1 // pred_check_branch
      %94 = sbr.rel (0) target = $region49
    $region48: #{tpu_custom_call.1} parent=1 // pred_region
      %95 = dma.done [#allocation4], 128
    $region49: #{tpu_custom_call.1} parent=1 // pred_fallthru
      _
    // Predicated region
    $region50: #{tpu_custom_call.1} parent=1 // pred_check
      _
    $region51: #{tpu_custom_call.1} parent=1 // pred_check_branch
      %97 = sbr.rel (0) target = $region53
    $region52: #{tpu_custom_call.1} parent=1 // pred_region
      %98 = dma.done [#allocation7], 128
    $region53: #{tpu_custom_call.1} parent=1 // pred_fallthru
      _
    // Predicated region
    $region54: #{tpu_custom_call.1} parent=1 // pred_check
      _
    $region55: #{tpu_custom_call.1} parent=1 // pred_check_branch
      %100 = sbr.rel (0) target = $region57
    $region56: #{tpu_custom_call.1} parent=1 // pred_region
      %101 = dma.done [#allocation7], 6144
    $region57: #{tpu_custom_call.1} parent=1 // pred_fallthru
      _
    // Predicated region
    $region58: #{tpu_custom_call.1} parent=1 // pred_check
      _
    $region59: #{tpu_custom_call.1} parent=1 // pred_check_branch
      %103 = sbr.rel (0) target = $region61
    $region60: #{tpu_custom_call.1} parent=1 // pred_region
      %104 = dma.done [#allocation10], 6144
    $region61: #{tpu_custom_call.1} parent=1 // pred_fallthru
      _
    // Predicated region
    $region62: #{tpu_custom_call.1} parent=1 // pred_check
      _
    $region63: #{tpu_custom_call.1} parent=1 // pred_check_branch
      %106 = sbr.rel (0) target = $region65
    $region64: #{tpu_custom_call.1} parent=1 // pred_region
      %107 = dma.done [#allocation10], 2048
    $region65: #{tpu_custom_call.1} parent=1 // pred_fallthru
      _
    %v108 = vld [vmem:[#allocation3] sm:$0xff]
    %v109 = vld [vmem:[#allocation8] sm:$0xff]
    %v110 = vld [vmem:[#allocation8 + $0x8] sm:$0xff]
    %v111 = vld [vmem:[#allocation8 + $0x10] sm:$0xff]
    %v112 = vld [vmem:[#allocation8 + $0x18] sm:$0xff]
    %v113 = vld [vmem:[#allocation8 + $0x20] sm:$0xff]
    %v114 = vld [vmem:[#allocation8 + $0x28] sm:$0xff]
    %v115 = vld [vmem:[#allocation8 + $0x30] sm:$0xff]
    %v116 = vld [vmem:[#allocation8 + $0x38] sm:$0xff]
    %v117 = vld [vmem:[#allocation8 + $0x40] sm:$0xff]
    %v118 = vld [vmem:[#allocation8 + $0x48] sm:$0xff]
    %v119 = vld [vmem:[#allocation8 + $0x50] sm:$0xff]
    %v120 = vld [vmem:[#allocation8 + $0x58] sm:$0xff]
    %v121 = vld [vmem:[#allocation8 + $0x60] sm:$0xff]
    %v122 = vld [vmem:[#allocation8 + $0x68] sm:$0xff]
    %v123 = vld [vmem:[#allocation8 + $0x70] sm:$0xff]
    %v124 = vld [vmem:[#allocation8 + $0x78] sm:$0xff]
    %v125 = vld [vmem:[#allocation8 + $0x80] sm:$0xff]
    %v126 = vld [vmem:[#allocation8 + $0x88] sm:$0xff]
    %v127 = vld [vmem:[#allocation8 + $0x90] sm:$0xff]
    %v128 = vld [vmem:[#allocation8 + $0x98] sm:$0xff]
    %v129 = vld [vmem:[#allocation8 + $0xa0] sm:$0xff]
    %v130 = vld [vmem:[#allocation8 + $0xa8] sm:$0xff]
    %v131 = vld [vmem:[#allocation8 + $0xb0] sm:$0xff]
    %v132 = vld [vmem:[#allocation8 + $0xb8] sm:$0xff]
    %v133 = vld [vmem:[#allocation8 + $0xc0] sm:$0xff]
    %v134 = vld [vmem:[#allocation8 + $0xc8] sm:$0xff]
    %v135 = vld [vmem:[#allocation8 + $0xd0] sm:$0xff]
    %v136 = vld [vmem:[#allocation8 + $0xd8] sm:$0xff]
    %v137 = vld [vmem:[#allocation8 + $0xe0] sm:$0xff]
    %v138 = vld [vmem:[#allocation8 + $0xe8] sm:$0xff]
    %v139 = vld [vmem:[#allocation8 + $0xf0] sm:$0xff]
    %v140 = vld [vmem:[#allocation8 + $0xf8] sm:$0xff]
    %v141 = vld [vmem:[#allocation8 + $0x100] sm:$0xff]
    %v142 = vld [vmem:[#allocation8 + $0x108] sm:$0xff]
    %v143 = vld [vmem:[#allocation8 + $0x110] sm:$0xff]
    %v144 = vld [vmem:[#allocation8 + $0x118] sm:$0xff]
    %v145 = vld [vmem:[#allocation8 + $0x120] sm:$0xff]
    %v146 = vld [vmem:[#allocation8 + $0x128] sm:$0xff]
    %v147 = vld [vmem:[#allocation8 + $0x130] sm:$0xff]
    %v148 = vld [vmem:[#allocation8 + $0x138] sm:$0xff]
    %v149 = vld [vmem:[#allocation8 + $0x140] sm:$0xff]
    %v150 = vld [vmem:[#allocation8 + $0x148] sm:$0xff]
    %v151 = vld [vmem:[#allocation8 + $0x150] sm:$0xff]
    %v152 = vld [vmem:[#allocation8 + $0x158] sm:$0xff]
    %v153 = vld [vmem:[#allocation8 + $0x160] sm:$0xff]
    %v154 = vld [vmem:[#allocation8 + $0x168] sm:$0xff]
    %v155 = vld [vmem:[#allocation8 + $0x170] sm:$0xff]
    %v156 = vld [vmem:[#allocation8 + $0x178] sm:$0xff]
    %v157 = vld [vmem:[%s4] sm:$0x7]
    %v159 = vlaneseq
    %v160 = vshrl.u32 %v159, 7
    %v161 = vsub.s32 0, %v160
    %v162 = vrot.slane %v157, %v161
    %v163 = vlaneseq
    %v164 = vshrl.u32 %v163, 7
    %v165 = vsub.s32 1, %v164
    %v166 = vrot.slane %v157, %v165
    %v167 = vlaneseq
    %v168 = vshrl.u32 %v167, 7
    %v169 = vsub.s32 2, %v168
    %v170 = vrot.slane %v157, %v169
    %174 = vmatprep.subr.mxu0 %v110
    %175 = vmatpush1.msra.mxu0 %v109
    %176 = vmatprep.subr.mxu0 %v113
    %177 = vmatpush1.msra.mxu0 %v112
    %178 = vmatprep.subr.mxu0 %v116
    %179 = vmatpush1.msra.mxu0 %v115
    %180 = vmatprep.subr.mxu0 %v119
    %181 = vmatpush1.msra.mxu0 %v118
    %182 = vmatprep.subr.mxu0 %v122
    %183 = vmatpush1.msra.mxu0 %v121
    %184 = vmatprep.subr.mxu0 %v125
    %185 = vmatpush1.msra.mxu0 %v124
    %186 = vmatprep.subr.mxu0 %v128
    %187 = vmatpush1.msra.mxu0 %v127
    %188 = vmatprep.subr.mxu0 %v131
    %189 = vmatpush1.msra.mxu0 %v130
    %190 = vmatprep.subr.mxu0 %v134
    %191 = vmatpush1.msra.mxu0 %v133
    %192 = vmatprep.subr.mxu0 %v137
    %193 = vmatpush1.msra.mxu0 %v136
    %194 = vmatprep.subr.mxu0 %v140
    %195 = vmatpush1.msra.mxu0 %v139
    %196 = vmatprep.subr.mxu0 %v143
    %197 = vmatpush1.msra.mxu0 %v142
    %198 = vmatprep.subr.mxu0 %v146
    %199 = vmatpush1.msra.mxu0 %v145
    %200 = vmatprep.subr.mxu0 %v149
    %201 = vmatpush1.msra.mxu0 %v148
    %202 = vmatprep.subr.mxu0 %v152
    %203 = vmatpush1.msra.mxu0 %v151
    %204 = vmatprep.subr.mxu0 %v155
    %205 = vmatpush1.msra.mxu0 %v154
    %206 = vmatprep.subr.mxu0 0.0
    %207 = vmatpush1.msra.mxu0 0.0
    %208 = vmatprep.subr.mxu0 0.0
    %209 = vmatpush1.msra.mxu0 0.0
    %210 = vmatprep.subr.mxu0 0.0
    %211 = vmatpush1.msra.mxu0 0.0
    %212 = vmatprep.subr.mxu0 0.0
    %213 = vmatpush1.msra.mxu0 0.0
    %214 = vmatprep.subr.mxu0 0.0
    %215 = vmatpush1.msra.mxu0 0.0
    %216 = vmatprep.subr.mxu0 0.0
    %217 = vmatpush1.msra.mxu0 0.0
    %218 = vmatprep.subr.mxu0 0.0
    %219 = vmatpush1.msra.mxu0 0.0
    %220 = vmatprep.subr.mxu0 0.0
    %221 = vmatpush1.msra.mxu0 0.0
    %222 = vmatprep.subr.mxu0 0.0
    %223 = vmatpush1.msra.mxu0 0.0
    %224 = vmatprep.subr.mxu0 0.0
    %225 = vmatpush1.msra.mxu0 0.0
    %226 = vmatprep.subr.mxu0 0.0
    %227 = vmatpush1.msra.mxu0 0.0
    %228 = vmatprep.subr.mxu0 0.0
    %229 = vmatpush1.msra.mxu0 0.0
    %230 = vmatprep.subr.mxu0 0.0
    %231 = vmatpush1.msra.mxu0 0.0
    %232 = vmatprep.subr.mxu0 0.0
    %233 = vmatpush1.msra.mxu0 0.0
    %234 = vmatprep.subr.mxu0 0.0
    %235 = vmatpush1.msra.mxu0 0.0
    %236 = vmatprep.subr.mxu0 0.0
    %237 = vmatpush1.msra.mxu0 0.0
    %238 = vmatprep.mubr.f32.mxu0 0.0
    %239 = vmatmul.mubr.f32.gmra.mrb[0].mxu0 %v108
    %v240 = vpop.f32.mrb[0].mxu0
    %v241 = vadd.f32 %v162, %v240
    %v242 = vpop.f32.mrb[0].mxu0
    %v243 = vadd.f32 %v166, %v242
    %244 = vdwg.mxu0
    %245 = vmatprep.subr.mxu0 0.0
    %246 = vmatpush1.msra.mxu0 %v111
    %247 = vmatprep.subr.mxu0 0.0
    %248 = vmatpush1.msra.mxu0 %v114
    %249 = vmatprep.subr.mxu0 0.0
    %250 = vmatpush1.msra.mxu0 %v117
    %251 = vmatprep.subr.mxu0 0.0
    %252 = vmatpush1.msra.mxu0 %v120
    %253 = vmatprep.subr.mxu0 0.0
    %254 = vmatpush1.msra.mxu0 %v123
    %255 = vmatprep.subr.mxu0 0.0
    %256 = vmatpush1.msra.mxu0 %v126
    %257 = vmatprep.subr.mxu0 0.0
    %258 = vmatpush1.msra.mxu0 %v129
    %259 = vmatprep.subr.mxu0 0.0
    %260 = vmatpush1.msra.mxu0 %v132
    %261 = vmatprep.subr.mxu0 0.0
    %262 = vmatpush1.msra.mxu0 %v135
    %263 = vmatprep.subr.mxu0 0.0
    %264 = vmatpush1.msra.mxu0 %v138
    %265 = vmatprep.subr.mxu0 0.0
    %266 = vmatpush1.msra.mxu0 %v141
    %267 = vmatprep.subr.mxu0 0.0
    %268 = vmatpush1.msra.mxu0 %v144
    %269 = vmatprep.subr.mxu0 0.0
    %270 = vmatpush1.msra.mxu0 %v147
    %271 = vmatprep.subr.mxu0 0.0
    %272 = vmatpush1.msra.mxu0 %v150
    %273 = vmatprep.subr.mxu0 0.0
    %274 = vmatpush1.msra.mxu0 %v153
    %275 = vmatprep.subr.mxu0 0.0
    %276 = vmatpush1.msra.mxu0 %v156
    %277 = vmatprep.subr.mxu0 0.0
    %278 = vmatpush1.msra.mxu0 0.0
    %279 = vmatprep.subr.mxu0 0.0
    %280 = vmatpush1.msra.mxu0 0.0
    %281 = vmatprep.subr.mxu0 0.0
    %282 = vmatpush1.msra.mxu0 0.0
    %283 = vmatprep.subr.mxu0 0.0
    %284 = vmatpush1.msra.mxu0 0.0
    %285 = vmatprep.subr.mxu0 0.0
    %286 = vmatpush1.msra.mxu0 0.0
    %287 = vmatprep.subr.mxu0 0.0
    %288 = vmatpush1.msra.mxu0 0.0
    %289 = vmatprep.subr.mxu0 0.0
    %290 = vmatpush1.msra.mxu0 0.0
    %291 = vmatprep.subr.mxu0 0.0
    %292 = vmatpush1.msra.mxu0 0.0
    %293 = vmatprep.subr.mxu0 0.0
    %294 = vmatpush1.msra.mxu0 0.0
    %295 = vmatprep.subr.mxu0 0.0
    %296 = vmatpush1.msra.mxu0 0.0
    %297 = vmatprep.subr.mxu0 0.0
    %298 = vmatpush1.msra.mxu0 0.0
    %299 = vmatprep.subr.mxu0 0.0
    %300 = vmatpush1.msra.mxu0 0.0
    %301 = vmatprep.subr.mxu0 0.0
    %302 = vmatpush1.msra.mxu0 0.0
    %303 = vmatprep.subr.mxu0 0.0
    %304 = vmatpush1.msra.mxu0 0.0
    %305 = vmatprep.subr.mxu0 0.0
    %306 = vmatpush1.msra.mxu0 0.0
    %307 = vmatprep.subr.mxu0 0.0
    %308 = vmatpush1.msra.mxu0 0.0
    %309 = vmatprep.mubr.f32.mxu0 0.0
    %310 = vmatmul.mubr.f32.gmra.mrb[0].mxu0 %v108
    %v311 = vpop.f32.mrb[0].mxu0
    %v312 = vadd.f32 %v170, %v311
    %v313 = vpop.f32.mrb[0].mxu0
    %314 = vdwg.mxu0
    %v315 = vld [vmem:[#allocation9] sm:$0xff]
    %v316 = vld [vmem:[#allocation9 + $0x8] sm:$0xff]
    %v317 = vld [vmem:[#allocation9 + $0x10] sm:$0xff]
    %v318 = vld [vmem:[#allocation9 + $0x18] sm:$0xff]
    %v319 = vld [vmem:[#allocation9 + $0x20] sm:$0xff]
    %v320 = vld [vmem:[#allocation9 + $0x28] sm:$0xff]
    %v321 = vld [vmem:[#allocation9 + $0x30] sm:$0xff]
    %v322 = vld [vmem:[#allocation9 + $0x38] sm:$0xff]
    %v323 = vld [vmem:[#allocation9 + $0x40] sm:$0xff]
    %v324 = vld [vmem:[#allocation9 + $0x48] sm:$0xff]
    %v325 = vld [vmem:[#allocation9 + $0x50] sm:$0xff]
    %v326 = vld [vmem:[#allocation9 + $0x58] sm:$0xff]
    %v327 = vld [vmem:[#allocation9 + $0x60] sm:$0xff]
    %v328 = vld [vmem:[#allocation9 + $0x68] sm:$0xff]
    %v329 = vld [vmem:[#allocation9 + $0x70] sm:$0xff]
    %v330 = vld [vmem:[#allocation9 + $0x78] sm:$0xff]
    %v331 = vld [vmem:[#allocation9 + $0x80] sm:$0xff]
    %v332 = vld [vmem:[#allocation9 + $0x88] sm:$0xff]
    %v333 = vld [vmem:[#allocation9 + $0x90] sm:$0xff]
    %v334 = vld [vmem:[#allocation9 + $0x98] sm:$0xff]
    %v335 = vld [vmem:[#allocation9 + $0xa0] sm:$0xff]
    %v336 = vld [vmem:[#allocation9 + $0xa8] sm:$0xff]
    %v337 = vld [vmem:[#allocation9 + $0xb0] sm:$0xff]
    %v338 = vld [vmem:[#allocation9 + $0xb8] sm:$0xff]
    %v339 = vld [vmem:[#allocation9 + $0xc0] sm:$0xff]
    %v340 = vld [vmem:[#allocation9 + $0xc8] sm:$0xff]
    %v341 = vld [vmem:[#allocation9 + $0xd0] sm:$0xff]
    %v342 = vld [vmem:[#allocation9 + $0xd8] sm:$0xff]
    %v343 = vld [vmem:[#allocation9 + $0xe0] sm:$0xff]
    %v344 = vld [vmem:[#allocation9 + $0xe8] sm:$0xff]
    %v345 = vld [vmem:[#allocation9 + $0xf0] sm:$0xff]
    %v346 = vld [vmem:[#allocation9 + $0xf8] sm:$0xff]
    %v347 = vld [vmem:[#allocation9 + $0x100] sm:$0xff]
    %v348 = vld [vmem:[#allocation9 + $0x108] sm:$0xff]
    %v349 = vld [vmem:[#allocation9 + $0x110] sm:$0xff]
    %v350 = vld [vmem:[#allocation9 + $0x118] sm:$0xff]
    %v351 = vld [vmem:[#allocation9 + $0x120] sm:$0xff]
    %v352 = vld [vmem:[#allocation9 + $0x128] sm:$0xff]
    %v353 = vld [vmem:[#allocation9 + $0x130] sm:$0xff]
    %v354 = vld [vmem:[#allocation9 + $0x138] sm:$0xff]
    %v355 = vld [vmem:[#allocation9 + $0x140] sm:$0xff]
    %v356 = vld [vmem:[#allocation9 + $0x148] sm:$0xff]
    %v357 = vld [vmem:[#allocation9 + $0x150] sm:$0xff]
    %v358 = vld [vmem:[#allocation9 + $0x158] sm:$0xff]
    %v359 = vld [vmem:[#allocation9 + $0x160] sm:$0xff]
    %v360 = vld [vmem:[#allocation9 + $0x168] sm:$0xff]
    %v361 = vld [vmem:[#allocation9 + $0x170] sm:$0xff]
    %v362 = vld [vmem:[#allocation9 + $0x178] sm:$0xff]
    %v363 = vld [vmem:[%s6] sm:$0x7]
    %v364 = vld [vmem:[#allocation6] sm:$0xff]
    %v366 = vlaneseq
    %v367 = vshrl.u32 %v366, 7
    %v368 = vsub.s32 0, %v367
    %v369 = vrot.slane %v363, %v368
    %v370 = vlaneseq
    %v371 = vshrl.u32 %v370, 7
    %v372 = vsub.s32 1, %v371
    %v373 = vrot.slane %v363, %v372
    %v374 = vlaneseq
    %v375 = vshrl.u32 %v374, 7
    %v376 = vsub.s32 2, %v375
    %v377 = vrot.slane %v363, %v376
    %381 = vmatprep.subr.mxu0 %v316
    %382 = vmatpush1.msra.mxu0 %v315
    %383 = vmatprep.subr.mxu0 %v319
    %384 = vmatpush1.msra.mxu0 %v318
    %385 = vmatprep.subr.mxu0 %v322
    %386 = vmatpush1.msra.mxu0 %v321
    %387 = vmatprep.subr.mxu0 %v325
    %388 = vmatpush1.msra.mxu0 %v324
    %389 = vmatprep.subr.mxu0 %v328
    %390 = vmatpush1.msra.mxu0 %v327
    %391 = vmatprep.subr.mxu0 %v331
    %392 = vmatpush1.msra.mxu0 %v330
    %393 = vmatprep.subr.mxu0 %v334
    %394 = vmatpush1.msra.mxu0 %v333
    %395 = vmatprep.subr.mxu0 %v337
    %396 = vmatpush1.msra.mxu0 %v336
    %397 = vmatprep.subr.mxu0 %v340
    %398 = vmatpush1.msra.mxu0 %v339
    %399 = vmatprep.subr.mxu0 %v343
    %400 = vmatpush1.msra.mxu0 %v342
    %401 = vmatprep.subr.mxu0 %v346
    %402 = vmatpush1.msra.mxu0 %v345
    %403 = vmatprep.subr.mxu0 %v349
    %404 = vmatpush1.msra.mxu0 %v348
    %405 = vmatprep.subr.mxu0 %v352
    %406 = vmatpush1.msra.mxu0 %v351
    %407 = vmatprep.subr.mxu0 %v355
    %408 = vmatpush1.msra.mxu0 %v354
    %409 = vmatprep.subr.mxu0 %v358
    %410 = vmatpush1.msra.mxu0 %v357
    %411 = vmatprep.subr.mxu0 %v361
    %412 = vmatpush1.msra.mxu0 %v360
    %413 = vmatprep.subr.mxu0 0.0
    %414 = vmatpush1.msra.mxu0 0.0
    %415 = vmatprep.subr.mxu0 0.0
    %416 = vmatpush1.msra.mxu0 0.0
    %417 = vmatprep.subr.mxu0 0.0
    %418 = vmatpush1.msra.mxu0 0.0
    %419 = vmatprep.subr.mxu0 0.0
    %420 = vmatpush1.msra.mxu0 0.0
    %421 = vmatprep.subr.mxu0 0.0
    %422 = vmatpush1.msra.mxu0 0.0
    %423 = vmatprep.subr.mxu0 0.0
    %424 = vmatpush1.msra.mxu0 0.0
    %425 = vmatprep.subr.mxu0 0.0
    %426 = vmatpush1.msra.mxu0 0.0
    %427 = vmatprep.subr.mxu0 0.0
    %428 = vmatpush1.msra.mxu0 0.0
    %429 = vmatprep.subr.mxu0 0.0
    %430 = vmatpush1.msra.mxu0 0.0
    %431 = vmatprep.subr.mxu0 0.0
    %432 = vmatpush1.msra.mxu0 0.0
    %433 = vmatprep.subr.mxu0 0.0
    %434 = vmatpush1.msra.mxu0 0.0
    %435 = vmatprep.subr.mxu0 0.0
    %436 = vmatpush1.msra.mxu0 0.0
    %437 = vmatprep.subr.mxu0 0.0
    %438 = vmatpush1.msra.mxu0 0.0
    %439 = vmatprep.subr.mxu0 0.0
    %440 = vmatpush1.msra.mxu0 0.0
    %441 = vmatprep.subr.mxu0 0.0
    %442 = vmatpush1.msra.mxu0 0.0
    %443 = vmatprep.subr.mxu0 0.0
    %444 = vmatpush1.msra.mxu0 0.0
    %445 = vmatprep.mubr.f32.mxu0 0.0
    %446 = vmatmul.mubr.f32.gmra.mrb[0].mxu0 %v364
    %v447 = vpop.f32.mrb[0].mxu0
    %v448 = vadd.f32 %v369, %v447
    %v449 = vpop.f32.mrb[0].mxu0
    %v450 = vadd.f32 %v373, %v449
    %451 = vdwg.mxu0
    %452 = vmatprep.subr.mxu0 0.0
    %453 = vmatpush1.msra.mxu0 %v317
    %454 = vmatprep.subr.mxu0 0.0
    %455 = vmatpush1.msra.mxu0 %v320
    %456 = vmatprep.subr.mxu0 0.0
    %457 = vmatpush1.msra.mxu0 %v323
    %458 = vmatprep.subr.mxu0 0.0
    %459 = vmatpush1.msra.mxu0 %v326
    %460 = vmatprep.subr.mxu0 0.0
    %461 = vmatpush1.msra.mxu0 %v329
    %462 = vmatprep.subr.mxu0 0.0
    %463 = vmatpush1.msra.mxu0 %v332
    %464 = vmatprep.subr.mxu0 0.0
    %465 = vmatpush1.msra.mxu0 %v335
    %466 = vmatprep.subr.mxu0 0.0
    %467 = vmatpush1.msra.mxu0 %v338
    %468 = vmatprep.subr.mxu0 0.0
    %469 = vmatpush1.msra.mxu0 %v341
    %470 = vmatprep.subr.mxu0 0.0
    %471 = vmatpush1.msra.mxu0 %v344
    %472 = vmatprep.subr.mxu0 0.0
    %473 = vmatpush1.msra.mxu0 %v347
    %474 = vmatprep.subr.mxu0 0.0
    %475 = vmatpush1.msra.mxu0 %v350
    %476 = vmatprep.subr.mxu0 0.0
    %477 = vmatpush1.msra.mxu0 %v353
    %478 = vmatprep.subr.mxu0 0.0
    %479 = vmatpush1.msra.mxu0 %v356
    %480 = vmatprep.subr.mxu0 0.0
    %481 = vmatpush1.msra.mxu0 %v359
    %482 = vmatprep.subr.mxu0 0.0
    %483 = vmatpush1.msra.mxu0 %v362
    %484 = vmatprep.subr.mxu0 0.0
    %485 = vmatpush1.msra.mxu0 0.0
    %486 = vmatprep.subr.mxu0 0.0
    %487 = vmatpush1.msra.mxu0 0.0
    %488 = vmatprep.subr.mxu0 0.0
    %489 = vmatpush1.msra.mxu0 0.0
    %490 = vmatprep.subr.mxu0 0.0
    %491 = vmatpush1.msra.mxu0 0.0
    %492 = vmatprep.subr.mxu0 0.0
    %493 = vmatpush1.msra.mxu0 0.0
    %494 = vmatprep.subr.mxu0 0.0
    %495 = vmatpush1.msra.mxu0 0.0
    %496 = vmatprep.subr.mxu0 0.0
    %497 = vmatpush1.msra.mxu0 0.0
    %498 = vmatprep.subr.mxu0 0.0
    %499 = vmatpush1.msra.mxu0 0.0
    %500 = vmatprep.subr.mxu0 0.0
    %501 = vmatpush1.msra.mxu0 0.0
    %502 = vmatprep.subr.mxu0 0.0
    %503 = vmatpush1.msra.mxu0 0.0
    %504 = vmatprep.subr.mxu0 0.0
    %505 = vmatpush1.msra.mxu0 0.0
    %506 = vmatprep.subr.mxu0 0.0
    %507 = vmatpush1.msra.mxu0 0.0
    %508 = vmatprep.subr.mxu0 0.0
    %509 = vmatpush1.msra.mxu0 0.0
    %510 = vmatprep.subr.mxu0 0.0
    %511 = vmatpush1.msra.mxu0 0.0
    %512 = vmatprep.subr.mxu0 0.0
    %513 = vmatpush1.msra.mxu0 0.0
    %514 = vmatprep.subr.mxu0 0.0
    %515 = vmatpush1.msra.mxu0 0.0
    %516 = vmatprep.mubr.f32.mxu0 0.0
    %517 = vmatmul.mubr.f32.gmra.mrb[0].mxu0 %v364
    %v518 = vpop.f32.mrb[0].mxu0
    %v519 = vadd.f32 %v377, %v518
    %v520 = vpop.f32.mrb[0].mxu0
    %521 = vdwg.mxu0
    %v522 = vadd.f32 %v241, %v448
    %v523 = vsub.f32 0.0, %v522
    %v524 = vmul.f32 %v523, 1.442695
    %v525 = vpow.pop %v524
    %v526 = vadd.f32 %v525, 1.0
    %v527 = vrcp.pop %v526
    %v528 = vmul.f32 1.0, %v527
    %v529 = vadd.f32 %v243, %v450
    %v530 = vsub.f32 0.0, %v529
    %v531 = vmul.f32 %v530, 1.442695
    %v532 = vpow.pop %v531
    %v533 = vadd.f32 %v532, 1.0
    %v534 = vrcp.pop %v533
    %v535 = vmul.f32 1.0, %v534
    %v536 = vmul.f32 %v528, %v519
    %v537 = vadd.f32 %v312, %v536
    %v538 = vtanh.pop %v537
    %v539 = vsub.f32 1.0, %v535
    %v540 = vmul.f32 %v539, %v538
    %v541 = vmul.f32 %v535, %v364
    %v542 = vadd.f32 %v540, %v541
    %v543 = vsub.f32 %v542, %v364
    %v544 = vmul.f32 %v543, 0.0125
    %v545 = vadd.f32 %v364, %v544
    %546 = vmatprep.subr.mxu0 %v316
    %547 = vmatpush1.msra.mxu0 %v315
    %548 = vmatprep.subr.mxu0 %v319
    %549 = vmatpush1.msra.mxu0 %v318
    %550 = vmatprep.subr.mxu0 %v322
    %551 = vmatpush1.msra.mxu0 %v321
    %552 = vmatprep.subr.mxu0 %v325
    %553 = vmatpush1.msra.mxu0 %v324
    %554 = vmatprep.subr.mxu0 %v328
    %555 = vmatpush1.msra.mxu0 %v327
    %556 = vmatprep.subr.mxu0 %v331
    %557 = vmatpush1.msra.mxu0 %v330
    %558 = vmatprep.subr.mxu0 %v334
    %559 = vmatpush1.msra.mxu0 %v333
    %560 = vmatprep.subr.mxu0 %v337
    %561 = vmatpush1.msra.mxu0 %v336
    %562 = vmatprep.subr.mxu0 %v340
    %563 = vmatpush1.msra.mxu0 %v339
    %564 = vmatprep.subr.mxu0 %v343
    %565 = vmatpush1.msra.mxu0 %v342
    %566 = vmatprep.subr.mxu0 %v346
    %567 = vmatpush1.msra.mxu0 %v345
    %568 = vmatprep.subr.mxu0 %v349
    %569 = vmatpush1.msra.mxu0 %v348
    %570 = vmatprep.subr.mxu0 %v352
    %571 = vmatpush1.msra.mxu0 %v351
    %572 = vmatprep.subr.mxu0 %v355
    %573 = vmatpush1.msra.mxu0 %v354
    %574 = vmatprep.subr.mxu0 %v358
    %575 = vmatpush1.msra.mxu0 %v357
    %576 = vmatprep.subr.mxu0 %v361
    %577 = vmatpush1.msra.mxu0 %v360
    %578 = vmatprep.subr.mxu0 0.0
    %579 = vmatpush1.msra.mxu0 0.0
    %580 = vmatprep.subr.mxu0 0.0
    %581 = vmatpush1.msra.mxu0 0.0
    %582 = vmatprep.subr.mxu0 0.0
    %583 = vmatpush1.msra.mxu0 0.0
    %584 = vmatprep.subr.mxu0 0.0
    %585 = vmatpush1.msra.mxu0 0.0
    %586 = vmatprep.subr.mxu0 0.0
    %587 = vmatpush1.msra.mxu0 0.0
    %588 = vmatprep.subr.mxu0 0.0
    %589 = vmatpush1.msra.mxu0 0.0
    %590 = vmatprep.subr.mxu0 0.0
    %591 = vmatpush1.msra.mxu0 0.0
    %592 = vmatprep.subr.mxu0 0.0
    %593 = vmatpush1.msra.mxu0 0.0
    %594 = vmatprep.subr.mxu0 0.0
    %595 = vmatpush1.msra.mxu0 0.0
    %596 = vmatprep.subr.mxu0 0.0
    %597 = vmatpush1.msra.mxu0 0.0
    %598 = vmatprep.subr.mxu0 0.0
    %599 = vmatpush1.msra.mxu0 0.0
    %600 = vmatprep.subr.mxu0 0.0
    %601 = vmatpush1.msra.mxu0 0.0
    %602 = vmatprep.subr.mxu0 0.0
    %603 = vmatpush1.msra.mxu0 0.0
    %604 = vmatprep.subr.mxu0 0.0
    %605 = vmatpush1.msra.mxu0 0.0
    %606 = vmatprep.subr.mxu0 0.0
    %607 = vmatpush1.msra.mxu0 0.0
    %608 = vmatprep.subr.mxu0 0.0
    %609 = vmatpush1.msra.mxu0 0.0
    %610 = vmatprep.mubr.f32.mxu0 0.0
    %611 = vmatmul.mubr.f32.gmra.mrb[0].mxu0 %v545
    %v612 = vpop.f32.mrb[0].mxu0
    %v613 = vadd.f32 %v369, %v612
    %v614 = vpop.f32.mrb[0].mxu0
    %v615 = vadd.f32 %v373, %v614
    %616 = vdwg.mxu0
    %617 = vmatprep.subr.mxu0 0.0
    %618 = vmatpush1.msra.mxu0 %v317
    %619 = vmatprep.subr.mxu0 0.0
    %620 = vmatpush1.msra.mxu0 %v320
    %621 = vmatprep.subr.mxu0 0.0
    %622 = vmatpush1.msra.mxu0 %v323
    %623 = vmatprep.subr.mxu0 0.0
    %624 = vmatpush1.msra.mxu0 %v326
    %625 = vmatprep.subr.mxu0 0.0
    %626 = vmatpush1.msra.mxu0 %v329
    %627 = vmatprep.subr.mxu0 0.0
    %628 = vmatpush1.msra.mxu0 %v332
    %629 = vmatprep.subr.mxu0 0.0
    %630 = vmatpush1.msra.mxu0 %v335
    %631 = vmatprep.subr.mxu0 0.0
    %632 = vmatpush1.msra.mxu0 %v338
    %633 = vmatprep.subr.mxu0 0.0
    %634 = vmatpush1.msra.mxu0 %v341
    %635 = vmatprep.subr.mxu0 0.0
    %636 = vmatpush1.msra.mxu0 %v344
    %637 = vmatprep.subr.mxu0 0.0
    %638 = vmatpush1.msra.mxu0 %v347
    %639 = vmatprep.subr.mxu0 0.0
    %640 = vmatpush1.msra.mxu0 %v350
    %641 = vmatprep.subr.mxu0 0.0
    %642 = vmatpush1.msra.mxu0 %v353
    %643 = vmatprep.subr.mxu0 0.0
    %644 = vmatpush1.msra.mxu0 %v356
    %645 = vmatprep.subr.mxu0 0.0
    %646 = vmatpush1.msra.mxu0 %v359
    %647 = vmatprep.subr.mxu0 0.0
    %648 = vmatpush1.msra.mxu0 %v362
    %649 = vmatprep.subr.mxu0 0.0
    %650 = vmatpush1.msra.mxu0 0.0
    %651 = vmatprep.subr.mxu0 0.0
    %652 = vmatpush1.msra.mxu0 0.0
    %653 = vmatprep.subr.mxu0 0.0
    %654 = vmatpush1.msra.mxu0 0.0
    %655 = vmatprep.subr.mxu0 0.0
    %656 = vmatpush1.msra.mxu0 0.0
    %657 = vmatprep.subr.mxu0 0.0
    %658 = vmatpush1.msra.mxu0 0.0
    %659 = vmatprep.subr.mxu0 0.0
    %660 = vmatpush1.msra.mxu0 0.0
    %661 = vmatprep.subr.mxu0 0.0
    %662 = vmatpush1.msra.mxu0 0.0
    %663 = vmatprep.subr.mxu0 0.0
    %664 = vmatpush1.msra.mxu0 0.0
    %665 = vmatprep.subr.mxu0 0.0
    %666 = vmatpush1.msra.mxu0 0.0
    %667 = vmatprep.subr.mxu0 0.0
    %668 = vmatpush1.msra.mxu0 0.0
    %669 = vmatprep.subr.mxu0 0.0
    %670 = vmatpush1.msra.mxu0 0.0
    %671 = vmatprep.subr.mxu0 0.0
    %672 = vmatpush1.msra.mxu0 0.0
    %673 = vmatprep.subr.mxu0 0.0
    %674 = vmatpush1.msra.mxu0 0.0
    %675 = vmatprep.subr.mxu0 0.0
    %676 = vmatpush1.msra.mxu0 0.0
    %677 = vmatprep.subr.mxu0 0.0
    %678 = vmatpush1.msra.mxu0 0.0
    %679 = vmatprep.subr.mxu0 0.0
    %680 = vmatpush1.msra.mxu0 0.0
    %681 = vmatprep.mubr.f32.mxu0 0.0
    %682 = vmatmul.mubr.f32.gmra.mrb[0].mxu0 %v545
    %v683 = vpop.f32.mrb[0].mxu0
    %v684 = vadd.f32 %v377, %v683
    %v685 = vpop.f32.mrb[0].mxu0
    %686 = vdwg.mxu0
    %v687 = vadd.f32 %v241, %v613
    %v688 = vsub.f32 0.0, %v687
    %v689 = vmul.f32 %v688, 1.442695
    %v690 = vpow.pop %v689
    %v691 = vadd.f32 %v690, 1.0
    %v692 = vrcp.pop %v691
    %v693 = vmul.f32 1.0, %v692
    %v694 = vadd.f32 %v243, %v615
    %v695 = vsub.f32 0.0, %v694
    %v696 = vmul.f32 %v695, 1.442695
    %v697 = vpow.pop %v696
    %v698 = vadd.f32 %v697, 1.0
    %v699 = vrcp.pop %v698
    %v700 = vmul.f32 1.0, %v699
    %v701 = vmul.f32 %v693, %v684
    %v702 = vadd.f32 %v312, %v701
    %v703 = vtanh.pop %v702
    %v704 = vsub.f32 1.0, %v700
    %v705 = vmul.f32 %v704, %v703
    %v706 = vmul.f32 %v700, %v545
    %v707 = vadd.f32 %v705, %v706
    %v708 = vsub.f32 %v707, %v545
    %v709 = vmul.f32 %v708, 0.0125
    %v710 = vadd.f32 %v364, %v709
    %711 = vmatprep.subr.mxu0 %v316
    %712 = vmatpush1.msra.mxu0 %v315
    %713 = vmatprep.subr.mxu0 %v319
    %714 = vmatpush1.msra.mxu0 %v318
    %715 = vmatprep.subr.mxu0 %v322
    %716 = vmatpush1.msra.mxu0 %v321
    %717 = vmatprep.subr.mxu0 %v325
    %718 = vmatpush1.msra.mxu0 %v324
    %719 = vmatprep.subr.mxu0 %v328
    %720 = vmatpush1.msra.mxu0 %v327
    %721 = vmatprep.subr.mxu0 %v331
    %722 = vmatpush1.msra.mxu0 %v330
    %723 = vmatprep.subr.mxu0 %v334
    %724 = vmatpush1.msra.mxu0 %v333
    %725 = vmatprep.subr.mxu0 %v337
    %726 = vmatpush1.msra.mxu0 %v336
    %727 = vmatprep.subr.mxu0 %v340
    %728 = vmatpush1.msra.mxu0 %v339
    %729 = vmatprep.subr.mxu0 %v343
    %730 = vmatpush1.msra.mxu0 %v342
    %731 = vmatprep.subr.mxu0 %v346
    %732 = vmatpush1.msra.mxu0 %v345
    %733 = vmatprep.subr.mxu0 %v349
    %734 = vmatpush1.msra.mxu0 %v348
    %735 = vmatprep.subr.mxu0 %v352
    %736 = vmatpush1.msra.mxu0 %v351
    %737 = vmatprep.subr.mxu0 %v355
    %738 = vmatpush1.msra.mxu0 %v354
    %739 = vmatprep.subr.mxu0 %v358
    %740 = vmatpush1.msra.mxu0 %v357
    %741 = vmatprep.subr.mxu0 %v361
    %742 = vmatpush1.msra.mxu0 %v360
    %743 = vmatprep.subr.mxu0 0.0
    %744 = vmatpush1.msra.mxu0 0.0
    %745 = vmatprep.subr.mxu0 0.0
    %746 = vmatpush1.msra.mxu0 0.0
    %747 = vmatprep.subr.mxu0 0.0
    %748 = vmatpush1.msra.mxu0 0.0
    %749 = vmatprep.subr.mxu0 0.0
    %750 = vmatpush1.msra.mxu0 0.0
    %751 = vmatprep.subr.mxu0 0.0
    %752 = vmatpush1.msra.mxu0 0.0
    %753 = vmatprep.subr.mxu0 0.0
    %754 = vmatpush1.msra.mxu0 0.0
    %755 = vmatprep.subr.mxu0 0.0
    %756 = vmatpush1.msra.mxu0 0.0
    %757 = vmatprep.subr.mxu0 0.0
    %758 = vmatpush1.msra.mxu0 0.0
    %759 = vmatprep.subr.mxu0 0.0
    %760 = vmatpush1.msra.mxu0 0.0
    %761 = vmatprep.subr.mxu0 0.0
    %762 = vmatpush1.msra.mxu0 0.0
    %763 = vmatprep.subr.mxu0 0.0
    %764 = vmatpush1.msra.mxu0 0.0
    %765 = vmatprep.subr.mxu0 0.0
    %766 = vmatpush1.msra.mxu0 0.0
    %767 = vmatprep.subr.mxu0 0.0
    %768 = vmatpush1.msra.mxu0 0.0
    %769 = vmatprep.subr.mxu0 0.0
    %770 = vmatpush1.msra.mxu0 0.0
    %771 = vmatprep.subr.mxu0 0.0
    %772 = vmatpush1.msra.mxu0 0.0
    %773 = vmatprep.subr.mxu0 0.0
    %774 = vmatpush1.msra.mxu0 0.0
    %775 = vmatprep.mubr.f32.mxu0 0.0
    %776 = vmatmul.mubr.f32.gmra.mrb[0].mxu0 %v710
    %v777 = vpop.f32.mrb[0].mxu0
    %v778 = vadd.f32 %v369, %v777
    %v779 = vpop.f32.mrb[0].mxu0
    %v780 = vadd.f32 %v373, %v779
    %781 = vdwg.mxu0
    %782 = vmatprep.subr.mxu0 0.0
    %783 = vmatpush1.msra.mxu0 %v317
    %784 = vmatprep.subr.mxu0 0.0
    %785 = vmatpush1.msra.mxu0 %v320
    %786 = vmatprep.subr.mxu0 0.0
    %787 = vmatpush1.msra.mxu0 %v323
    %788 = vmatprep.subr.mxu0 0.0
    %789 = vmatpush1.msra.mxu0 %v326
    %790 = vmatprep.subr.mxu0 0.0
    %791 = vmatpush1.msra.mxu0 %v329
    %792 = vmatprep.subr.mxu0 0.0
    %793 = vmatpush1.msra.mxu0 %v332
    %794 = vmatprep.subr.mxu0 0.0
    %795 = vmatpush1.msra.mxu0 %v335
    %796 = vmatprep.subr.mxu0 0.0
    %797 = vmatpush1.msra.mxu0 %v338
    %798 = vmatprep.subr.mxu0 0.0
    %799 = vmatpush1.msra.mxu0 %v341
    %800 = vmatprep.subr.mxu0 0.0
    %801 = vmatpush1.msra.mxu0 %v344
    %802 = vmatprep.subr.mxu0 0.0
    %803 = vmatpush1.msra.mxu0 %v347
    %804 = vmatprep.subr.mxu0 0.0
    %805 = vmatpush1.msra.mxu0 %v350
    %806 = vmatprep.subr.mxu0 0.0
    %807 = vmatpush1.msra.mxu0 %v353
    %808 = vmatprep.subr.mxu0 0.0
    %809 = vmatpush1.msra.mxu0 %v356
    %810 = vmatprep.subr.mxu0 0.0
    %811 = vmatpush1.msra.mxu0 %v359
    %812 = vmatprep.subr.mxu0 0.0
    %813 = vmatpush1.msra.mxu0 %v362
    %814 = vmatprep.subr.mxu0 0.0
    %815 = vmatpush1.msra.mxu0 0.0
    %816 = vmatprep.subr.mxu0 0.0
    %817 = vmatpush1.msra.mxu0 0.0
    %818 = vmatprep.subr.mxu0 0.0
    %819 = vmatpush1.msra.mxu0 0.0
    %820 = vmatprep.subr.mxu0 0.0
    %821 = vmatpush1.msra.mxu0 0.0
    %822 = vmatprep.subr.mxu0 0.0
    %823 = vmatpush1.msra.mxu0 0.0
    %824 = vmatprep.subr.mxu0 0.0
    %825 = vmatpush1.msra.mxu0 0.0
    %826 = vmatprep.subr.mxu0 0.0
    %827 = vmatpush1.msra.mxu0 0.0
    %828 = vmatprep.subr.mxu0 0.0
    %829 = vmatpush1.msra.mxu0 0.0
    %830 = vmatprep.subr.mxu0 0.0
    %831 = vmatpush1.msra.mxu0 0.0
    %832 = vmatprep.subr.mxu0 0.0
    %833 = vmatpush1.msra.mxu0 0.0
    %834 = vmatprep.subr.mxu0 0.0
    %835 = vmatpush1.msra.mxu0 0.0
    %836 = vmatprep.subr.mxu0 0.0
    %837 = vmatpush1.msra.mxu0 0.0
    %838 = vmatprep.subr.mxu0 0.0
    %839 = vmatpush1.msra.mxu0 0.0
    %840 = vmatprep.subr.mxu0 0.0
    %841 = vmatpush1.msra.mxu0 0.0
    %842 = vmatprep.subr.mxu0 0.0
    %843 = vmatpush1.msra.mxu0 0.0
    %844 = vmatprep.subr.mxu0 0.0
    %845 = vmatpush1.msra.mxu0 0.0
    %846 = vmatprep.mubr.f32.mxu0 0.0
    %847 = vmatmul.mubr.f32.gmra.mrb[0].mxu0 %v710
    %v848 = vpop.f32.mrb[0].mxu0
    %v849 = vadd.f32 %v377, %v848
    %v850 = vpop.f32.mrb[0].mxu0
    %851 = vdwg.mxu0
    %v852 = vadd.f32 %v241, %v778
    %v853 = vsub.f32 0.0, %v852
    %v854 = vmul.f32 %v853, 1.442695
    %v855 = vpow.pop %v854
    %v856 = vadd.f32 %v855, 1.0
    %v857 = vrcp.pop %v856
    %v858 = vmul.f32 1.0, %v857
    %v859 = vadd.f32 %v243, %v780
    %v860 = vsub.f32 0.0, %v859
    %v861 = vmul.f32 %v860, 1.442695
    %v862 = vpow.pop %v861
    %v863 = vadd.f32 %v862, 1.0
    %v864 = vrcp.pop %v863
    %v865 = vmul.f32 1.0, %v864
    %v866 = vmul.f32 %v858, %v849
    %v867 = vadd.f32 %v312, %v866
    %v868 = vtanh.pop %v867
    %v869 = vsub.f32 1.0, %v865
    %v870 = vmul.f32 %v869, %v868
    %v871 = vmul.f32 %v865, %v710
    %v872 = vadd.f32 %v870, %v871
    %v873 = vsub.f32 %v872, %v710
    %v874 = vmul.f32 %v873, 0.025
    %v875 = vadd.f32 %v364, %v874
    %876 = vmatprep.subr.mxu0 %v316
    %877 = vmatpush1.msra.mxu0 %v315
    %878 = vmatprep.subr.mxu0 %v319
    %879 = vmatpush1.msra.mxu0 %v318
    %880 = vmatprep.subr.mxu0 %v322
    %881 = vmatpush1.msra.mxu0 %v321
    %882 = vmatprep.subr.mxu0 %v325
    %883 = vmatpush1.msra.mxu0 %v324
    %884 = vmatprep.subr.mxu0 %v328
    %885 = vmatpush1.msra.mxu0 %v327
    %886 = vmatprep.subr.mxu0 %v331
    %887 = vmatpush1.msra.mxu0 %v330
    %888 = vmatprep.subr.mxu0 %v334
    %889 = vmatpush1.msra.mxu0 %v333
    %890 = vmatprep.subr.mxu0 %v337
    %891 = vmatpush1.msra.mxu0 %v336
    %892 = vmatprep.subr.mxu0 %v340
    %893 = vmatpush1.msra.mxu0 %v339
    %894 = vmatprep.subr.mxu0 %v343
    %895 = vmatpush1.msra.mxu0 %v342
    %896 = vmatprep.subr.mxu0 %v346
    %897 = vmatpush1.msra.mxu0 %v345
    %898 = vmatprep.subr.mxu0 %v349
    %899 = vmatpush1.msra.mxu0 %v348
    %900 = vmatprep.subr.mxu0 %v352
    %901 = vmatpush1.msra.mxu0 %v351
    %902 = vmatprep.subr.mxu0 %v355
    %903 = vmatpush1.msra.mxu0 %v354
    %904 = vmatprep.subr.mxu0 %v358
    %905 = vmatpush1.msra.mxu0 %v357
    %906 = vmatprep.subr.mxu0 %v361
    %907 = vmatpush1.msra.mxu0 %v360
    %908 = vmatprep.subr.mxu0 0.0
    %909 = vmatpush1.msra.mxu0 0.0
    %910 = vmatprep.subr.mxu0 0.0
    %911 = vmatpush1.msra.mxu0 0.0
    %912 = vmatprep.subr.mxu0 0.0
    %913 = vmatpush1.msra.mxu0 0.0
    %914 = vmatprep.subr.mxu0 0.0
    %915 = vmatpush1.msra.mxu0 0.0
    %916 = vmatprep.subr.mxu0 0.0
    %917 = vmatpush1.msra.mxu0 0.0
    %918 = vmatprep.subr.mxu0 0.0
    %919 = vmatpush1.msra.mxu0 0.0
    %920 = vmatprep.subr.mxu0 0.0
    %921 = vmatpush1.msra.mxu0 0.0
    %922 = vmatprep.subr.mxu0 0.0
    %923 = vmatpush1.msra.mxu0 0.0
    %924 = vmatprep.subr.mxu0 0.0
    %925 = vmatpush1.msra.mxu0 0.0
    %926 = vmatprep.subr.mxu0 0.0
    %927 = vmatpush1.msra.mxu0 0.0
    %928 = vmatprep.subr.mxu0 0.0
    %929 = vmatpush1.msra.mxu0 0.0
    %930 = vmatprep.subr.mxu0 0.0
    %931 = vmatpush1.msra.mxu0 0.0
    %932 = vmatprep.subr.mxu0 0.0
    %933 = vmatpush1.msra.mxu0 0.0
    %934 = vmatprep.subr.mxu0 0.0
    %935 = vmatpush1.msra.mxu0 0.0
    %936 = vmatprep.subr.mxu0 0.0
    %937 = vmatpush1.msra.mxu0 0.0
    %938 = vmatprep.subr.mxu0 0.0
    %939 = vmatpush1.msra.mxu0 0.0
    %940 = vmatprep.mubr.f32.mxu0 0.0
    %941 = vmatmul.mubr.f32.gmra.mrb[0].mxu0 %v875
    %v942 = vpop.f32.mrb[0].mxu0
    %v943 = vadd.f32 %v369, %v942
    %v944 = vpop.f32.mrb[0].mxu0
    %v945 = vadd.f32 %v373, %v944
    %946 = vdwg.mxu0
    %947 = vmatprep.subr.mxu0 0.0
    %948 = vmatpush1.msra.mxu0 %v317
    %949 = vmatprep.subr.mxu0 0.0
    %950 = vmatpush1.msra.mxu0 %v320
    %951 = vmatprep.subr.mxu0 0.0
    %952 = vmatpush1.msra.mxu0 %v323
    %953 = vmatprep.subr.mxu0 0.0
    %954 = vmatpush1.msra.mxu0 %v326
    %955 = vmatprep.subr.mxu0 0.0
    %956 = vmatpush1.msra.mxu0 %v329
    %957 = vmatprep.subr.mxu0 0.0
    %958 = vmatpush1.msra.mxu0 %v332
    %959 = vmatprep.subr.mxu0 0.0
    %960 = vmatpush1.msra.mxu0 %v335
    %961 = vmatprep.subr.mxu0 0.0
    %962 = vmatpush1.msra.mxu0 %v338
    %963 = vmatprep.subr.mxu0 0.0
    %964 = vmatpush1.msra.mxu0 %v341
    %965 = vmatprep.subr.mxu0 0.0
    %966 = vmatpush1.msra.mxu0 %v344
    %967 = vmatprep.subr.mxu0 0.0
    %968 = vmatpush1.msra.mxu0 %v347
    %969 = vmatprep.subr.mxu0 0.0
    %970 = vmatpush1.msra.mxu0 %v350
    %971 = vmatprep.subr.mxu0 0.0
    %972 = vmatpush1.msra.mxu0 %v353
    %973 = vmatprep.subr.mxu0 0.0
    %974 = vmatpush1.msra.mxu0 %v356
    %975 = vmatprep.subr.mxu0 0.0
    %976 = vmatpush1.msra.mxu0 %v359
    %977 = vmatprep.subr.mxu0 0.0
    %978 = vmatpush1.msra.mxu0 %v362
    %979 = vmatprep.subr.mxu0 0.0
    %980 = vmatpush1.msra.mxu0 0.0
    %981 = vmatprep.subr.mxu0 0.0
    %982 = vmatpush1.msra.mxu0 0.0
    %983 = vmatprep.subr.mxu0 0.0
    %984 = vmatpush1.msra.mxu0 0.0
    %985 = vmatprep.subr.mxu0 0.0
    %986 = vmatpush1.msra.mxu0 0.0
    %987 = vmatprep.subr.mxu0 0.0
    %988 = vmatpush1.msra.mxu0 0.0
    %989 = vmatprep.subr.mxu0 0.0
    %990 = vmatpush1.msra.mxu0 0.0
    %991 = vmatprep.subr.mxu0 0.0
    %992 = vmatpush1.msra.mxu0 0.0
    %993 = vmatprep.subr.mxu0 0.0
    %994 = vmatpush1.msra.mxu0 0.0
    %995 = vmatprep.subr.mxu0 0.0
    %996 = vmatpush1.msra.mxu0 0.0
    %997 = vmatprep.subr.mxu0 0.0
    %998 = vmatpush1.msra.mxu0 0.0
    %999 = vmatprep.subr.mxu0 0.0
    %1000 = vmatpush1.msra.mxu0 0.0
    %1001 = vmatprep.subr.mxu0 0.0
    %1002 = vmatpush1.msra.mxu0 0.0
    %1003 = vmatprep.subr.mxu0 0.0
    %1004 = vmatpush1.msra.mxu0 0.0
    %1005 = vmatprep.subr.mxu0 0.0
    %1006 = vmatpush1.msra.mxu0 0.0
    %1007 = vmatprep.subr.mxu0 0.0
    %1008 = vmatpush1.msra.mxu0 0.0
    %1009 = vmatprep.subr.mxu0 0.0
    %1010 = vmatpush1.msra.mxu0 0.0
    %1011 = vmatprep.mubr.f32.mxu0 0.0
    %1012 = vmatmul.mubr.f32.gmra.mrb[0].mxu0 %v875
    %v1013 = vpop.f32.mrb[0].mxu0
    %v1014 = vadd.f32 %v377, %v1013
    %v1015 = vpop.f32.mrb[0].mxu0
    %1016 = vdwg.mxu0
    %v1017 = vadd.f32 %v241, %v943
    %v1018 = vsub.f32 0.0, %v1017
    %v1019 = vmul.f32 %v1018, 1.442695
    %v1020 = vpow.pop %v1019
    %v1021 = vadd.f32 %v1020, 1.0
    %v1022 = vrcp.pop %v1021
    %v1023 = vmul.f32 1.0, %v1022
    %v1024 = vadd.f32 %v243, %v945
    %v1025 = vsub.f32 0.0, %v1024
    %v1026 = vmul.f32 %v1025, 1.442695
    %v1027 = vpow.pop %v1026
    %v1028 = vadd.f32 %v1027, 1.0
    %v1029 = vrcp.pop %v1028
    %v1030 = vmul.f32 1.0, %v1029
    %v1031 = vmul.f32 %v1023, %v1014
    %v1032 = vadd.f32 %v312, %v1031
    %v1033 = vtanh.pop %v1032
    %v1034 = vsub.f32 1.0, %v1030
    %v1035 = vmul.f32 %v1034, %v1033
    %v1036 = vmul.f32 %v1030, %v875
    %v1037 = vadd.f32 %v1035, %v1036
    %v1038 = vsub.f32 %v1037, %v875
    %v1039 = vmul.f32 %v708, 2.0
    %v1040 = vadd.f32 %v543, %v1039
    %v1041 = vmul.f32 %v873, 2.0
    %v1042 = vadd.f32 %v1040, %v1041
    %v1043 = vadd.f32 %v1042, %v1038
    %v1044 = vmul.f32 %v1043, 0.004166667
    %v1045 = vadd.f32 %v364, %v1044
    %1046 = vmatprep.subr.mxu0 %v316
    %1047 = vmatpush1.msra.mxu0 %v315
    %1048 = vmatprep.subr.mxu0 %v319
    %1049 = vmatpush1.msra.mxu0 %v318
    %1050 = vmatprep.subr.mxu0 %v322
    %1051 = vmatpush1.msra.mxu0 %v321
    %1052 = vmatprep.subr.mxu0 %v325
    %1053 = vmatpush1.msra.mxu0 %v324
    %1054 = vmatprep.subr.mxu0 %v328
    %1055 = vmatpush1.msra.mxu0 %v327
    %1056 = vmatprep.subr.mxu0 %v331
    %1057 = vmatpush1.msra.mxu0 %v330
    %1058 = vmatprep.subr.mxu0 %v334
    %1059 = vmatpush1.msra.mxu0 %v333
    %1060 = vmatprep.subr.mxu0 %v337
    %1061 = vmatpush1.msra.mxu0 %v336
    %1062 = vmatprep.subr.mxu0 %v340
    %1063 = vmatpush1.msra.mxu0 %v339
    %1064 = vmatprep.subr.mxu0 %v343
    %1065 = vmatpush1.msra.mxu0 %v342
    %1066 = vmatprep.subr.mxu0 %v346
    %1067 = vmatpush1.msra.mxu0 %v345
    %1068 = vmatprep.subr.mxu0 %v349
    %1069 = vmatpush1.msra.mxu0 %v348
    %1070 = vmatprep.subr.mxu0 %v352
    %1071 = vmatpush1.msra.mxu0 %v351
    %1072 = vmatprep.subr.mxu0 %v355
    %1073 = vmatpush1.msra.mxu0 %v354
    %1074 = vmatprep.subr.mxu0 %v358
    %1075 = vmatpush1.msra.mxu0 %v357
    %1076 = vmatprep.subr.mxu0 %v361
    %1077 = vmatpush1.msra.mxu0 %v360
    %1078 = vmatprep.subr.mxu0 0.0
    %1079 = vmatpush1.msra.mxu0 0.0
    %1080 = vmatprep.subr.mxu0 0.0
    %1081 = vmatpush1.msra.mxu0 0.0
    %1082 = vmatprep.subr.mxu0 0.0
    %1083 = vmatpush1.msra.mxu0 0.0
    %1084 = vmatprep.subr.mxu0 0.0
    %1085 = vmatpush1.msra.mxu0 0.0
    %1086 = vmatprep.subr.mxu0 0.0
    %1087 = vmatpush1.msra.mxu0 0.0
    %1088 = vmatprep.subr.mxu0 0.0
    %1089 = vmatpush1.msra.mxu0 0.0
    %1090 = vmatprep.subr.mxu0 0.0
    %1091 = vmatpush1.msra.mxu0 0.0
    %1092 = vmatprep.subr.mxu0 0.0
    %1093 = vmatpush1.msra.mxu0 0.0
    %1094 = vmatprep.subr.mxu0 0.0
    %1095 = vmatpush1.msra.mxu0 0.0
    %1096 = vmatprep.subr.mxu0 0.0
    %1097 = vmatpush1.msra.mxu0 0.0
    %1098 = vmatprep.subr.mxu0 0.0
    %1099 = vmatpush1.msra.mxu0 0.0
    %1100 = vmatprep.subr.mxu0 0.0
    %1101 = vmatpush1.msra.mxu0 0.0
    %1102 = vmatprep.subr.mxu0 0.0
    %1103 = vmatpush1.msra.mxu0 0.0
    %1104 = vmatprep.subr.mxu0 0.0
    %1105 = vmatpush1.msra.mxu0 0.0
    %1106 = vmatprep.subr.mxu0 0.0
    %1107 = vmatpush1.msra.mxu0 0.0
    %1108 = vmatprep.subr.mxu0 0.0
    %1109 = vmatpush1.msra.mxu0 0.0
    %1110 = vmatprep.mubr.f32.mxu0 0.0
    %1111 = vmatmul.mubr.f32.gmra.mrb[0].mxu0 %v1045
    %v1112 = vpop.f32.mrb[0].mxu0
    %v1113 = vadd.f32 %v369, %v1112
    %v1114 = vpop.f32.mrb[0].mxu0
    %v1115 = vadd.f32 %v373, %v1114
    %1116 = vdwg.mxu0
    %1117 = vmatprep.subr.mxu0 0.0
    %1118 = vmatpush1.msra.mxu0 %v317
    %1119 = vmatprep.subr.mxu0 0.0
    %1120 = vmatpush1.msra.mxu0 %v320
    %1121 = vmatprep.subr.mxu0 0.0
    %1122 = vmatpush1.msra.mxu0 %v323
    %1123 = vmatprep.subr.mxu0 0.0
    %1124 = vmatpush1.msra.mxu0 %v326
    %1125 = vmatprep.subr.mxu0 0.0
    %1126 = vmatpush1.msra.mxu0 %v329
    %1127 = vmatprep.subr.mxu0 0.0
    %1128 = vmatpush1.msra.mxu0 %v332
    %1129 = vmatprep.subr.mxu0 0.0
    %1130 = vmatpush1.msra.mxu0 %v335
    %1131 = vmatprep.subr.mxu0 0.0
    %1132 = vmatpush1.msra.mxu0 %v338
    %1133 = vmatprep.subr.mxu0 0.0
    %1134 = vmatpush1.msra.mxu0 %v341
    %1135 = vmatprep.subr.mxu0 0.0
    %1136 = vmatpush1.msra.mxu0 %v344
    %1137 = vmatprep.subr.mxu0 0.0
    %1138 = vmatpush1.msra.mxu0 %v347
    %1139 = vmatprep.subr.mxu0 0.0
    %1140 = vmatpush1.msra.mxu0 %v350
    %1141 = vmatprep.subr.mxu0 0.0
    %1142 = vmatpush1.msra.mxu0 %v353
    %1143 = vmatprep.subr.mxu0 0.0
    %1144 = vmatpush1.msra.mxu0 %v356
    %1145 = vmatprep.subr.mxu0 0.0
    %1146 = vmatpush1.msra.mxu0 %v359
    %1147 = vmatprep.subr.mxu0 0.0
    %1148 = vmatpush1.msra.mxu0 %v362
    %1149 = vmatprep.subr.mxu0 0.0
    %1150 = vmatpush1.msra.mxu0 0.0
    %1151 = vmatprep.subr.mxu0 0.0
    %1152 = vmatpush1.msra.mxu0 0.0
    %1153 = vmatprep.subr.mxu0 0.0
    %1154 = vmatpush1.msra.mxu0 0.0
    %1155 = vmatprep.subr.mxu0 0.0
    %1156 = vmatpush1.msra.mxu0 0.0
    %1157 = vmatprep.subr.mxu0 0.0
    %1158 = vmatpush1.msra.mxu0 0.0
    %1159 = vmatprep.subr.mxu0 0.0
    %1160 = vmatpush1.msra.mxu0 0.0
    %1161 = vmatprep.subr.mxu0 0.0
    %1162 = vmatpush1.msra.mxu0 0.0
    %1163 = vmatprep.subr.mxu0 0.0
    %1164 = vmatpush1.msra.mxu0 0.0
    %1165 = vmatprep.subr.mxu0 0.0
    %1166 = vmatpush1.msra.mxu0 0.0
    %1167 = vmatprep.subr.mxu0 0.0
    %1168 = vmatpush1.msra.mxu0 0.0
    %1169 = vmatprep.subr.mxu0 0.0
    %1170 = vmatpush1.msra.mxu0 0.0
    %1171 = vmatprep.subr.mxu0 0.0
    %1172 = vmatpush1.msra.mxu0 0.0
    %1173 = vmatprep.subr.mxu0 0.0
    %1174 = vmatpush1.msra.mxu0 0.0
    %1175 = vmatprep.subr.mxu0 0.0
    %1176 = vmatpush1.msra.mxu0 0.0
    %1177 = vmatprep.subr.mxu0 0.0
    %1178 = vmatpush1.msra.mxu0 0.0
    %1179 = vmatprep.subr.mxu0 0.0
    %1180 = vmatpush1.msra.mxu0 0.0
    %1181 = vmatprep.mubr.f32.mxu0 0.0
    %1182 = vmatmul.mubr.f32.gmra.mrb[0].mxu0 %v1045
    %v1183 = vpop.f32.mrb[0].mxu0
    %v1184 = vadd.f32 %v377, %v1183
    %v1185 = vpop.f32.mrb[0].mxu0
    %1186 = vdwg.mxu0
    %v1187 = vadd.f32 %v241, %v1113
    %v1188 = vsub.f32 0.0, %v1187
    %v1189 = vmul.f32 %v1188, 1.442695
    %v1190 = vpow.pop %v1189
    %v1191 = vadd.f32 %v1190, 1.0
    %v1192 = vrcp.pop %v1191
    %v1193 = vmul.f32 1.0, %v1192
    %v1194 = vadd.f32 %v243, %v1115
    %v1195 = vsub.f32 0.0, %v1194
    %v1196 = vmul.f32 %v1195, 1.442695
    %v1197 = vpow.pop %v1196
    %v1198 = vadd.f32 %v1197, 1.0
    %v1199 = vrcp.pop %v1198
    %v1200 = vmul.f32 1.0, %v1199
    %v1201 = vmul.f32 %v1193, %v1184
    %v1202 = vadd.f32 %v312, %v1201
    %v1203 = vtanh.pop %v1202
    %v1204 = vsub.f32 1.0, %v1200
    %v1205 = vmul.f32 %v1204, %v1203
    %v1206 = vmul.f32 %v1200, %v1045
    %v1207 = vadd.f32 %v1205, %v1206
    %v1208 = vsub.f32 %v1207, %v1045
    %v1209 = vmul.f32 %v1208, 0.0125
    %v1210 = vadd.f32 %v1045, %v1209
    %1211 = vmatprep.subr.mxu0 %v316
    %1212 = vmatpush1.msra.mxu0 %v315
    %1213 = vmatprep.subr.mxu0 %v319
    %1214 = vmatpush1.msra.mxu0 %v318
    %1215 = vmatprep.subr.mxu0 %v322
    %1216 = vmatpush1.msra.mxu0 %v321
    %1217 = vmatprep.subr.mxu0 %v325
    %1218 = vmatpush1.msra.mxu0 %v324
    %1219 = vmatprep.subr.mxu0 %v328
    %1220 = vmatpush1.msra.mxu0 %v327
    %1221 = vmatprep.subr.mxu0 %v331
    %1222 = vmatpush1.msra.mxu0 %v330
    %1223 = vmatprep.subr.mxu0 %v334
    %1224 = vmatpush1.msra.mxu0 %v333
    %1225 = vmatprep.subr.mxu0 %v337
    %1226 = vmatpush1.msra.mxu0 %v336
    %1227 = vmatprep.subr.mxu0 %v340
    %1228 = vmatpush1.msra.mxu0 %v339
    %1229 = vmatprep.subr.mxu0 %v343
    %1230 = vmatpush1.msra.mxu0 %v342
    %1231 = vmatprep.subr.mxu0 %v346
    %1232 = vmatpush1.msra.mxu0 %v345
    %1233 = vmatprep.subr.mxu0 %v349
    %1234 = vmatpush1.msra.mxu0 %v348
    %1235 = vmatprep.subr.mxu0 %v352
    %1236 = vmatpush1.msra.mxu0 %v351
    %1237 = vmatprep.subr.mxu0 %v355
    %1238 = vmatpush1.msra.mxu0 %v354
    %1239 = vmatprep.subr.mxu0 %v358
    %1240 = vmatpush1.msra.mxu0 %v357
    %1241 = vmatprep.subr.mxu0 %v361
    %1242 = vmatpush1.msra.mxu0 %v360
    %1243 = vmatprep.subr.mxu0 0.0
    %1244 = vmatpush1.msra.mxu0 0.0
    %1245 = vmatprep.subr.mxu0 0.0
    %1246 = vmatpush1.msra.mxu0 0.0
    %1247 = vmatprep.subr.mxu0 0.0
    %1248 = vmatpush1.msra.mxu0 0.0
    %1249 = vmatprep.subr.mxu0 0.0
    %1250 = vmatpush1.msra.mxu0 0.0
    %1251 = vmatprep.subr.mxu0 0.0
    %1252 = vmatpush1.msra.mxu0 0.0
    %1253 = vmatprep.subr.mxu0 0.0
    %1254 = vmatpush1.msra.mxu0 0.0
    %1255 = vmatprep.subr.mxu0 0.0
    %1256 = vmatpush1.msra.mxu0 0.0
    %1257 = vmatprep.subr.mxu0 0.0
    %1258 = vmatpush1.msra.mxu0 0.0
    %1259 = vmatprep.subr.mxu0 0.0
    %1260 = vmatpush1.msra.mxu0 0.0
    %1261 = vmatprep.subr.mxu0 0.0
    %1262 = vmatpush1.msra.mxu0 0.0
    %1263 = vmatprep.subr.mxu0 0.0
    %1264 = vmatpush1.msra.mxu0 0.0
    %1265 = vmatprep.subr.mxu0 0.0
    %1266 = vmatpush1.msra.mxu0 0.0
    %1267 = vmatprep.subr.mxu0 0.0
    %1268 = vmatpush1.msra.mxu0 0.0
    %1269 = vmatprep.subr.mxu0 0.0
    %1270 = vmatpush1.msra.mxu0 0.0
    %1271 = vmatprep.subr.mxu0 0.0
    %1272 = vmatpush1.msra.mxu0 0.0
    %1273 = vmatprep.subr.mxu0 0.0
    %1274 = vmatpush1.msra.mxu0 0.0
    %1275 = vmatprep.mubr.f32.mxu0 0.0
    %1276 = vmatmul.mubr.f32.gmra.mrb[0].mxu0 %v1210
    %v1277 = vpop.f32.mrb[0].mxu0
    %v1278 = vadd.f32 %v369, %v1277
    %v1279 = vpop.f32.mrb[0].mxu0
    %v1280 = vadd.f32 %v373, %v1279
    %1281 = vdwg.mxu0
    %1282 = vmatprep.subr.mxu0 0.0
    %1283 = vmatpush1.msra.mxu0 %v317
    %1284 = vmatprep.subr.mxu0 0.0
    %1285 = vmatpush1.msra.mxu0 %v320
    %1286 = vmatprep.subr.mxu0 0.0
    %1287 = vmatpush1.msra.mxu0 %v323
    %1288 = vmatprep.subr.mxu0 0.0
    %1289 = vmatpush1.msra.mxu0 %v326
    %1290 = vmatprep.subr.mxu0 0.0
    %1291 = vmatpush1.msra.mxu0 %v329
    %1292 = vmatprep.subr.mxu0 0.0
    %1293 = vmatpush1.msra.mxu0 %v332
    %1294 = vmatprep.subr.mxu0 0.0
    %1295 = vmatpush1.msra.mxu0 %v335
    %1296 = vmatprep.subr.mxu0 0.0
    %1297 = vmatpush1.msra.mxu0 %v338
    %1298 = vmatprep.subr.mxu0 0.0
    %1299 = vmatpush1.msra.mxu0 %v341
    %1300 = vmatprep.subr.mxu0 0.0
    %1301 = vmatpush1.msra.mxu0 %v344
    %1302 = vmatprep.subr.mxu0 0.0
    %1303 = vmatpush1.msra.mxu0 %v347
    %1304 = vmatprep.subr.mxu0 0.0
    %1305 = vmatpush1.msra.mxu0 %v350
    %1306 = vmatprep.subr.mxu0 0.0
    %1307 = vmatpush1.msra.mxu0 %v353
    %1308 = vmatprep.subr.mxu0 0.0
    %1309 = vmatpush1.msra.mxu0 %v356
    %1310 = vmatprep.subr.mxu0 0.0
    %1311 = vmatpush1.msra.mxu0 %v359
    %1312 = vmatprep.subr.mxu0 0.0
    %1313 = vmatpush1.msra.mxu0 %v362
    %1314 = vmatprep.subr.mxu0 0.0
    %1315 = vmatpush1.msra.mxu0 0.0
    %1316 = vmatprep.subr.mxu0 0.0
    %1317 = vmatpush1.msra.mxu0 0.0
    %1318 = vmatprep.subr.mxu0 0.0
    %1319 = vmatpush1.msra.mxu0 0.0
    %1320 = vmatprep.subr.mxu0 0.0
    %1321 = vmatpush1.msra.mxu0 0.0
    %1322 = vmatprep.subr.mxu0 0.0
    %1323 = vmatpush1.msra.mxu0 0.0
    %1324 = vmatprep.subr.mxu0 0.0
    %1325 = vmatpush1.msra.mxu0 0.0
    %1326 = vmatprep.subr.mxu0 0.0
    %1327 = vmatpush1.msra.mxu0 0.0
    %1328 = vmatprep.subr.mxu0 0.0
    %1329 = vmatpush1.msra.mxu0 0.0
    %1330 = vmatprep.subr.mxu0 0.0
    %1331 = vmatpush1.msra.mxu0 0.0
    %1332 = vmatprep.subr.mxu0 0.0
    %1333 = vmatpush1.msra.mxu0 0.0
    %1334 = vmatprep.subr.mxu0 0.0
    %1335 = vmatpush1.msra.mxu0 0.0
    %1336 = vmatprep.subr.mxu0 0.0
    %1337 = vmatpush1.msra.mxu0 0.0
    %1338 = vmatprep.subr.mxu0 0.0
    %1339 = vmatpush1.msra.mxu0 0.0
    %1340 = vmatprep.subr.mxu0 0.0
    %1341 = vmatpush1.msra.mxu0 0.0
    %1342 = vmatprep.subr.mxu0 0.0
    %1343 = vmatpush1.msra.mxu0 0.0
    %1344 = vmatprep.subr.mxu0 0.0
    %1345 = vmatpush1.msra.mxu0 0.0
    %1346 = vmatprep.mubr.f32.mxu0 0.0
    %1347 = vmatmul.mubr.f32.gmra.mrb[0].mxu0 %v1210
    %v1348 = vpop.f32.mrb[0].mxu0
    %v1349 = vadd.f32 %v377, %v1348
    %v1350 = vpop.f32.mrb[0].mxu0
    %1351 = vdwg.mxu0
    %v1352 = vadd.f32 %v241, %v1278
    %v1353 = vsub.f32 0.0, %v1352
    %v1354 = vmul.f32 %v1353, 1.442695
    %v1355 = vpow.pop %v1354
    %v1356 = vadd.f32 %v1355, 1.0
    %v1357 = vrcp.pop %v1356
    %v1358 = vmul.f32 1.0, %v1357
    %v1359 = vadd.f32 %v243, %v1280
    %v1360 = vsub.f32 0.0, %v1359
    %v1361 = vmul.f32 %v1360, 1.442695
    %v1362 = vpow.pop %v1361
    %v1363 = vadd.f32 %v1362, 1.0
    %v1364 = vrcp.pop %v1363
    %v1365 = vmul.f32 1.0, %v1364
    %v1366 = vmul.f32 %v1358, %v1349
    %v1367 = vadd.f32 %v312, %v1366
    %v1368 = vtanh.pop %v1367
    %v1369 = vsub.f32 1.0, %v1365
    %v1370 = vmul.f32 %v1369, %v1368
    %v1371 = vmul.f32 %v1365, %v1210
    %v1372 = vadd.f32 %v1370, %v1371
    %v1373 = vsub.f32 %v1372, %v1210
    %v1374 = vmul.f32 %v1373, 0.0125
    %v1375 = vadd.f32 %v1045, %v1374
    %1376 = vmatprep.subr.mxu0 %v316
    %1377 = vmatpush1.msra.mxu0 %v315
    %1378 = vmatprep.subr.mxu0 %v319
    %1379 = vmatpush1.msra.mxu0 %v318
    %1380 = vmatprep.subr.mxu0 %v322
    %1381 = vmatpush1.msra.mxu0 %v321
    %1382 = vmatprep.subr.mxu0 %v325
    %1383 = vmatpush1.msra.mxu0 %v324
    %1384 = vmatprep.subr.mxu0 %v328
    %1385 = vmatpush1.msra.mxu0 %v327
    %1386 = vmatprep.subr.mxu0 %v331
    %1387 = vmatpush1.msra.mxu0 %v330
    %1388 = vmatprep.subr.mxu0 %v334
    %1389 = vmatpush1.msra.mxu0 %v333
    %1390 = vmatprep.subr.mxu0 %v337
    %1391 = vmatpush1.msra.mxu0 %v336
    %1392 = vmatprep.subr.mxu0 %v340
    %1393 = vmatpush1.msra.mxu0 %v339
    %1394 = vmatprep.subr.mxu0 %v343
    %1395 = vmatpush1.msra.mxu0 %v342
    %1396 = vmatprep.subr.mxu0 %v346
    %1397 = vmatpush1.msra.mxu0 %v345
    %1398 = vmatprep.subr.mxu0 %v349
    %1399 = vmatpush1.msra.mxu0 %v348
    %1400 = vmatprep.subr.mxu0 %v352
    %1401 = vmatpush1.msra.mxu0 %v351
    %1402 = vmatprep.subr.mxu0 %v355
    %1403 = vmatpush1.msra.mxu0 %v354
    %1404 = vmatprep.subr.mxu0 %v358
    %1405 = vmatpush1.msra.mxu0 %v357
    %1406 = vmatprep.subr.mxu0 %v361
    %1407 = vmatpush1.msra.mxu0 %v360
    %1408 = vmatprep.subr.mxu0 0.0
    %1409 = vmatpush1.msra.mxu0 0.0
    %1410 = vmatprep.subr.mxu0 0.0
    %1411 = vmatpush1.msra.mxu0 0.0
    %1412 = vmatprep.subr.mxu0 0.0
    %1413 = vmatpush1.msra.mxu0 0.0
    %1414 = vmatprep.subr.mxu0 0.0
    %1415 = vmatpush1.msra.mxu0 0.0
    %1416 = vmatprep.subr.mxu0 0.0
    %1417 = vmatpush1.msra.mxu0 0.0
    %1418 = vmatprep.subr.mxu0 0.0
    %1419 = vmatpush1.msra.mxu0 0.0
    %1420 = vmatprep.subr.mxu0 0.0
    %1421 = vmatpush1.msra.mxu0 0.0
    %1422 = vmatprep.subr.mxu0 0.0
    %1423 = vmatpush1.msra.mxu0 0.0
    %1424 = vmatprep.subr.mxu0 0.0
    %1425 = vmatpush1.msra.mxu0 0.0
    %1426 = vmatprep.subr.mxu0 0.0
    %1427 = vmatpush1.msra.mxu0 0.0
    %1428 = vmatprep.subr.mxu0 0.0
    %1429 = vmatpush1.msra.mxu0 0.0
    %1430 = vmatprep.subr.mxu0 0.0
    %1431 = vmatpush1.msra.mxu0 0.0
    %1432 = vmatprep.subr.mxu0 0.0
    %1433 = vmatpush1.msra.mxu0 0.0
    %1434 = vmatprep.subr.mxu0 0.0
    %1435 = vmatpush1.msra.mxu0 0.0
    %1436 = vmatprep.subr.mxu0 0.0
    %1437 = vmatpush1.msra.mxu0 0.0
    %1438 = vmatprep.subr.mxu0 0.0
    %1439 = vmatpush1.msra.mxu0 0.0
    %1440 = vmatprep.mubr.f32.mxu0 0.0
    %1441 = vmatmul.mubr.f32.gmra.mrb[0].mxu0 %v1375
    %v1442 = vpop.f32.mrb[0].mxu0
    %v1443 = vadd.f32 %v369, %v1442
    %v1444 = vpop.f32.mrb[0].mxu0
    %v1445 = vadd.f32 %v373, %v1444
    %1446 = vdwg.mxu0
    %1447 = vmatprep.subr.mxu0 0.0
    %1448 = vmatpush1.msra.mxu0 %v317
    %1449 = vmatprep.subr.mxu0 0.0
    %1450 = vmatpush1.msra.mxu0 %v320
    %1451 = vmatprep.subr.mxu0 0.0
    %1452 = vmatpush1.msra.mxu0 %v323
    %1453 = vmatprep.subr.mxu0 0.0
    %1454 = vmatpush1.msra.mxu0 %v326
    %1455 = vmatprep.subr.mxu0 0.0
    %1456 = vmatpush1.msra.mxu0 %v329
    %1457 = vmatprep.subr.mxu0 0.0
    %1458 = vmatpush1.msra.mxu0 %v332
    %1459 = vmatprep.subr.mxu0 0.0
    %1460 = vmatpush1.msra.mxu0 %v335
    %1461 = vmatprep.subr.mxu0 0.0
    %1462 = vmatpush1.msra.mxu0 %v338
    %1463 = vmatprep.subr.mxu0 0.0
    %1464 = vmatpush1.msra.mxu0 %v341
    %1465 = vmatprep.subr.mxu0 0.0
    %1466 = vmatpush1.msra.mxu0 %v344
    %1467 = vmatprep.subr.mxu0 0.0
    %1468 = vmatpush1.msra.mxu0 %v347
    %1469 = vmatprep.subr.mxu0 0.0
    %1470 = vmatpush1.msra.mxu0 %v350
    %1471 = vmatprep.subr.mxu0 0.0
    %1472 = vmatpush1.msra.mxu0 %v353
    %1473 = vmatprep.subr.mxu0 0.0
    %1474 = vmatpush1.msra.mxu0 %v356
    %1475 = vmatprep.subr.mxu0 0.0
    %1476 = vmatpush1.msra.mxu0 %v359
    %1477 = vmatprep.subr.mxu0 0.0
    %1478 = vmatpush1.msra.mxu0 %v362
    %1479 = vmatprep.subr.mxu0 0.0
    %1480 = vmatpush1.msra.mxu0 0.0
    %1481 = vmatprep.subr.mxu0 0.0
    %1482 = vmatpush1.msra.mxu0 0.0
    %1483 = vmatprep.subr.mxu0 0.0
    %1484 = vmatpush1.msra.mxu0 0.0
    %1485 = vmatprep.subr.mxu0 0.0
    %1486 = vmatpush1.msra.mxu0 0.0
    %1487 = vmatprep.subr.mxu0 0.0
    %1488 = vmatpush1.msra.mxu0 0.0
    %1489 = vmatprep.subr.mxu0 0.0
    %1490 = vmatpush1.msra.mxu0 0.0
    %1491 = vmatprep.subr.mxu0 0.0
    %1492 = vmatpush1.msra.mxu0 0.0
    %1493 = vmatprep.subr.mxu0 0.0
    %1494 = vmatpush1.msra.mxu0 0.0
    %1495 = vmatprep.subr.mxu0 0.0
    %1496 = vmatpush1.msra.mxu0 0.0
    %1497 = vmatprep.subr.mxu0 0.0
    %1498 = vmatpush1.msra.mxu0 0.0
    %1499 = vmatprep.subr.mxu0 0.0
    %1500 = vmatpush1.msra.mxu0 0.0
    %1501 = vmatprep.subr.mxu0 0.0
    %1502 = vmatpush1.msra.mxu0 0.0
    %1503 = vmatprep.subr.mxu0 0.0
    %1504 = vmatpush1.msra.mxu0 0.0
    %1505 = vmatprep.subr.mxu0 0.0
    %1506 = vmatpush1.msra.mxu0 0.0
    %1507 = vmatprep.subr.mxu0 0.0
    %1508 = vmatpush1.msra.mxu0 0.0
    %1509 = vmatprep.subr.mxu0 0.0
    %1510 = vmatpush1.msra.mxu0 0.0
    %1511 = vmatprep.mubr.f32.mxu0 0.0
    %1512 = vmatmul.mubr.f32.gmra.mrb[0].mxu0 %v1375
    %v1513 = vpop.f32.mrb[0].mxu0
    %v1514 = vadd.f32 %v377, %v1513
    %v1515 = vpop.f32.mrb[0].mxu0
    %1516 = vdwg.mxu0
    %v1517 = vadd.f32 %v241, %v1443
    %v1518 = vsub.f32 0.0, %v1517
    %v1519 = vmul.f32 %v1518, 1.442695
    %v1520 = vpow.pop %v1519
    %v1521 = vadd.f32 %v1520, 1.0
    %v1522 = vrcp.pop %v1521
    %v1523 = vmul.f32 1.0, %v1522
    %v1524 = vadd.f32 %v243, %v1445
    %v1525 = vsub.f32 0.0, %v1524
    %v1526 = vmul.f32 %v1525, 1.442695
    %v1527 = vpow.pop %v1526
    %v1528 = vadd.f32 %v1527, 1.0
    %v1529 = vrcp.pop %v1528
    %v1530 = vmul.f32 1.0, %v1529
    %v1531 = vmul.f32 %v1523, %v1514
    %v1532 = vadd.f32 %v312, %v1531
    %v1533 = vtanh.pop %v1532
    %v1534 = vsub.f32 1.0, %v1530
    %v1535 = vmul.f32 %v1534, %v1533
    %v1536 = vmul.f32 %v1530, %v1375
    %v1537 = vadd.f32 %v1535, %v1536
    %v1538 = vsub.f32 %v1537, %v1375
    %v1539 = vmul.f32 %v1538, 0.025
    %v1540 = vadd.f32 %v1045, %v1539
    %1541 = vmatprep.subr.mxu0 %v316
    %1542 = vmatpush1.msra.mxu0 %v315
    %1543 = vmatprep.subr.mxu0 %v319
    %1544 = vmatpush1.msra.mxu0 %v318
    %1545 = vmatprep.subr.mxu0 %v322
    %1546 = vmatpush1.msra.mxu0 %v321
    %1547 = vmatprep.subr.mxu0 %v325
    %1548 = vmatpush1.msra.mxu0 %v324
    %1549 = vmatprep.subr.mxu0 %v328
    %1550 = vmatpush1.msra.mxu0 %v327
    %1551 = vmatprep.subr.mxu0 %v331
    %1552 = vmatpush1.msra.mxu0 %v330
    %1553 = vmatprep.subr.mxu0 %v334
    %1554 = vmatpush1.msra.mxu0 %v333
    %1555 = vmatprep.subr.mxu0 %v337
    %1556 = vmatpush1.msra.mxu0 %v336
    %1557 = vmatprep.subr.mxu0 %v340
    %1558 = vmatpush1.msra.mxu0 %v339
    %1559 = vmatprep.subr.mxu0 %v343
    %1560 = vmatpush1.msra.mxu0 %v342
    %1561 = vmatprep.subr.mxu0 %v346
    %1562 = vmatpush1.msra.mxu0 %v345
    %1563 = vmatprep.subr.mxu0 %v349
    %1564 = vmatpush1.msra.mxu0 %v348
    %1565 = vmatprep.subr.mxu0 %v352
    %1566 = vmatpush1.msra.mxu0 %v351
    %1567 = vmatprep.subr.mxu0 %v355
    %1568 = vmatpush1.msra.mxu0 %v354
    %1569 = vmatprep.subr.mxu0 %v358
    %1570 = vmatpush1.msra.mxu0 %v357
    %1571 = vmatprep.subr.mxu0 %v361
    %1572 = vmatpush1.msra.mxu0 %v360
    %1573 = vmatprep.subr.mxu0 0.0
    %1574 = vmatpush1.msra.mxu0 0.0
    %1575 = vmatprep.subr.mxu0 0.0
    %1576 = vmatpush1.msra.mxu0 0.0
    %1577 = vmatprep.subr.mxu0 0.0
    %1578 = vmatpush1.msra.mxu0 0.0
    %1579 = vmatprep.subr.mxu0 0.0
    %1580 = vmatpush1.msra.mxu0 0.0
    %1581 = vmatprep.subr.mxu0 0.0
    %1582 = vmatpush1.msra.mxu0 0.0
    %1583 = vmatprep.subr.mxu0 0.0
    %1584 = vmatpush1.msra.mxu0 0.0
    %1585 = vmatprep.subr.mxu0 0.0
    %1586 = vmatpush1.msra.mxu0 0.0
    %1587 = vmatprep.subr.mxu0 0.0
    %1588 = vmatpush1.msra.mxu0 0.0
    %1589 = vmatprep.subr.mxu0 0.0
    %1590 = vmatpush1.msra.mxu0 0.0
    %1591 = vmatprep.subr.mxu0 0.0
    %1592 = vmatpush1.msra.mxu0 0.0
    %1593 = vmatprep.subr.mxu0 0.0
    %1594 = vmatpush1.msra.mxu0 0.0
    %1595 = vmatprep.subr.mxu0 0.0
    %1596 = vmatpush1.msra.mxu0 0.0
    %1597 = vmatprep.subr.mxu0 0.0
    %1598 = vmatpush1.msra.mxu0 0.0
    %1599 = vmatprep.subr.mxu0 0.0
    %1600 = vmatpush1.msra.mxu0 0.0
    %1601 = vmatprep.subr.mxu0 0.0
    %1602 = vmatpush1.msra.mxu0 0.0
    %1603 = vmatprep.subr.mxu0 0.0
    %1604 = vmatpush1.msra.mxu0 0.0
    %1605 = vmatprep.mubr.f32.mxu0 0.0
    %1606 = vmatmul.mubr.f32.gmra.mrb[0].mxu0 %v1540
    %v1607 = vpop.f32.mrb[0].mxu0
    %v1608 = vadd.f32 %v369, %v1607
    %v1609 = vpop.f32.mrb[0].mxu0
    %v1610 = vadd.f32 %v373, %v1609
    %1611 = vdwg.mxu0
    %1612 = vmatprep.subr.mxu0 0.0
    %1613 = vmatpush1.msra.mxu0 %v317
    %1614 = vmatprep.subr.mxu0 0.0
    %1615 = vmatpush1.msra.mxu0 %v320
    %1616 = vmatprep.subr.mxu0 0.0
    %1617 = vmatpush1.msra.mxu0 %v323
    %1618 = vmatprep.subr.mxu0 0.0
    %1619 = vmatpush1.msra.mxu0 %v326
    %1620 = vmatprep.subr.mxu0 0.0
    %1621 = vmatpush1.msra.mxu0 %v329
    %1622 = vmatprep.subr.mxu0 0.0
    %1623 = vmatpush1.msra.mxu0 %v332
    %1624 = vmatprep.subr.mxu0 0.0
    %1625 = vmatpush1.msra.mxu0 %v335
    %1626 = vmatprep.subr.mxu0 0.0
    %1627 = vmatpush1.msra.mxu0 %v338
    %1628 = vmatprep.subr.mxu0 0.0
    %1629 = vmatpush1.msra.mxu0 %v341
    %1630 = vmatprep.subr.mxu0 0.0
    %1631 = vmatpush1.msra.mxu0 %v344
    %1632 = vmatprep.subr.mxu0 0.0
    %1633 = vmatpush1.msra.mxu0 %v347
    %1634 = vmatprep.subr.mxu0 0.0
    %1635 = vmatpush1.msra.mxu0 %v350
    %1636 = vmatprep.subr.mxu0 0.0
    %1637 = vmatpush1.msra.mxu0 %v353
    %1638 = vmatprep.subr.mxu0 0.0
    %1639 = vmatpush1.msra.mxu0 %v356
    %1640 = vmatprep.subr.mxu0 0.0
    %1641 = vmatpush1.msra.mxu0 %v359
    %1642 = vmatprep.subr.mxu0 0.0
    %1643 = vmatpush1.msra.mxu0 %v362
    %1644 = vmatprep.subr.mxu0 0.0
    %1645 = vmatpush1.msra.mxu0 0.0
    %1646 = vmatprep.subr.mxu0 0.0
    %1647 = vmatpush1.msra.mxu0 0.0
    %1648 = vmatprep.subr.mxu0 0.0
    %1649 = vmatpush1.msra.mxu0 0.0
    %1650 = vmatprep.subr.mxu0 0.0
    %1651 = vmatpush1.msra.mxu0 0.0
    %1652 = vmatprep.subr.mxu0 0.0
    %1653 = vmatpush1.msra.mxu0 0.0
    %1654 = vmatprep.subr.mxu0 0.0
    %1655 = vmatpush1.msra.mxu0 0.0
    %1656 = vmatprep.subr.mxu0 0.0
    %1657 = vmatpush1.msra.mxu0 0.0
    %1658 = vmatprep.subr.mxu0 0.0
    %1659 = vmatpush1.msra.mxu0 0.0
    %1660 = vmatprep.subr.mxu0 0.0
    %1661 = vmatpush1.msra.mxu0 0.0
    %1662 = vmatprep.subr.mxu0 0.0
    %1663 = vmatpush1.msra.mxu0 0.0
    %1664 = vmatprep.subr.mxu0 0.0
    %1665 = vmatpush1.msra.mxu0 0.0
    %1666 = vmatprep.subr.mxu0 0.0
    %1667 = vmatpush1.msra.mxu0 0.0
    %1668 = vmatprep.subr.mxu0 0.0
    %1669 = vmatpush1.msra.mxu0 0.0
    %1670 = vmatprep.subr.mxu0 0.0
    %1671 = vmatpush1.msra.mxu0 0.0
    %1672 = vmatprep.subr.mxu0 0.0
    %1673 = vmatpush1.msra.mxu0 0.0
    %1674 = vmatprep.subr.mxu0 0.0
    %1675 = vmatpush1.msra.mxu0 0.0
    %1676 = vmatprep.mubr.f32.mxu0 0.0
    %1677 = vmatmul.mubr.f32.gmra.mrb[0].mxu0 %v1540
    %v1678 = vpop.f32.mrb[0].mxu0
    %v1679 = vadd.f32 %v377, %v1678
    %v1680 = vpop.f32.mrb[0].mxu0
    %1681 = vdwg.mxu0
    %v1682 = vadd.f32 %v241, %v1608
    %v1683 = vsub.f32 0.0, %v1682
    %v1684 = vmul.f32 %v1683, 1.442695
    %v1685 = vpow.pop %v1684
    %v1686 = vadd.f32 %v1685, 1.0
    %v1687 = vrcp.pop %v1686
    %v1688 = vmul.f32 1.0, %v1687
    %v1689 = vadd.f32 %v243, %v1610
    %v1690 = vsub.f32 0.0, %v1689
    %v1691 = vmul.f32 %v1690, 1.442695
    %v1692 = vpow.pop %v1691
    %v1693 = vadd.f32 %v1692, 1.0
    %v1694 = vrcp.pop %v1693
    %v1695 = vmul.f32 1.0, %v1694
    %v1696 = vmul.f32 %v1688, %v1679
    %v1697 = vadd.f32 %v312, %v1696
    %v1698 = vtanh.pop %v1697
    %v1699 = vsub.f32 1.0, %v1695
    %v1700 = vmul.f32 %v1699, %v1698
    %v1701 = vmul.f32 %v1695, %v1540
    %v1702 = vadd.f32 %v1700, %v1701
    %v1703 = vsub.f32 %v1702, %v1540
    %v1704 = vmul.f32 %v1373, 2.0
    %v1705 = vadd.f32 %v1208, %v1704
    %v1706 = vmul.f32 %v1538, 2.0
    %v1707 = vadd.f32 %v1705, %v1706
    %v1708 = vadd.f32 %v1707, %v1703
    %v1709 = vmul.f32 %v1708, 0.004166667
    %v1710 = vadd.f32 %v1045, %v1709
    %1711 = vmatprep.subr.mxu0 %v316
    %1712 = vmatpush1.msra.mxu0 %v315
    %1713 = vmatprep.subr.mxu0 %v319
    %1714 = vmatpush1.msra.mxu0 %v318
    %1715 = vmatprep.subr.mxu0 %v322
    %1716 = vmatpush1.msra.mxu0 %v321
    %1717 = vmatprep.subr.mxu0 %v325
    %1718 = vmatpush1.msra.mxu0 %v324
    %1719 = vmatprep.subr.mxu0 %v328
    %1720 = vmatpush1.msra.mxu0 %v327
    %1721 = vmatprep.subr.mxu0 %v331
    %1722 = vmatpush1.msra.mxu0 %v330
    %1723 = vmatprep.subr.mxu0 %v334
    %1724 = vmatpush1.msra.mxu0 %v333
    %1725 = vmatprep.subr.mxu0 %v337
    %1726 = vmatpush1.msra.mxu0 %v336
    %1727 = vmatprep.subr.mxu0 %v340
    %1728 = vmatpush1.msra.mxu0 %v339
    %1729 = vmatprep.subr.mxu0 %v343
    %1730 = vmatpush1.msra.mxu0 %v342
    %1731 = vmatprep.subr.mxu0 %v346
    %1732 = vmatpush1.msra.mxu0 %v345
    %1733 = vmatprep.subr.mxu0 %v349
    %1734 = vmatpush1.msra.mxu0 %v348
    %1735 = vmatprep.subr.mxu0 %v352
    %1736 = vmatpush1.msra.mxu0 %v351
    %1737 = vmatprep.subr.mxu0 %v355
    %1738 = vmatpush1.msra.mxu0 %v354
    %1739 = vmatprep.subr.mxu0 %v358
    %1740 = vmatpush1.msra.mxu0 %v357
    %1741 = vmatprep.subr.mxu0 %v361
    %1742 = vmatpush1.msra.mxu0 %v360
    %1743 = vmatprep.subr.mxu0 0.0
    %1744 = vmatpush1.msra.mxu0 0.0
    %1745 = vmatprep.subr.mxu0 0.0
    %1746 = vmatpush1.msra.mxu0 0.0
    %1747 = vmatprep.subr.mxu0 0.0
    %1748 = vmatpush1.msra.mxu0 0.0
    %1749 = vmatprep.subr.mxu0 0.0
    %1750 = vmatpush1.msra.mxu0 0.0
    %1751 = vmatprep.subr.mxu0 0.0
    %1752 = vmatpush1.msra.mxu0 0.0
    %1753 = vmatprep.subr.mxu0 0.0
    %1754 = vmatpush1.msra.mxu0 0.0
    %1755 = vmatprep.subr.mxu0 0.0
    %1756 = vmatpush1.msra.mxu0 0.0
    %1757 = vmatprep.subr.mxu0 0.0
    %1758 = vmatpush1.msra.mxu0 0.0
    %1759 = vmatprep.subr.mxu0 0.0
    %1760 = vmatpush1.msra.mxu0 0.0
    %1761 = vmatprep.subr.mxu0 0.0
    %1762 = vmatpush1.msra.mxu0 0.0
    %1763 = vmatprep.subr.mxu0 0.0
    %1764 = vmatpush1.msra.mxu0 0.0
    %1765 = vmatprep.subr.mxu0 0.0
    %1766 = vmatpush1.msra.mxu0 0.0
    %1767 = vmatprep.subr.mxu0 0.0
    %1768 = vmatpush1.msra.mxu0 0.0
    %1769 = vmatprep.subr.mxu0 0.0
    %1770 = vmatpush1.msra.mxu0 0.0
    %1771 = vmatprep.subr.mxu0 0.0
    %1772 = vmatpush1.msra.mxu0 0.0
    %1773 = vmatprep.subr.mxu0 0.0
    %1774 = vmatpush1.msra.mxu0 0.0
    %1775 = vmatprep.mubr.f32.mxu0 0.0
    %1776 = vmatmul.mubr.f32.gmra.mrb[0].mxu0 %v1710
    %v1777 = vpop.f32.mrb[0].mxu0
    %v1778 = vadd.f32 %v369, %v1777
    %v1779 = vpop.f32.mrb[0].mxu0
    %v1780 = vadd.f32 %v373, %v1779
    %1781 = vdwg.mxu0
    %1782 = vmatprep.subr.mxu0 0.0
    %1783 = vmatpush1.msra.mxu0 %v317
    %1784 = vmatprep.subr.mxu0 0.0
    %1785 = vmatpush1.msra.mxu0 %v320
    %1786 = vmatprep.subr.mxu0 0.0
    %1787 = vmatpush1.msra.mxu0 %v323
    %1788 = vmatprep.subr.mxu0 0.0
    %1789 = vmatpush1.msra.mxu0 %v326
    %1790 = vmatprep.subr.mxu0 0.0
    %1791 = vmatpush1.msra.mxu0 %v329
    %1792 = vmatprep.subr.mxu0 0.0
    %1793 = vmatpush1.msra.mxu0 %v332
    %1794 = vmatprep.subr.mxu0 0.0
    %1795 = vmatpush1.msra.mxu0 %v335
    %1796 = vmatprep.subr.mxu0 0.0
    %1797 = vmatpush1.msra.mxu0 %v338
    %1798 = vmatprep.subr.mxu0 0.0
    %1799 = vmatpush1.msra.mxu0 %v341
    %1800 = vmatprep.subr.mxu0 0.0
    %1801 = vmatpush1.msra.mxu0 %v344
    %1802 = vmatprep.subr.mxu0 0.0
    %1803 = vmatpush1.msra.mxu0 %v347
    %1804 = vmatprep.subr.mxu0 0.0
    %1805 = vmatpush1.msra.mxu0 %v350
    %1806 = vmatprep.subr.mxu0 0.0
    %1807 = vmatpush1.msra.mxu0 %v353
    %1808 = vmatprep.subr.mxu0 0.0
    %1809 = vmatpush1.msra.mxu0 %v356
    %1810 = vmatprep.subr.mxu0 0.0
    %1811 = vmatpush1.msra.mxu0 %v359
    %1812 = vmatprep.subr.mxu0 0.0
    %1813 = vmatpush1.msra.mxu0 %v362
    %1814 = vmatprep.subr.mxu0 0.0
    %1815 = vmatpush1.msra.mxu0 0.0
    %1816 = vmatprep.subr.mxu0 0.0
    %1817 = vmatpush1.msra.mxu0 0.0
    %1818 = vmatprep.subr.mxu0 0.0
    %1819 = vmatpush1.msra.mxu0 0.0
    %1820 = vmatprep.subr.mxu0 0.0
    %1821 = vmatpush1.msra.mxu0 0.0
    %1822 = vmatprep.subr.mxu0 0.0
    %1823 = vmatpush1.msra.mxu0 0.0
    %1824 = vmatprep.subr.mxu0 0.0
    %1825 = vmatpush1.msra.mxu0 0.0
    %1826 = vmatprep.subr.mxu0 0.0
    %1827 = vmatpush1.msra.mxu0 0.0
    %1828 = vmatprep.subr.mxu0 0.0
    %1829 = vmatpush1.msra.mxu0 0.0
    %1830 = vmatprep.subr.mxu0 0.0
    %1831 = vmatpush1.msra.mxu0 0.0
    %1832 = vmatprep.subr.mxu0 0.0
    %1833 = vmatpush1.msra.mxu0 0.0
    %1834 = vmatprep.subr.mxu0 0.0
    %1835 = vmatpush1.msra.mxu0 0.0
    %1836 = vmatprep.subr.mxu0 0.0
    %1837 = vmatpush1.msra.mxu0 0.0
    %1838 = vmatprep.subr.mxu0 0.0
    %1839 = vmatpush1.msra.mxu0 0.0
    %1840 = vmatprep.subr.mxu0 0.0
    %1841 = vmatpush1.msra.mxu0 0.0
    %1842 = vmatprep.subr.mxu0 0.0
    %1843 = vmatpush1.msra.mxu0 0.0
    %1844 = vmatprep.subr.mxu0 0.0
    %1845 = vmatpush1.msra.mxu0 0.0
    %1846 = vmatprep.mubr.f32.mxu0 0.0
    %1847 = vmatmul.mubr.f32.gmra.mrb[0].mxu0 %v1710
    %v1848 = vpop.f32.mrb[0].mxu0
    %v1849 = vadd.f32 %v377, %v1848
    %v1850 = vpop.f32.mrb[0].mxu0
    %1851 = vdwg.mxu0
    %v1852 = vadd.f32 %v241, %v1778
    %v1853 = vsub.f32 0.0, %v1852
    %v1854 = vmul.f32 %v1853, 1.442695
    %v1855 = vpow.pop %v1854
    %v1856 = vadd.f32 %v1855, 1.0
    %v1857 = vrcp.pop %v1856
    %v1858 = vmul.f32 1.0, %v1857
    %v1859 = vadd.f32 %v243, %v1780
    %v1860 = vsub.f32 0.0, %v1859
    %v1861 = vmul.f32 %v1860, 1.442695
    %v1862 = vpow.pop %v1861
    %v1863 = vadd.f32 %v1862, 1.0
    %v1864 = vrcp.pop %v1863
    %v1865 = vmul.f32 1.0, %v1864
    %v1866 = vmul.f32 %v1858, %v1849
    %v1867 = vadd.f32 %v312, %v1866
    %v1868 = vtanh.pop %v1867
    %v1869 = vsub.f32 1.0, %v1865
    %v1870 = vmul.f32 %v1869, %v1868
    %v1871 = vmul.f32 %v1865, %v1710
    %v1872 = vadd.f32 %v1870, %v1871
    %v1873 = vsub.f32 %v1872, %v1710
    %v1874 = vmul.f32 %v1873, 0.0125
    %v1875 = vadd.f32 %v1710, %v1874
    %1876 = vmatprep.subr.mxu0 %v316
    %1877 = vmatpush1.msra.mxu0 %v315
    %1878 = vmatprep.subr.mxu0 %v319
    %1879 = vmatpush1.msra.mxu0 %v318
    %1880 = vmatprep.subr.mxu0 %v322
    %1881 = vmatpush1.msra.mxu0 %v321
    %1882 = vmatprep.subr.mxu0 %v325
    %1883 = vmatpush1.msra.mxu0 %v324
    %1884 = vmatprep.subr.mxu0 %v328
    %1885 = vmatpush1.msra.mxu0 %v327
    %1886 = vmatprep.subr.mxu0 %v331
    %1887 = vmatpush1.msra.mxu0 %v330
    %1888 = vmatprep.subr.mxu0 %v334
    %1889 = vmatpush1.msra.mxu0 %v333
    %1890 = vmatprep.subr.mxu0 %v337
    %1891 = vmatpush1.msra.mxu0 %v336
    %1892 = vmatprep.subr.mxu0 %v340
    %1893 = vmatpush1.msra.mxu0 %v339
    %1894 = vmatprep.subr.mxu0 %v343
    %1895 = vmatpush1.msra.mxu0 %v342
    %1896 = vmatprep.subr.mxu0 %v346
    %1897 = vmatpush1.msra.mxu0 %v345
    %1898 = vmatprep.subr.mxu0 %v349
    %1899 = vmatpush1.msra.mxu0 %v348
    %1900 = vmatprep.subr.mxu0 %v352
    %1901 = vmatpush1.msra.mxu0 %v351
    %1902 = vmatprep.subr.mxu0 %v355
    %1903 = vmatpush1.msra.mxu0 %v354
    %1904 = vmatprep.subr.mxu0 %v358
    %1905 = vmatpush1.msra.mxu0 %v357
    %1906 = vmatprep.subr.mxu0 %v361
    %1907 = vmatpush1.msra.mxu0 %v360
    %1908 = vmatprep.subr.mxu0 0.0
    %1909 = vmatpush1.msra.mxu0 0.0
    %1910 = vmatprep.subr.mxu0 0.0
    %1911 = vmatpush1.msra.mxu0 0.0
    %1912 = vmatprep.subr.mxu0 0.0
    %1913 = vmatpush1.msra.mxu0 0.0
    %1914 = vmatprep.subr.mxu0 0.0
    %1915 = vmatpush1.msra.mxu0 0.0
    %1916 = vmatprep.subr.mxu0 0.0
    %1917 = vmatpush1.msra.mxu0 0.0
    %1918 = vmatprep.subr.mxu0 0.0
    %1919 = vmatpush1.msra.mxu0 0.0
    %1920 = vmatprep.subr.mxu0 0.0
    %1921 = vmatpush1.msra.mxu0 0.0
    %1922 = vmatprep.subr.mxu0 0.0
    %1923 = vmatpush1.msra.mxu0 0.0
    %1924 = vmatprep.subr.mxu0 0.0
    %1925 = vmatpush1.msra.mxu0 0.0
    %1926 = vmatprep.subr.mxu0 0.0
    %1927 = vmatpush1.msra.mxu0 0.0
    %1928 = vmatprep.subr.mxu0 0.0
    %1929 = vmatpush1.msra.mxu0 0.0
    %1930 = vmatprep.subr.mxu0 0.0
    %1931 = vmatpush1.msra.mxu0 0.0
    %1932 = vmatprep.subr.mxu0 0.0
    %1933 = vmatpush1.msra.mxu0 0.0
    %1934 = vmatprep.subr.mxu0 0.0
    %1935 = vmatpush1.msra.mxu0 0.0
    %1936 = vmatprep.subr.mxu0 0.0
    %1937 = vmatpush1.msra.mxu0 0.0
    %1938 = vmatprep.subr.mxu0 0.0
    %1939 = vmatpush1.msra.mxu0 0.0
    %1940 = vmatprep.mubr.f32.mxu0 0.0
    %1941 = vmatmul.mubr.f32.gmra.mrb[0].mxu0 %v1875
    %v1942 = vpop.f32.mrb[0].mxu0
    %v1943 = vadd.f32 %v369, %v1942
    %v1944 = vpop.f32.mrb[0].mxu0
    %v1945 = vadd.f32 %v373, %v1944
    %1946 = vdwg.mxu0
    %1947 = vmatprep.subr.mxu0 0.0
    %1948 = vmatpush1.msra.mxu0 %v317
    %1949 = vmatprep.subr.mxu0 0.0
    %1950 = vmatpush1.msra.mxu0 %v320
    %1951 = vmatprep.subr.mxu0 0.0
    %1952 = vmatpush1.msra.mxu0 %v323
    %1953 = vmatprep.subr.mxu0 0.0
    %1954 = vmatpush1.msra.mxu0 %v326
    %1955 = vmatprep.subr.mxu0 0.0
    %1956 = vmatpush1.msra.mxu0 %v329
    %1957 = vmatprep.subr.mxu0 0.0
    %1958 = vmatpush1.msra.mxu0 %v332
    %1959 = vmatprep.subr.mxu0 0.0
    %1960 = vmatpush1.msra.mxu0 %v335
    %1961 = vmatprep.subr.mxu0 0.0
    %1962 = vmatpush1.msra.mxu0 %v338
    %1963 = vmatprep.subr.mxu0 0.0
    %1964 = vmatpush1.msra.mxu0 %v341
    %1965 = vmatprep.subr.mxu0 0.0
    %1966 = vmatpush1.msra.mxu0 %v344
    %1967 = vmatprep.subr.mxu0 0.0
    %1968 = vmatpush1.msra.mxu0 %v347
    %1969 = vmatprep.subr.mxu0 0.0
    %1970 = vmatpush1.msra.mxu0 %v350
    %1971 = vmatprep.subr.mxu0 0.0
    %1972 = vmatpush1.msra.mxu0 %v353
    %1973 = vmatprep.subr.mxu0 0.0
    %1974 = vmatpush1.msra.mxu0 %v356
    %1975 = vmatprep.subr.mxu0 0.0
    %1976 = vmatpush1.msra.mxu0 %v359
    %1977 = vmatprep.subr.mxu0 0.0
    %1978 = vmatpush1.msra.mxu0 %v362
    %1979 = vmatprep.subr.mxu0 0.0
    %1980 = vmatpush1.msra.mxu0 0.0
    %1981 = vmatprep.subr.mxu0 0.0
    %1982 = vmatpush1.msra.mxu0 0.0
    %1983 = vmatprep.subr.mxu0 0.0
    %1984 = vmatpush1.msra.mxu0 0.0
    %1985 = vmatprep.subr.mxu0 0.0
    %1986 = vmatpush1.msra.mxu0 0.0
    %1987 = vmatprep.subr.mxu0 0.0
    %1988 = vmatpush1.msra.mxu0 0.0
    %1989 = vmatprep.subr.mxu0 0.0
    %1990 = vmatpush1.msra.mxu0 0.0
    %1991 = vmatprep.subr.mxu0 0.0
    %1992 = vmatpush1.msra.mxu0 0.0
    %1993 = vmatprep.subr.mxu0 0.0
    %1994 = vmatpush1.msra.mxu0 0.0
    %1995 = vmatprep.subr.mxu0 0.0
    %1996 = vmatpush1.msra.mxu0 0.0
    %1997 = vmatprep.subr.mxu0 0.0
    %1998 = vmatpush1.msra.mxu0 0.0
    %1999 = vmatprep.subr.mxu0 0.0
    %2000 = vmatpush1.msra.mxu0 0.0
    %2001 = vmatprep.subr.mxu0 0.0
    %2002 = vmatpush1.msra.mxu0 0.0
    %2003 = vmatprep.subr.mxu0 0.0
    %2004 = vmatpush1.msra.mxu0 0.0
    %2005 = vmatprep.subr.mxu0 0.0
    %2006 = vmatpush1.msra.mxu0 0.0
    %2007 = vmatprep.subr.mxu0 0.0
    %2008 = vmatpush1.msra.mxu0 0.0
    %2009 = vmatprep.subr.mxu0 0.0
    %2010 = vmatpush1.msra.mxu0 0.0
    %2011 = vmatprep.mubr.f32.mxu0 0.0
    %2012 = vmatmul.mubr.f32.gmra.mrb[0].mxu0 %v1875
    %v2013 = vpop.f32.mrb[0].mxu0
    %v2014 = vadd.f32 %v377, %v2013
    %v2015 = vpop.f32.mrb[0].mxu0
    %2016 = vdwg.mxu0
    %v2017 = vadd.f32 %v241, %v1943
    %v2018 = vsub.f32 0.0, %v2017
    %v2019 = vmul.f32 %v2018, 1.442695
    %v2020 = vpow.pop %v2019
    %v2021 = vadd.f32 %v2020, 1.0
    %v2022 = vrcp.pop %v2021
    %v2023 = vmul.f32 1.0, %v2022
    %v2024 = vadd.f32 %v243, %v1945
    %v2025 = vsub.f32 0.0, %v2024
    %v2026 = vmul.f32 %v2025, 1.442695
    %v2027 = vpow.pop %v2026
    %v2028 = vadd.f32 %v2027, 1.0
    %v2029 = vrcp.pop %v2028
    %v2030 = vmul.f32 1.0, %v2029
    %v2031 = vmul.f32 %v2023, %v2014
    %v2032 = vadd.f32 %v312, %v2031
    %v2033 = vtanh.pop %v2032
    %v2034 = vsub.f32 1.0, %v2030
    %v2035 = vmul.f32 %v2034, %v2033
    %v2036 = vmul.f32 %v2030, %v1875
    %v2037 = vadd.f32 %v2035, %v2036
    %v2038 = vsub.f32 %v2037, %v1875
    %v2039 = vmul.f32 %v2038, 0.0125
    %v2040 = vadd.f32 %v1710, %v2039
    %2041 = vmatprep.subr.mxu0 %v316
    %2042 = vmatpush1.msra.mxu0 %v315
    %2043 = vmatprep.subr.mxu0 %v319
    %2044 = vmatpush1.msra.mxu0 %v318
    %2045 = vmatprep.subr.mxu0 %v322
    %2046 = vmatpush1.msra.mxu0 %v321
    %2047 = vmatprep.subr.mxu0 %v325
    %2048 = vmatpush1.msra.mxu0 %v324
    %2049 = vmatprep.subr.mxu0 %v328
    %2050 = vmatpush1.msra.mxu0 %v327
    %2051 = vmatprep.subr.mxu0 %v331
    %2052 = vmatpush1.msra.mxu0 %v330
    %2053 = vmatprep.subr.mxu0 %v334
    %2054 = vmatpush1.msra.mxu0 %v333
    %2055 = vmatprep.subr.mxu0 %v337
    %2056 = vmatpush1.msra.mxu0 %v336
    %2057 = vmatprep.subr.mxu0 %v340
    %2058 = vmatpush1.msra.mxu0 %v339
    %2059 = vmatprep.subr.mxu0 %v343
    %2060 = vmatpush1.msra.mxu0 %v342
    %2061 = vmatprep.subr.mxu0 %v346
    %2062 = vmatpush1.msra.mxu0 %v345
    %2063 = vmatprep.subr.mxu0 %v349
    %2064 = vmatpush1.msra.mxu0 %v348
    %2065 = vmatprep.subr.mxu0 %v352
    %2066 = vmatpush1.msra.mxu0 %v351
    %2067 = vmatprep.subr.mxu0 %v355
    %2068 = vmatpush1.msra.mxu0 %v354
    %2069 = vmatprep.subr.mxu0 %v358
    %2070 = vmatpush1.msra.mxu0 %v357
    %2071 = vmatprep.subr.mxu0 %v361
    %2072 = vmatpush1.msra.mxu0 %v360
    %2073 = vmatprep.subr.mxu0 0.0
    %2074 = vmatpush1.msra.mxu0 0.0
    %2075 = vmatprep.subr.mxu0 0.0
    %2076 = vmatpush1.msra.mxu0 0.0
    %2077 = vmatprep.subr.mxu0 0.0
    %2078 = vmatpush1.msra.mxu0 0.0
    %2079 = vmatprep.subr.mxu0 0.0
    %2080 = vmatpush1.msra.mxu0 0.0
    %2081 = vmatprep.subr.mxu0 0.0
    %2082 = vmatpush1.msra.mxu0 0.0
    %2083 = vmatprep.subr.mxu0 0.0
    %2084 = vmatpush1.msra.mxu0 0.0
    %2085 = vmatprep.subr.mxu0 0.0
    %2086 = vmatpush1.msra.mxu0 0.0
    %2087 = vmatprep.subr.mxu0 0.0
    %2088 = vmatpush1.msra.mxu0 0.0
    %2089 = vmatprep.subr.mxu0 0.0
    %2090 = vmatpush1.msra.mxu0 0.0
    %2091 = vmatprep.subr.mxu0 0.0
    %2092 = vmatpush1.msra.mxu0 0.0
    %2093 = vmatprep.subr.mxu0 0.0
    %2094 = vmatpush1.msra.mxu0 0.0
    %2095 = vmatprep.subr.mxu0 0.0
    %2096 = vmatpush1.msra.mxu0 0.0
    %2097 = vmatprep.subr.mxu0 0.0
    %2098 = vmatpush1.msra.mxu0 0.0
    %2099 = vmatprep.subr.mxu0 0.0
    %2100 = vmatpush1.msra.mxu0 0.0
    %2101 = vmatprep.subr.mxu0 0.0
    %2102 = vmatpush1.msra.mxu0 0.0
    %2103 = vmatprep.subr.mxu0 0.0
    %2104 = vmatpush1.msra.mxu0 0.0
    %2105 = vmatprep.mubr.f32.mxu0 0.0
    %2106 = vmatmul.mubr.f32.gmra.mrb[0].mxu0 %v2040
    %v2107 = vpop.f32.mrb[0].mxu0
    %v2108 = vadd.f32 %v369, %v2107
    %v2109 = vpop.f32.mrb[0].mxu0
    %v2110 = vadd.f32 %v373, %v2109
    %2111 = vdwg.mxu0
    %2112 = vmatprep.subr.mxu0 0.0
    %2113 = vmatpush1.msra.mxu0 %v317
    %2114 = vmatprep.subr.mxu0 0.0
    %2115 = vmatpush1.msra.mxu0 %v320
    %2116 = vmatprep.subr.mxu0 0.0
    %2117 = vmatpush1.msra.mxu0 %v323
    %2118 = vmatprep.subr.mxu0 0.0
    %2119 = vmatpush1.msra.mxu0 %v326
    %2120 = vmatprep.subr.mxu0 0.0
    %2121 = vmatpush1.msra.mxu0 %v329
    %2122 = vmatprep.subr.mxu0 0.0
    %2123 = vmatpush1.msra.mxu0 %v332
    %2124 = vmatprep.subr.mxu0 0.0
    %2125 = vmatpush1.msra.mxu0 %v335
    %2126 = vmatprep.subr.mxu0 0.0
    %2127 = vmatpush1.msra.mxu0 %v338
    %2128 = vmatprep.subr.mxu0 0.0
    %2129 = vmatpush1.msra.mxu0 %v341
    %2130 = vmatprep.subr.mxu0 0.0
    %2131 = vmatpush1.msra.mxu0 %v344
    %2132 = vmatprep.subr.mxu0 0.0
    %2133 = vmatpush1.msra.mxu0 %v347
    %2134 = vmatprep.subr.mxu0 0.0
    %2135 = vmatpush1.msra.mxu0 %v350
    %2136 = vmatprep.subr.mxu0 0.0
    %2137 = vmatpush1.msra.mxu0 %v353
    %2138 = vmatprep.subr.mxu0 0.0
    %2139 = vmatpush1.msra.mxu0 %v356
    %2140 = vmatprep.subr.mxu0 0.0
    %2141 = vmatpush1.msra.mxu0 %v359
    %2142 = vmatprep.subr.mxu0 0.0
    %2143 = vmatpush1.msra.mxu0 %v362
    %2144 = vmatprep.subr.mxu0 0.0
    %2145 = vmatpush1.msra.mxu0 0.0
    %2146 = vmatprep.subr.mxu0 0.0
    %2147 = vmatpush1.msra.mxu0 0.0
    %2148 = vmatprep.subr.mxu0 0.0
    %2149 = vmatpush1.msra.mxu0 0.0
    %2150 = vmatprep.subr.mxu0 0.0
    %2151 = vmatpush1.msra.mxu0 0.0
    %2152 = vmatprep.subr.mxu0 0.0
    %2153 = vmatpush1.msra.mxu0 0.0
    %2154 = vmatprep.subr.mxu0 0.0
    %2155 = vmatpush1.msra.mxu0 0.0
    %2156 = vmatprep.subr.mxu0 0.0
    %2157 = vmatpush1.msra.mxu0 0.0
    %2158 = vmatprep.subr.mxu0 0.0
    %2159 = vmatpush1.msra.mxu0 0.0
    %2160 = vmatprep.subr.mxu0 0.0
    %2161 = vmatpush1.msra.mxu0 0.0
    %2162 = vmatprep.subr.mxu0 0.0
    %2163 = vmatpush1.msra.mxu0 0.0
    %2164 = vmatprep.subr.mxu0 0.0
    %2165 = vmatpush1.msra.mxu0 0.0
    %2166 = vmatprep.subr.mxu0 0.0
    %2167 = vmatpush1.msra.mxu0 0.0
    %2168 = vmatprep.subr.mxu0 0.0
    %2169 = vmatpush1.msra.mxu0 0.0
    %2170 = vmatprep.subr.mxu0 0.0
    %2171 = vmatpush1.msra.mxu0 0.0
    %2172 = vmatprep.subr.mxu0 0.0
    %2173 = vmatpush1.msra.mxu0 0.0
    %2174 = vmatprep.subr.mxu0 0.0
    %2175 = vmatpush1.msra.mxu0 0.0
    %2176 = vmatprep.mubr.f32.mxu0 0.0
    %2177 = vmatmul.mubr.f32.gmra.mrb[0].mxu0 %v2040
    %v2178 = vpop.f32.mrb[0].mxu0
    %v2179 = vadd.f32 %v377, %v2178
    %v2180 = vpop.f32.mrb[0].mxu0
    %2181 = vdwg.mxu0
    %v2182 = vadd.f32 %v241, %v2108
    %v2183 = vsub.f32 0.0, %v2182
    %v2184 = vmul.f32 %v2183, 1.442695
    %v2185 = vpow.pop %v2184
    %v2186 = vadd.f32 %v2185, 1.0
    %v2187 = vrcp.pop %v2186
    %v2188 = vmul.f32 1.0, %v2187
    %v2189 = vadd.f32 %v243, %v2110
    %v2190 = vsub.f32 0.0, %v2189
    %v2191 = vmul.f32 %v2190, 1.442695
    %v2192 = vpow.pop %v2191
    %v2193 = vadd.f32 %v2192, 1.0
    %v2194 = vrcp.pop %v2193
    %v2195 = vmul.f32 1.0, %v2194
    %v2196 = vmul.f32 %v2188, %v2179
    %v2197 = vadd.f32 %v312, %v2196
    %v2198 = vtanh.pop %v2197
    %v2199 = vsub.f32 1.0, %v2195
    %v2200 = vmul.f32 %v2199, %v2198
    %v2201 = vmul.f32 %v2195, %v2040
    %v2202 = vadd.f32 %v2200, %v2201
    %v2203 = vsub.f32 %v2202, %v2040
    %v2204 = vmul.f32 %v2203, 0.025
    %v2205 = vadd.f32 %v1710, %v2204
    %2206 = vmatprep.subr.mxu0 %v316
    %2207 = vmatpush1.msra.mxu0 %v315
    %2208 = vmatprep.subr.mxu0 %v319
    %2209 = vmatpush1.msra.mxu0 %v318
    %2210 = vmatprep.subr.mxu0 %v322
    %2211 = vmatpush1.msra.mxu0 %v321
    %2212 = vmatprep.subr.mxu0 %v325
    %2213 = vmatpush1.msra.mxu0 %v324
    %2214 = vmatprep.subr.mxu0 %v328
    %2215 = vmatpush1.msra.mxu0 %v327
    %2216 = vmatprep.subr.mxu0 %v331
    %2217 = vmatpush1.msra.mxu0 %v330
    %2218 = vmatprep.subr.mxu0 %v334
    %2219 = vmatpush1.msra.mxu0 %v333
    %2220 = vmatprep.subr.mxu0 %v337
    %2221 = vmatpush1.msra.mxu0 %v336
    %2222 = vmatprep.subr.mxu0 %v340
    %2223 = vmatpush1.msra.mxu0 %v339
    %2224 = vmatprep.subr.mxu0 %v343
    %2225 = vmatpush1.msra.mxu0 %v342
    %2226 = vmatprep.subr.mxu0 %v346
    %2227 = vmatpush1.msra.mxu0 %v345
    %2228 = vmatprep.subr.mxu0 %v349
    %2229 = vmatpush1.msra.mxu0 %v348
    %2230 = vmatprep.subr.mxu0 %v352
    %2231 = vmatpush1.msra.mxu0 %v351
    %2232 = vmatprep.subr.mxu0 %v355
    %2233 = vmatpush1.msra.mxu0 %v354
    %2234 = vmatprep.subr.mxu0 %v358
    %2235 = vmatpush1.msra.mxu0 %v357
    %2236 = vmatprep.subr.mxu0 %v361
    %2237 = vmatpush1.msra.mxu0 %v360
    %2238 = vmatprep.subr.mxu0 0.0
    %2239 = vmatpush1.msra.mxu0 0.0
    %2240 = vmatprep.subr.mxu0 0.0
    %2241 = vmatpush1.msra.mxu0 0.0
    %2242 = vmatprep.subr.mxu0 0.0
    %2243 = vmatpush1.msra.mxu0 0.0
    %2244 = vmatprep.subr.mxu0 0.0
    %2245 = vmatpush1.msra.mxu0 0.0
    %2246 = vmatprep.subr.mxu0 0.0
    %2247 = vmatpush1.msra.mxu0 0.0
    %2248 = vmatprep.subr.mxu0 0.0
    %2249 = vmatpush1.msra.mxu0 0.0
    %2250 = vmatprep.subr.mxu0 0.0
    %2251 = vmatpush1.msra.mxu0 0.0
    %2252 = vmatprep.subr.mxu0 0.0
    %2253 = vmatpush1.msra.mxu0 0.0
    %2254 = vmatprep.subr.mxu0 0.0
    %2255 = vmatpush1.msra.mxu0 0.0
    %2256 = vmatprep.subr.mxu0 0.0
    %2257 = vmatpush1.msra.mxu0 0.0
    %2258 = vmatprep.subr.mxu0 0.0
    %2259 = vmatpush1.msra.mxu0 0.0
    %2260 = vmatprep.subr.mxu0 0.0
    %2261 = vmatpush1.msra.mxu0 0.0
    %2262 = vmatprep.subr.mxu0 0.0
    %2263 = vmatpush1.msra.mxu0 0.0
    %2264 = vmatprep.subr.mxu0 0.0
    %2265 = vmatpush1.msra.mxu0 0.0
    %2266 = vmatprep.subr.mxu0 0.0
    %2267 = vmatpush1.msra.mxu0 0.0
    %2268 = vmatprep.subr.mxu0 0.0
    %2269 = vmatpush1.msra.mxu0 0.0
    %2270 = vmatprep.mubr.f32.mxu0 0.0
    %2271 = vmatmul.mubr.f32.gmra.mrb[0].mxu0 %v2205
    %v2272 = vpop.f32.mrb[0].mxu0
    %v2273 = vadd.f32 %v369, %v2272
    %v2274 = vpop.f32.mrb[0].mxu0
    %v2275 = vadd.f32 %v373, %v2274
    %2276 = vdwg.mxu0
    %2277 = vmatprep.subr.mxu0 0.0
    %2278 = vmatpush1.msra.mxu0 %v317
    %2279 = vmatprep.subr.mxu0 0.0
    %2280 = vmatpush1.msra.mxu0 %v320
    %2281 = vmatprep.subr.mxu0 0.0
    %2282 = vmatpush1.msra.mxu0 %v323
    %2283 = vmatprep.subr.mxu0 0.0
    %2284 = vmatpush1.msra.mxu0 %v326
    %2285 = vmatprep.subr.mxu0 0.0
    %2286 = vmatpush1.msra.mxu0 %v329
    %2287 = vmatprep.subr.mxu0 0.0
    %2288 = vmatpush1.msra.mxu0 %v332
    %2289 = vmatprep.subr.mxu0 0.0
    %2290 = vmatpush1.msra.mxu0 %v335
    %2291 = vmatprep.subr.mxu0 0.0
    %2292 = vmatpush1.msra.mxu0 %v338
    %2293 = vmatprep.subr.mxu0 0.0
    %2294 = vmatpush1.msra.mxu0 %v341
    %2295 = vmatprep.subr.mxu0 0.0
    %2296 = vmatpush1.msra.mxu0 %v344
    %2297 = vmatprep.subr.mxu0 0.0
    %2298 = vmatpush1.msra.mxu0 %v347
    %2299 = vmatprep.subr.mxu0 0.0
    %2300 = vmatpush1.msra.mxu0 %v350
    %2301 = vmatprep.subr.mxu0 0.0
    %2302 = vmatpush1.msra.mxu0 %v353
    %2303 = vmatprep.subr.mxu0 0.0
    %2304 = vmatpush1.msra.mxu0 %v356
    %2305 = vmatprep.subr.mxu0 0.0
    %2306 = vmatpush1.msra.mxu0 %v359
    %2307 = vmatprep.subr.mxu0 0.0
    %2308 = vmatpush1.msra.mxu0 %v362
    %2309 = vmatprep.subr.mxu0 0.0
    %2310 = vmatpush1.msra.mxu0 0.0
    %2311 = vmatprep.subr.mxu0 0.0
    %2312 = vmatpush1.msra.mxu0 0.0
    %2313 = vmatprep.subr.mxu0 0.0
    %2314 = vmatpush1.msra.mxu0 0.0
    %2315 = vmatprep.subr.mxu0 0.0
    %2316 = vmatpush1.msra.mxu0 0.0
    %2317 = vmatprep.subr.mxu0 0.0
    %2318 = vmatpush1.msra.mxu0 0.0
    %2319 = vmatprep.subr.mxu0 0.0
    %2320 = vmatpush1.msra.mxu0 0.0
    %2321 = vmatprep.subr.mxu0 0.0
    %2322 = vmatpush1.msra.mxu0 0.0
    %2323 = vmatprep.subr.mxu0 0.0
    %2324 = vmatpush1.msra.mxu0 0.0
    %2325 = vmatprep.subr.mxu0 0.0
    %2326 = vmatpush1.msra.mxu0 0.0
    %2327 = vmatprep.subr.mxu0 0.0
    %2328 = vmatpush1.msra.mxu0 0.0
    %2329 = vmatprep.subr.mxu0 0.0
    %2330 = vmatpush1.msra.mxu0 0.0
    %2331 = vmatprep.subr.mxu0 0.0
    %2332 = vmatpush1.msra.mxu0 0.0
    %2333 = vmatprep.subr.mxu0 0.0
    %2334 = vmatpush1.msra.mxu0 0.0
    %2335 = vmatprep.subr.mxu0 0.0
    %2336 = vmatpush1.msra.mxu0 0.0
    %2337 = vmatprep.subr.mxu0 0.0
    %2338 = vmatpush1.msra.mxu0 0.0
    %2339 = vmatprep.subr.mxu0 0.0
    %2340 = vmatpush1.msra.mxu0 0.0
    %2341 = vmatprep.mubr.f32.mxu0 0.0
    %2342 = vmatmul.mubr.f32.gmra.mrb[0].mxu0 %v2205
    %v2343 = vpop.f32.mrb[0].mxu0
    %v2344 = vadd.f32 %v377, %v2343
    %v2345 = vpop.f32.mrb[0].mxu0
    %2346 = vdwg.mxu0
    %v2347 = vadd.f32 %v241, %v2273
    %v2348 = vsub.f32 0.0, %v2347
    %v2349 = vmul.f32 %v2348, 1.442695
    %v2350 = vpow.pop %v2349
    %v2351 = vadd.f32 %v2350, 1.0
    %v2352 = vrcp.pop %v2351
    %v2353 = vmul.f32 1.0, %v2352
    %v2354 = vadd.f32 %v243, %v2275
    %v2355 = vsub.f32 0.0, %v2354
    %v2356 = vmul.f32 %v2355, 1.442695
    %v2357 = vpow.pop %v2356
    %v2358 = vadd.f32 %v2357, 1.0
    %v2359 = vrcp.pop %v2358
    %v2360 = vmul.f32 1.0, %v2359
    %v2361 = vmul.f32 %v2353, %v2344
    %v2362 = vadd.f32 %v312, %v2361
    %v2363 = vtanh.pop %v2362
    %v2364 = vsub.f32 1.0, %v2360
    %v2365 = vmul.f32 %v2364, %v2363
    %v2366 = vmul.f32 %v2360, %v2205
    %v2367 = vadd.f32 %v2365, %v2366
    %v2368 = vsub.f32 %v2367, %v2205
    %v2369 = vmul.f32 %v2038, 2.0
    %v2370 = vadd.f32 %v1873, %v2369
    %v2371 = vmul.f32 %v2203, 2.0
    %v2372 = vadd.f32 %v2370, %v2371
    %v2373 = vadd.f32 %v2372, %v2368
    %v2374 = vmul.f32 %v2373, 0.004166667
    %v2375 = vadd.f32 %v1710, %v2374
    %2376 = vmatprep.subr.mxu0 %v316
    %2377 = vmatpush1.msra.mxu0 %v315
    %2378 = vmatprep.subr.mxu0 %v319
    %2379 = vmatpush1.msra.mxu0 %v318
    %2380 = vmatprep.subr.mxu0 %v322
    %2381 = vmatpush1.msra.mxu0 %v321
    %2382 = vmatprep.subr.mxu0 %v325
    %2383 = vmatpush1.msra.mxu0 %v324
    %2384 = vmatprep.subr.mxu0 %v328
    %2385 = vmatpush1.msra.mxu0 %v327
    %2386 = vmatprep.subr.mxu0 %v331
    %2387 = vmatpush1.msra.mxu0 %v330
    %2388 = vmatprep.subr.mxu0 %v334
    %2389 = vmatpush1.msra.mxu0 %v333
    %2390 = vmatprep.subr.mxu0 %v337
    %2391 = vmatpush1.msra.mxu0 %v336
    %2392 = vmatprep.subr.mxu0 %v340
    %2393 = vmatpush1.msra.mxu0 %v339
    %2394 = vmatprep.subr.mxu0 %v343
    %2395 = vmatpush1.msra.mxu0 %v342
    %2396 = vmatprep.subr.mxu0 %v346
    %2397 = vmatpush1.msra.mxu0 %v345
    %2398 = vmatprep.subr.mxu0 %v349
    %2399 = vmatpush1.msra.mxu0 %v348
    %2400 = vmatprep.subr.mxu0 %v352
    %2401 = vmatpush1.msra.mxu0 %v351
    %2402 = vmatprep.subr.mxu0 %v355
    %2403 = vmatpush1.msra.mxu0 %v354
    %2404 = vmatprep.subr.mxu0 %v358
    %2405 = vmatpush1.msra.mxu0 %v357
    %2406 = vmatprep.subr.mxu0 %v361
    %2407 = vmatpush1.msra.mxu0 %v360
    %2408 = vmatprep.subr.mxu0 0.0
    %2409 = vmatpush1.msra.mxu0 0.0
    %2410 = vmatprep.subr.mxu0 0.0
    %2411 = vmatpush1.msra.mxu0 0.0
    %2412 = vmatprep.subr.mxu0 0.0
    %2413 = vmatpush1.msra.mxu0 0.0
    %2414 = vmatprep.subr.mxu0 0.0
    %2415 = vmatpush1.msra.mxu0 0.0
    %2416 = vmatprep.subr.mxu0 0.0
    %2417 = vmatpush1.msra.mxu0 0.0
    %2418 = vmatprep.subr.mxu0 0.0
    %2419 = vmatpush1.msra.mxu0 0.0
    %2420 = vmatprep.subr.mxu0 0.0
    %2421 = vmatpush1.msra.mxu0 0.0
    %2422 = vmatprep.subr.mxu0 0.0
    %2423 = vmatpush1.msra.mxu0 0.0
    %2424 = vmatprep.subr.mxu0 0.0
    %2425 = vmatpush1.msra.mxu0 0.0
    %2426 = vmatprep.subr.mxu0 0.0
    %2427 = vmatpush1.msra.mxu0 0.0
    %2428 = vmatprep.subr.mxu0 0.0
    %2429 = vmatpush1.msra.mxu0 0.0
    %2430 = vmatprep.subr.mxu0 0.0
    %2431 = vmatpush1.msra.mxu0 0.0
    %2432 = vmatprep.subr.mxu0 0.0
    %2433 = vmatpush1.msra.mxu0 0.0
    %2434 = vmatprep.subr.mxu0 0.0
    %2435 = vmatpush1.msra.mxu0 0.0
    %2436 = vmatprep.subr.mxu0 0.0
    %2437 = vmatpush1.msra.mxu0 0.0
    %2438 = vmatprep.subr.mxu0 0.0
    %2439 = vmatpush1.msra.mxu0 0.0
    %2440 = vmatprep.mubr.f32.mxu0 0.0
    %2441 = vmatmul.mubr.f32.gmra.mrb[0].mxu0 %v2375
    %v2442 = vpop.f32.mrb[0].mxu0
    %v2443 = vadd.f32 %v369, %v2442
    %v2444 = vpop.f32.mrb[0].mxu0
    %v2445 = vadd.f32 %v373, %v2444
    %2446 = vdwg.mxu0
    %2447 = vmatprep.subr.mxu0 0.0
    %2448 = vmatpush1.msra.mxu0 %v317
    %2449 = vmatprep.subr.mxu0 0.0
    %2450 = vmatpush1.msra.mxu0 %v320
    %2451 = vmatprep.subr.mxu0 0.0
    %2452 = vmatpush1.msra.mxu0 %v323
    %2453 = vmatprep.subr.mxu0 0.0
    %2454 = vmatpush1.msra.mxu0 %v326
    %2455 = vmatprep.subr.mxu0 0.0
    %2456 = vmatpush1.msra.mxu0 %v329
    %2457 = vmatprep.subr.mxu0 0.0
    %2458 = vmatpush1.msra.mxu0 %v332
    %2459 = vmatprep.subr.mxu0 0.0
    %2460 = vmatpush1.msra.mxu0 %v335
    %2461 = vmatprep.subr.mxu0 0.0
    %2462 = vmatpush1.msra.mxu0 %v338
    %2463 = vmatprep.subr.mxu0 0.0
    %2464 = vmatpush1.msra.mxu0 %v341
    %2465 = vmatprep.subr.mxu0 0.0
    %2466 = vmatpush1.msra.mxu0 %v344
    %2467 = vmatprep.subr.mxu0 0.0
    %2468 = vmatpush1.msra.mxu0 %v347
    %2469 = vmatprep.subr.mxu0 0.0
    %2470 = vmatpush1.msra.mxu0 %v350
    %2471 = vmatprep.subr.mxu0 0.0
    %2472 = vmatpush1.msra.mxu0 %v353
    %2473 = vmatprep.subr.mxu0 0.0
    %2474 = vmatpush1.msra.mxu0 %v356
    %2475 = vmatprep.subr.mxu0 0.0
    %2476 = vmatpush1.msra.mxu0 %v359
    %2477 = vmatprep.subr.mxu0 0.0
    %2478 = vmatpush1.msra.mxu0 %v362
    %2479 = vmatprep.subr.mxu0 0.0
    %2480 = vmatpush1.msra.mxu0 0.0
    %2481 = vmatprep.subr.mxu0 0.0
    %2482 = vmatpush1.msra.mxu0 0.0
    %2483 = vmatprep.subr.mxu0 0.0
    %2484 = vmatpush1.msra.mxu0 0.0
    %2485 = vmatprep.subr.mxu0 0.0
    %2486 = vmatpush1.msra.mxu0 0.0
    %2487 = vmatprep.subr.mxu0 0.0
    %2488 = vmatpush1.msra.mxu0 0.0
    %2489 = vmatprep.subr.mxu0 0.0
    %2490 = vmatpush1.msra.mxu0 0.0
    %2491 = vmatprep.subr.mxu0 0.0
    %2492 = vmatpush1.msra.mxu0 0.0
    %2493 = vmatprep.subr.mxu0 0.0
    %2494 = vmatpush1.msra.mxu0 0.0
    %2495 = vmatprep.subr.mxu0 0.0
    %2496 = vmatpush1.msra.mxu0 0.0
    %2497 = vmatprep.subr.mxu0 0.0
    %2498 = vmatpush1.msra.mxu0 0.0
    %2499 = vmatprep.subr.mxu0 0.0
    %2500 = vmatpush1.msra.mxu0 0.0
    %2501 = vmatprep.subr.mxu0 0.0
    %2502 = vmatpush1.msra.mxu0 0.0
    %2503 = vmatprep.subr.mxu0 0.0
    %2504 = vmatpush1.msra.mxu0 0.0
    %2505 = vmatprep.subr.mxu0 0.0
    %2506 = vmatpush1.msra.mxu0 0.0
    %2507 = vmatprep.subr.mxu0 0.0
    %2508 = vmatpush1.msra.mxu0 0.0
    %2509 = vmatprep.subr.mxu0 0.0
    %2510 = vmatpush1.msra.mxu0 0.0
    %2511 = vmatprep.mubr.f32.mxu0 0.0
    %2512 = vmatmul.mubr.f32.gmra.mrb[0].mxu0 %v2375
    %v2513 = vpop.f32.mrb[0].mxu0
    %v2514 = vadd.f32 %v377, %v2513
    %v2515 = vpop.f32.mrb[0].mxu0
    %2516 = vdwg.mxu0
    %v2517 = vadd.f32 %v241, %v2443
    %v2518 = vsub.f32 0.0, %v2517
    %v2519 = vmul.f32 %v2518, 1.442695
    %v2520 = vpow.pop %v2519
    %v2521 = vadd.f32 %v2520, 1.0
    %v2522 = vrcp.pop %v2521
    %v2523 = vmul.f32 1.0, %v2522
    %v2524 = vadd.f32 %v243, %v2445
    %v2525 = vsub.f32 0.0, %v2524
    %v2526 = vmul.f32 %v2525, 1.442695
    %v2527 = vpow.pop %v2526
    %v2528 = vadd.f32 %v2527, 1.0
    %v2529 = vrcp.pop %v2528
    %v2530 = vmul.f32 1.0, %v2529
    %v2531 = vmul.f32 %v2523, %v2514
    %v2532 = vadd.f32 %v312, %v2531
    %v2533 = vtanh.pop %v2532
    %v2534 = vsub.f32 1.0, %v2530
    %v2535 = vmul.f32 %v2534, %v2533
    %v2536 = vmul.f32 %v2530, %v2375
    %v2537 = vadd.f32 %v2535, %v2536
    %v2538 = vsub.f32 %v2537, %v2375
    %v2539 = vmul.f32 %v2538, 0.0125
    %v2540 = vadd.f32 %v2375, %v2539
    %2541 = vmatprep.subr.mxu0 %v316
    %2542 = vmatpush1.msra.mxu0 %v315
    %2543 = vmatprep.subr.mxu0 %v319
    %2544 = vmatpush1.msra.mxu0 %v318
    %2545 = vmatprep.subr.mxu0 %v322
    %2546 = vmatpush1.msra.mxu0 %v321
    %2547 = vmatprep.subr.mxu0 %v325
    %2548 = vmatpush1.msra.mxu0 %v324
    %2549 = vmatprep.subr.mxu0 %v328
    %2550 = vmatpush1.msra.mxu0 %v327
    %2551 = vmatprep.subr.mxu0 %v331
    %2552 = vmatpush1.msra.mxu0 %v330
    %2553 = vmatprep.subr.mxu0 %v334
    %2554 = vmatpush1.msra.mxu0 %v333
    %2555 = vmatprep.subr.mxu0 %v337
    %2556 = vmatpush1.msra.mxu0 %v336
    %2557 = vmatprep.subr.mxu0 %v340
    %2558 = vmatpush1.msra.mxu0 %v339
    %2559 = vmatprep.subr.mxu0 %v343
    %2560 = vmatpush1.msra.mxu0 %v342
    %2561 = vmatprep.subr.mxu0 %v346
    %2562 = vmatpush1.msra.mxu0 %v345
    %2563 = vmatprep.subr.mxu0 %v349
    %2564 = vmatpush1.msra.mxu0 %v348
    %2565 = vmatprep.subr.mxu0 %v352
    %2566 = vmatpush1.msra.mxu0 %v351
    %2567 = vmatprep.subr.mxu0 %v355
    %2568 = vmatpush1.msra.mxu0 %v354
    %2569 = vmatprep.subr.mxu0 %v358
    %2570 = vmatpush1.msra.mxu0 %v357
    %2571 = vmatprep.subr.mxu0 %v361
    %2572 = vmatpush1.msra.mxu0 %v360
    %2573 = vmatprep.subr.mxu0 0.0
    %2574 = vmatpush1.msra.mxu0 0.0
    %2575 = vmatprep.subr.mxu0 0.0
    %2576 = vmatpush1.msra.mxu0 0.0
    %2577 = vmatprep.subr.mxu0 0.0
    %2578 = vmatpush1.msra.mxu0 0.0
    %2579 = vmatprep.subr.mxu0 0.0
    %2580 = vmatpush1.msra.mxu0 0.0
    %2581 = vmatprep.subr.mxu0 0.0
    %2582 = vmatpush1.msra.mxu0 0.0
    %2583 = vmatprep.subr.mxu0 0.0
    %2584 = vmatpush1.msra.mxu0 0.0
    %2585 = vmatprep.subr.mxu0 0.0
    %2586 = vmatpush1.msra.mxu0 0.0
    %2587 = vmatprep.subr.mxu0 0.0
    %2588 = vmatpush1.msra.mxu0 0.0
    %2589 = vmatprep.subr.mxu0 0.0
    %2590 = vmatpush1.msra.mxu0 0.0
    %2591 = vmatprep.subr.mxu0 0.0
    %2592 = vmatpush1.msra.mxu0 0.0
    %2593 = vmatprep.subr.mxu0 0.0
    %2594 = vmatpush1.msra.mxu0 0.0
    %2595 = vmatprep.subr.mxu0 0.0
    %2596 = vmatpush1.msra.mxu0 0.0
    %2597 = vmatprep.subr.mxu0 0.0
    %2598 = vmatpush1.msra.mxu0 0.0
    %2599 = vmatprep.subr.mxu0 0.0
    %2600 = vmatpush1.msra.mxu0 0.0
    %2601 = vmatprep.subr.mxu0 0.0
    %2602 = vmatpush1.msra.mxu0 0.0
    %2603 = vmatprep.subr.mxu0 0.0
    %2604 = vmatpush1.msra.mxu0 0.0
    %2605 = vmatprep.mubr.f32.mxu0 0.0
    %2606 = vmatmul.mubr.f32.gmra.mrb[0].mxu0 %v2540
    %v2607 = vpop.f32.mrb[0].mxu0
    %v2608 = vadd.f32 %v369, %v2607
    %v2609 = vpop.f32.mrb[0].mxu0
    %v2610 = vadd.f32 %v373, %v2609
    %2611 = vdwg.mxu0
    %2612 = vmatprep.subr.mxu0 0.0
    %2613 = vmatpush1.msra.mxu0 %v317
    %2614 = vmatprep.subr.mxu0 0.0
    %2615 = vmatpush1.msra.mxu0 %v320
    %2616 = vmatprep.subr.mxu0 0.0
    %2617 = vmatpush1.msra.mxu0 %v323
    %2618 = vmatprep.subr.mxu0 0.0
    %2619 = vmatpush1.msra.mxu0 %v326
    %2620 = vmatprep.subr.mxu0 0.0
    %2621 = vmatpush1.msra.mxu0 %v329
    %2622 = vmatprep.subr.mxu0 0.0
    %2623 = vmatpush1.msra.mxu0 %v332
    %2624 = vmatprep.subr.mxu0 0.0
    %2625 = vmatpush1.msra.mxu0 %v335
    %2626 = vmatprep.subr.mxu0 0.0
    %2627 = vmatpush1.msra.mxu0 %v338
    %2628 = vmatprep.subr.mxu0 0.0
    %2629 = vmatpush1.msra.mxu0 %v341
    %2630 = vmatprep.subr.mxu0 0.0
    %2631 = vmatpush1.msra.mxu0 %v344
    %2632 = vmatprep.subr.mxu0 0.0
    %2633 = vmatpush1.msra.mxu0 %v347
    %2634 = vmatprep.subr.mxu0 0.0
    %2635 = vmatpush1.msra.mxu0 %v350
    %2636 = vmatprep.subr.mxu0 0.0
    %2637 = vmatpush1.msra.mxu0 %v353
    %2638 = vmatprep.subr.mxu0 0.0
    %2639 = vmatpush1.msra.mxu0 %v356
    %2640 = vmatprep.subr.mxu0 0.0
    %2641 = vmatpush1.msra.mxu0 %v359
    %2642 = vmatprep.subr.mxu0 0.0
    %2643 = vmatpush1.msra.mxu0 %v362
    %2644 = vmatprep.subr.mxu0 0.0
    %2645 = vmatpush1.msra.mxu0 0.0
    %2646 = vmatprep.subr.mxu0 0.0
    %2647 = vmatpush1.msra.mxu0 0.0
    %2648 = vmatprep.subr.mxu0 0.0
    %2649 = vmatpush1.msra.mxu0 0.0
    %2650 = vmatprep.subr.mxu0 0.0
    %2651 = vmatpush1.msra.mxu0 0.0
    %2652 = vmatprep.subr.mxu0 0.0
    %2653 = vmatpush1.msra.mxu0 0.0
    %2654 = vmatprep.subr.mxu0 0.0
    %2655 = vmatpush1.msra.mxu0 0.0
    %2656 = vmatprep.subr.mxu0 0.0
    %2657 = vmatpush1.msra.mxu0 0.0
    %2658 = vmatprep.subr.mxu0 0.0
    %2659 = vmatpush1.msra.mxu0 0.0
    %2660 = vmatprep.subr.mxu0 0.0
    %2661 = vmatpush1.msra.mxu0 0.0
    %2662 = vmatprep.subr.mxu0 0.0
    %2663 = vmatpush1.msra.mxu0 0.0
    %2664 = vmatprep.subr.mxu0 0.0
    %2665 = vmatpush1.msra.mxu0 0.0
    %2666 = vmatprep.subr.mxu0 0.0
    %2667 = vmatpush1.msra.mxu0 0.0
    %2668 = vmatprep.subr.mxu0 0.0
    %2669 = vmatpush1.msra.mxu0 0.0
    %2670 = vmatprep.subr.mxu0 0.0
    %2671 = vmatpush1.msra.mxu0 0.0
    %2672 = vmatprep.subr.mxu0 0.0
    %2673 = vmatpush1.msra.mxu0 0.0
    %2674 = vmatprep.subr.mxu0 0.0
    %2675 = vmatpush1.msra.mxu0 0.0
    %2676 = vmatprep.mubr.f32.mxu0 0.0
    %2677 = vmatmul.mubr.f32.gmra.mrb[0].mxu0 %v2540
    %v2678 = vpop.f32.mrb[0].mxu0
    %v2679 = vadd.f32 %v377, %v2678
    %v2680 = vpop.f32.mrb[0].mxu0
    %2681 = vdwg.mxu0
    %v2682 = vadd.f32 %v241, %v2608
    %v2683 = vsub.f32 0.0, %v2682
    %v2684 = vmul.f32 %v2683, 1.442695
    %v2685 = vpow.pop %v2684
    %v2686 = vadd.f32 %v2685, 1.0
    %v2687 = vrcp.pop %v2686
    %v2688 = vmul.f32 1.0, %v2687
    %v2689 = vadd.f32 %v243, %v2610
    %v2690 = vsub.f32 0.0, %v2689
    %v2691 = vmul.f32 %v2690, 1.442695
    %v2692 = vpow.pop %v2691
    %v2693 = vadd.f32 %v2692, 1.0
    %v2694 = vrcp.pop %v2693
    %v2695 = vmul.f32 1.0, %v2694
    %v2696 = vmul.f32 %v2688, %v2679
    %v2697 = vadd.f32 %v312, %v2696
    %v2698 = vtanh.pop %v2697
    %v2699 = vsub.f32 1.0, %v2695
    %v2700 = vmul.f32 %v2699, %v2698
    %v2701 = vmul.f32 %v2695, %v2540
    %v2702 = vadd.f32 %v2700, %v2701
    %v2703 = vsub.f32 %v2702, %v2540
    %v2704 = vmul.f32 %v2703, 0.0125
    %v2705 = vadd.f32 %v2375, %v2704
    %2706 = vmatprep.subr.mxu0 %v316
    %2707 = vmatpush1.msra.mxu0 %v315
    %2708 = vmatprep.subr.mxu0 %v319
    %2709 = vmatpush1.msra.mxu0 %v318
    %2710 = vmatprep.subr.mxu0 %v322
    %2711 = vmatpush1.msra.mxu0 %v321
    %2712 = vmatprep.subr.mxu0 %v325
    %2713 = vmatpush1.msra.mxu0 %v324
    %2714 = vmatprep.subr.mxu0 %v328
    %2715 = vmatpush1.msra.mxu0 %v327
    %2716 = vmatprep.subr.mxu0 %v331
    %2717 = vmatpush1.msra.mxu0 %v330
    %2718 = vmatprep.subr.mxu0 %v334
    %2719 = vmatpush1.msra.mxu0 %v333
    %2720 = vmatprep.subr.mxu0 %v337
    %2721 = vmatpush1.msra.mxu0 %v336
    %2722 = vmatprep.subr.mxu0 %v340
    %2723 = vmatpush1.msra.mxu0 %v339
    %2724 = vmatprep.subr.mxu0 %v343
    %2725 = vmatpush1.msra.mxu0 %v342
    %2726 = vmatprep.subr.mxu0 %v346
    %2727 = vmatpush1.msra.mxu0 %v345
    %2728 = vmatprep.subr.mxu0 %v349
    %2729 = vmatpush1.msra.mxu0 %v348
    %2730 = vmatprep.subr.mxu0 %v352
    %2731 = vmatpush1.msra.mxu0 %v351
    %2732 = vmatprep.subr.mxu0 %v355
    %2733 = vmatpush1.msra.mxu0 %v354
    %2734 = vmatprep.subr.mxu0 %v358
    %2735 = vmatpush1.msra.mxu0 %v357
    %2736 = vmatprep.subr.mxu0 %v361
    %2737 = vmatpush1.msra.mxu0 %v360
    %2738 = vmatprep.subr.mxu0 0.0
    %2739 = vmatpush1.msra.mxu0 0.0
    %2740 = vmatprep.subr.mxu0 0.0
    %2741 = vmatpush1.msra.mxu0 0.0
    %2742 = vmatprep.subr.mxu0 0.0
    %2743 = vmatpush1.msra.mxu0 0.0
    %2744 = vmatprep.subr.mxu0 0.0
    %2745 = vmatpush1.msra.mxu0 0.0
    %2746 = vmatprep.subr.mxu0 0.0
    %2747 = vmatpush1.msra.mxu0 0.0
    %2748 = vmatprep.subr.mxu0 0.0
    %2749 = vmatpush1.msra.mxu0 0.0
    %2750 = vmatprep.subr.mxu0 0.0
    %2751 = vmatpush1.msra.mxu0 0.0
    %2752 = vmatprep.subr.mxu0 0.0
    %2753 = vmatpush1.msra.mxu0 0.0
    %2754 = vmatprep.subr.mxu0 0.0
    %2755 = vmatpush1.msra.mxu0 0.0
    %2756 = vmatprep.subr.mxu0 0.0
    %2757 = vmatpush1.msra.mxu0 0.0
    %2758 = vmatprep.subr.mxu0 0.0
    %2759 = vmatpush1.msra.mxu0 0.0
    %2760 = vmatprep.subr.mxu0 0.0
    %2761 = vmatpush1.msra.mxu0 0.0
    %2762 = vmatprep.subr.mxu0 0.0
    %2763 = vmatpush1.msra.mxu0 0.0
    %2764 = vmatprep.subr.mxu0 0.0
    %2765 = vmatpush1.msra.mxu0 0.0
    %2766 = vmatprep.subr.mxu0 0.0
    %2767 = vmatpush1.msra.mxu0 0.0
    %2768 = vmatprep.subr.mxu0 0.0
    %2769 = vmatpush1.msra.mxu0 0.0
    %2770 = vmatprep.mubr.f32.mxu0 0.0
    %2771 = vmatmul.mubr.f32.gmra.mrb[0].mxu0 %v2705
    %v2772 = vpop.f32.mrb[0].mxu0
    %v2773 = vadd.f32 %v369, %v2772
    %v2774 = vpop.f32.mrb[0].mxu0
    %v2775 = vadd.f32 %v373, %v2774
    %2776 = vdwg.mxu0
    %2777 = vmatprep.subr.mxu0 0.0
    %2778 = vmatpush1.msra.mxu0 %v317
    %2779 = vmatprep.subr.mxu0 0.0
    %2780 = vmatpush1.msra.mxu0 %v320
    %2781 = vmatprep.subr.mxu0 0.0
    %2782 = vmatpush1.msra.mxu0 %v323
    %2783 = vmatprep.subr.mxu0 0.0
    %2784 = vmatpush1.msra.mxu0 %v326
    %2785 = vmatprep.subr.mxu0 0.0
    %2786 = vmatpush1.msra.mxu0 %v329
    %2787 = vmatprep.subr.mxu0 0.0
    %2788 = vmatpush1.msra.mxu0 %v332
    %2789 = vmatprep.subr.mxu0 0.0
    %2790 = vmatpush1.msra.mxu0 %v335
    %2791 = vmatprep.subr.mxu0 0.0
    %2792 = vmatpush1.msra.mxu0 %v338
    %2793 = vmatprep.subr.mxu0 0.0
    %2794 = vmatpush1.msra.mxu0 %v341
    %2795 = vmatprep.subr.mxu0 0.0
    %2796 = vmatpush1.msra.mxu0 %v344
    %2797 = vmatprep.subr.mxu0 0.0
    %2798 = vmatpush1.msra.mxu0 %v347
    %2799 = vmatprep.subr.mxu0 0.0
    %2800 = vmatpush1.msra.mxu0 %v350
    %2801 = vmatprep.subr.mxu0 0.0
    %2802 = vmatpush1.msra.mxu0 %v353
    %2803 = vmatprep.subr.mxu0 0.0
    %2804 = vmatpush1.msra.mxu0 %v356
    %2805 = vmatprep.subr.mxu0 0.0
    %2806 = vmatpush1.msra.mxu0 %v359
    %2807 = vmatprep.subr.mxu0 0.0
    %2808 = vmatpush1.msra.mxu0 %v362
    %2809 = vmatprep.subr.mxu0 0.0
    %2810 = vmatpush1.msra.mxu0 0.0
    %2811 = vmatprep.subr.mxu0 0.0
    %2812 = vmatpush1.msra.mxu0 0.0
    %2813 = vmatprep.subr.mxu0 0.0
    %2814 = vmatpush1.msra.mxu0 0.0
    %2815 = vmatprep.subr.mxu0 0.0
    %2816 = vmatpush1.msra.mxu0 0.0
    %2817 = vmatprep.subr.mxu0 0.0
    %2818 = vmatpush1.msra.mxu0 0.0
    %2819 = vmatprep.subr.mxu0 0.0
    %2820 = vmatpush1.msra.mxu0 0.0
    %2821 = vmatprep.subr.mxu0 0.0
    %2822 = vmatpush1.msra.mxu0 0.0
    %2823 = vmatprep.subr.mxu0 0.0
    %2824 = vmatpush1.msra.mxu0 0.0
    %2825 = vmatprep.subr.mxu0 0.0
    %2826 = vmatpush1.msra.mxu0 0.0
    %2827 = vmatprep.subr.mxu0 0.0
    %2828 = vmatpush1.msra.mxu0 0.0
    %2829 = vmatprep.subr.mxu0 0.0
    %2830 = vmatpush1.msra.mxu0 0.0
    %2831 = vmatprep.subr.mxu0 0.0
    %2832 = vmatpush1.msra.mxu0 0.0
    %2833 = vmatprep.subr.mxu0 0.0
    %2834 = vmatpush1.msra.mxu0 0.0
    %2835 = vmatprep.subr.mxu0 0.0
    %2836 = vmatpush1.msra.mxu0 0.0
    %2837 = vmatprep.subr.mxu0 0.0
    %2838 = vmatpush1.msra.mxu0 0.0
    %2839 = vmatprep.subr.mxu0 0.0
    %2840 = vmatpush1.msra.mxu0 0.0
    %2841 = vmatprep.mubr.f32.mxu0 0.0
    %2842 = vmatmul.mubr.f32.gmra.mrb[0].mxu0 %v2705
    %v2843 = vpop.f32.mrb[0].mxu0
    %v2844 = vadd.f32 %v377, %v2843
    %v2845 = vpop.f32.mrb[0].mxu0
    %2846 = vdwg.mxu0
    %v2847 = vadd.f32 %v241, %v2773
    %v2848 = vsub.f32 0.0, %v2847
    %v2849 = vmul.f32 %v2848, 1.442695
    %v2850 = vpow.pop %v2849
    %v2851 = vadd.f32 %v2850, 1.0
    %v2852 = vrcp.pop %v2851
    %v2853 = vmul.f32 1.0, %v2852
    %v2854 = vadd.f32 %v243, %v2775
    %v2855 = vsub.f32 0.0, %v2854
    %v2856 = vmul.f32 %v2855, 1.442695
    %v2857 = vpow.pop %v2856
    %v2858 = vadd.f32 %v2857, 1.0
    %v2859 = vrcp.pop %v2858
    %v2860 = vmul.f32 1.0, %v2859
    %v2861 = vmul.f32 %v2853, %v2844
    %v2862 = vadd.f32 %v312, %v2861
    %v2863 = vtanh.pop %v2862
    %v2864 = vsub.f32 1.0, %v2860
    %v2865 = vmul.f32 %v2864, %v2863
    %v2866 = vmul.f32 %v2860, %v2705
    %v2867 = vadd.f32 %v2865, %v2866
    %v2868 = vsub.f32 %v2867, %v2705
    %v2869 = vmul.f32 %v2868, 0.025
    %v2870 = vadd.f32 %v2375, %v2869
    %2871 = vmatprep.subr.mxu0 %v316
    %2872 = vmatpush1.msra.mxu0 %v315
    %2873 = vmatprep.subr.mxu0 %v319
    %2874 = vmatpush1.msra.mxu0 %v318
    %2875 = vmatprep.subr.mxu0 %v322
    %2876 = vmatpush1.msra.mxu0 %v321
    %2877 = vmatprep.subr.mxu0 %v325
    %2878 = vmatpush1.msra.mxu0 %v324
    %2879 = vmatprep.subr.mxu0 %v328
    %2880 = vmatpush1.msra.mxu0 %v327
    %2881 = vmatprep.subr.mxu0 %v331
    %2882 = vmatpush1.msra.mxu0 %v330
    %2883 = vmatprep.subr.mxu0 %v334
    %2884 = vmatpush1.msra.mxu0 %v333
    %2885 = vmatprep.subr.mxu0 %v337
    %2886 = vmatpush1.msra.mxu0 %v336
    %2887 = vmatprep.subr.mxu0 %v340
    %2888 = vmatpush1.msra.mxu0 %v339
    %2889 = vmatprep.subr.mxu0 %v343
    %2890 = vmatpush1.msra.mxu0 %v342
    %2891 = vmatprep.subr.mxu0 %v346
    %2892 = vmatpush1.msra.mxu0 %v345
    %2893 = vmatprep.subr.mxu0 %v349
    %2894 = vmatpush1.msra.mxu0 %v348
    %2895 = vmatprep.subr.mxu0 %v352
    %2896 = vmatpush1.msra.mxu0 %v351
    %2897 = vmatprep.subr.mxu0 %v355
    %2898 = vmatpush1.msra.mxu0 %v354
    %2899 = vmatprep.subr.mxu0 %v358
    %2900 = vmatpush1.msra.mxu0 %v357
    %2901 = vmatprep.subr.mxu0 %v361
    %2902 = vmatpush1.msra.mxu0 %v360
    %2903 = vmatprep.subr.mxu0 0.0
    %2904 = vmatpush1.msra.mxu0 0.0
    %2905 = vmatprep.subr.mxu0 0.0
    %2906 = vmatpush1.msra.mxu0 0.0
    %2907 = vmatprep.subr.mxu0 0.0
    %2908 = vmatpush1.msra.mxu0 0.0
    %2909 = vmatprep.subr.mxu0 0.0
    %2910 = vmatpush1.msra.mxu0 0.0
    %2911 = vmatprep.subr.mxu0 0.0
    %2912 = vmatpush1.msra.mxu0 0.0
    %2913 = vmatprep.subr.mxu0 0.0
    %2914 = vmatpush1.msra.mxu0 0.0
    %2915 = vmatprep.subr.mxu0 0.0
    %2916 = vmatpush1.msra.mxu0 0.0
    %2917 = vmatprep.subr.mxu0 0.0
    %2918 = vmatpush1.msra.mxu0 0.0
    %2919 = vmatprep.subr.mxu0 0.0
    %2920 = vmatpush1.msra.mxu0 0.0
    %2921 = vmatprep.subr.mxu0 0.0
    %2922 = vmatpush1.msra.mxu0 0.0
    %2923 = vmatprep.subr.mxu0 0.0
    %2924 = vmatpush1.msra.mxu0 0.0
    %2925 = vmatprep.subr.mxu0 0.0
    %2926 = vmatpush1.msra.mxu0 0.0
    %2927 = vmatprep.subr.mxu0 0.0
    %2928 = vmatpush1.msra.mxu0 0.0
    %2929 = vmatprep.subr.mxu0 0.0
    %2930 = vmatpush1.msra.mxu0 0.0
    %2931 = vmatprep.subr.mxu0 0.0
    %2932 = vmatpush1.msra.mxu0 0.0
    %2933 = vmatprep.subr.mxu0 0.0
    %2934 = vmatpush1.msra.mxu0 0.0
    %2935 = vmatprep.mubr.f32.mxu0 0.0
    %2936 = vmatmul.mubr.f32.gmra.mrb[0].mxu0 %v2870
    %v2937 = vpop.f32.mrb[0].mxu0
    %v2938 = vadd.f32 %v369, %v2937
    %v2939 = vpop.f32.mrb[0].mxu0
    %v2940 = vadd.f32 %v373, %v2939
    %2941 = vdwg.mxu0
    %2942 = vmatprep.subr.mxu0 0.0
    %2943 = vmatpush1.msra.mxu0 %v317
    %2944 = vmatprep.subr.mxu0 0.0
    %2945 = vmatpush1.msra.mxu0 %v320
    %2946 = vmatprep.subr.mxu0 0.0
    %2947 = vmatpush1.msra.mxu0 %v323
    %2948 = vmatprep.subr.mxu0 0.0
    %2949 = vmatpush1.msra.mxu0 %v326
    %2950 = vmatprep.subr.mxu0 0.0
    %2951 = vmatpush1.msra.mxu0 %v329
    %2952 = vmatprep.subr.mxu0 0.0
    %2953 = vmatpush1.msra.mxu0 %v332
    %2954 = vmatprep.subr.mxu0 0.0
    %2955 = vmatpush1.msra.mxu0 %v335
    %2956 = vmatprep.subr.mxu0 0.0
    %2957 = vmatpush1.msra.mxu0 %v338
    %2958 = vmatprep.subr.mxu0 0.0
    %2959 = vmatpush1.msra.mxu0 %v341
    %2960 = vmatprep.subr.mxu0 0.0
    %2961 = vmatpush1.msra.mxu0 %v344
    %2962 = vmatprep.subr.mxu0 0.0
    %2963 = vmatpush1.msra.mxu0 %v347
    %2964 = vmatprep.subr.mxu0 0.0
    %2965 = vmatpush1.msra.mxu0 %v350
    %2966 = vmatprep.subr.mxu0 0.0
    %2967 = vmatpush1.msra.mxu0 %v353
    %2968 = vmatprep.subr.mxu0 0.0
    %2969 = vmatpush1.msra.mxu0 %v356
    %2970 = vmatprep.subr.mxu0 0.0
    %2971 = vmatpush1.msra.mxu0 %v359
    %2972 = vmatprep.subr.mxu0 0.0
    %2973 = vmatpush1.msra.mxu0 %v362
    %2974 = vmatprep.subr.mxu0 0.0
    %2975 = vmatpush1.msra.mxu0 0.0
    %2976 = vmatprep.subr.mxu0 0.0
    %2977 = vmatpush1.msra.mxu0 0.0
    %2978 = vmatprep.subr.mxu0 0.0
    %2979 = vmatpush1.msra.mxu0 0.0
    %2980 = vmatprep.subr.mxu0 0.0
    %2981 = vmatpush1.msra.mxu0 0.0
    %2982 = vmatprep.subr.mxu0 0.0
    %2983 = vmatpush1.msra.mxu0 0.0
    %2984 = vmatprep.subr.mxu0 0.0
    %2985 = vmatpush1.msra.mxu0 0.0
    %2986 = vmatprep.subr.mxu0 0.0
    %2987 = vmatpush1.msra.mxu0 0.0
    %2988 = vmatprep.subr.mxu0 0.0
    %2989 = vmatpush1.msra.mxu0 0.0
    %2990 = vmatprep.subr.mxu0 0.0
    %2991 = vmatpush1.msra.mxu0 0.0
    %2992 = vmatprep.subr.mxu0 0.0
    %2993 = vmatpush1.msra.mxu0 0.0
    %2994 = vmatprep.subr.mxu0 0.0
    %2995 = vmatpush1.msra.mxu0 0.0
    %2996 = vmatprep.subr.mxu0 0.0
    %2997 = vmatpush1.msra.mxu0 0.0
    %2998 = vmatprep.subr.mxu0 0.0
    %2999 = vmatpush1.msra.mxu0 0.0
    %3000 = vmatprep.subr.mxu0 0.0
    %3001 = vmatpush1.msra.mxu0 0.0
    %3002 = vmatprep.subr.mxu0 0.0
    %3003 = vmatpush1.msra.mxu0 0.0
    %3004 = vmatprep.subr.mxu0 0.0
    %3005 = vmatpush1.msra.mxu0 0.0
    %3006 = vmatprep.mubr.f32.mxu0 0.0
    %3007 = vmatmul.mubr.f32.gmra.mrb[0].mxu0 %v2870
    %v3008 = vpop.f32.mrb[0].mxu0
    %v3009 = vadd.f32 %v377, %v3008
    %v3010 = vpop.f32.mrb[0].mxu0
    %3011 = vdwg.mxu0
    %v3012 = vadd.f32 %v241, %v2938
    %v3013 = vsub.f32 0.0, %v3012
    %v3014 = vmul.f32 %v3013, 1.442695
    %v3015 = vpow.pop %v3014
    %v3016 = vadd.f32 %v3015, 1.0
    %v3017 = vrcp.pop %v3016
    %v3018 = vmul.f32 1.0, %v3017
    %v3019 = vadd.f32 %v243, %v2940
    %v3020 = vsub.f32 0.0, %v3019
    %v3021 = vmul.f32 %v3020, 1.442695
    %v3022 = vpow.pop %v3021
    %v3023 = vadd.f32 %v3022, 1.0
    %v3024 = vrcp.pop %v3023
    %v3025 = vmul.f32 1.0, %v3024
    %v3026 = vmul.f32 %v3018, %v3009
    %v3027 = vadd.f32 %v312, %v3026
    %v3028 = vtanh.pop %v3027
    %v3029 = vsub.f32 1.0, %v3025
    %v3030 = vmul.f32 %v3029, %v3028
    %v3031 = vmul.f32 %v3025, %v2870
    %v3032 = vadd.f32 %v3030, %v3031
    %v3033 = vsub.f32 %v3032, %v2870
    %v3034 = vmul.f32 %v2703, 2.0
    %v3035 = vadd.f32 %v2538, %v3034
    %v3036 = vmul.f32 %v2868, 2.0
    %v3037 = vadd.f32 %v3035, %v3036
    %v3038 = vadd.f32 %v3037, %v3033
    %v3039 = vmul.f32 %v3038, 0.004166667
    %v3040 = vadd.f32 %v2375, %v3039
    %v3041 = vld [vmem:[#allocation11] sm:$0xff]
    %v3042 = vld [vmem:[#allocation11 + $0x8] sm:$0xff]
    %v3043 = vld [vmem:[#allocation11 + $0x10] sm:$0xff]
    %v3044 = vld [vmem:[#allocation11 + $0x18] sm:$0xff]
    %v3045 = vld [vmem:[#allocation11 + $0x20] sm:$0xff]
    %v3046 = vld [vmem:[#allocation11 + $0x28] sm:$0xff]
    %v3047 = vld [vmem:[#allocation11 + $0x30] sm:$0xff]
    %v3048 = vld [vmem:[#allocation11 + $0x38] sm:$0xff]
    %v3049 = vld [vmem:[#allocation11 + $0x40] sm:$0xff]
    %v3050 = vld [vmem:[#allocation11 + $0x48] sm:$0xff]
    %v3051 = vld [vmem:[#allocation11 + $0x50] sm:$0xff]
    %v3052 = vld [vmem:[#allocation11 + $0x58] sm:$0xff]
    %v3053 = vld [vmem:[#allocation11 + $0x60] sm:$0xff]
    %v3054 = vld [vmem:[#allocation11 + $0x68] sm:$0xff]
    %v3055 = vld [vmem:[#allocation11 + $0x70] sm:$0xff]
    %v3056 = vld [vmem:[#allocation11 + $0x78] sm:$0xff]
    %v3057 = vld [vmem:[%s8] sm:$0x1]
    %v3059 = vlaneseq
    %v3060 = vshrl.u32 %v3059, 7
    %v3061 = vsub.s32 0, %v3060
    %v3062 = vrot.slane %v3057, %v3061
    %3064 = vmatprep.subr.mxu0 0.0
    %3065 = vmatpush1.msra.mxu0 %v3041
    %3066 = vmatprep.subr.mxu0 0.0
    %3067 = vmatpush1.msra.mxu0 %v3042
    %3068 = vmatprep.subr.mxu0 0.0
    %3069 = vmatpush1.msra.mxu0 %v3043
    %3070 = vmatprep.subr.mxu0 0.0
    %3071 = vmatpush1.msra.mxu0 %v3044
    %3072 = vmatprep.subr.mxu0 0.0
    %3073 = vmatpush1.msra.mxu0 %v3045
    %3074 = vmatprep.subr.mxu0 0.0
    %3075 = vmatpush1.msra.mxu0 %v3046
    %3076 = vmatprep.subr.mxu0 0.0
    %3077 = vmatpush1.msra.mxu0 %v3047
    %3078 = vmatprep.subr.mxu0 0.0
    %3079 = vmatpush1.msra.mxu0 %v3048
    %3080 = vmatprep.subr.mxu0 0.0
    %3081 = vmatpush1.msra.mxu0 %v3049
    %3082 = vmatprep.subr.mxu0 0.0
    %3083 = vmatpush1.msra.mxu0 %v3050
    %3084 = vmatprep.subr.mxu0 0.0
    %3085 = vmatpush1.msra.mxu0 %v3051
    %3086 = vmatprep.subr.mxu0 0.0
    %3087 = vmatpush1.msra.mxu0 %v3052
    %3088 = vmatprep.subr.mxu0 0.0
    %3089 = vmatpush1.msra.mxu0 %v3053
    %3090 = vmatprep.subr.mxu0 0.0
    %3091 = vmatpush1.msra.mxu0 %v3054
    %3092 = vmatprep.subr.mxu0 0.0
    %3093 = vmatpush1.msra.mxu0 %v3055
    %3094 = vmatprep.subr.mxu0 0.0
    %3095 = vmatpush1.msra.mxu0 %v3056
    %3096 = vmatprep.subr.mxu0 0.0
    %3097 = vmatpush1.msra.mxu0 0.0
    %3098 = vmatprep.subr.mxu0 0.0
    %3099 = vmatpush1.msra.mxu0 0.0
    %3100 = vmatprep.subr.mxu0 0.0
    %3101 = vmatpush1.msra.mxu0 0.0
    %3102 = vmatprep.subr.mxu0 0.0
    %3103 = vmatpush1.msra.mxu0 0.0
    %3104 = vmatprep.subr.mxu0 0.0
    %3105 = vmatpush1.msra.mxu0 0.0
    %3106 = vmatprep.subr.mxu0 0.0
    %3107 = vmatpush1.msra.mxu0 0.0
    %3108 = vmatprep.subr.mxu0 0.0
    %3109 = vmatpush1.msra.mxu0 0.0
    %3110 = vmatprep.subr.mxu0 0.0
    %3111 = vmatpush1.msra.mxu0 0.0
    %3112 = vmatprep.subr.mxu0 0.0
    %3113 = vmatpush1.msra.mxu0 0.0
    %3114 = vmatprep.subr.mxu0 0.0
    %3115 = vmatpush1.msra.mxu0 0.0
    %3116 = vmatprep.subr.mxu0 0.0
    %3117 = vmatpush1.msra.mxu0 0.0
    %3118 = vmatprep.subr.mxu0 0.0
    %3119 = vmatpush1.msra.mxu0 0.0
    %3120 = vmatprep.subr.mxu0 0.0
    %3121 = vmatpush1.msra.mxu0 0.0
    %3122 = vmatprep.subr.mxu0 0.0
    %3123 = vmatpush1.msra.mxu0 0.0
    %3124 = vmatprep.subr.mxu0 0.0
    %3125 = vmatpush1.msra.mxu0 0.0
    %3126 = vmatprep.subr.mxu0 0.0
    %3127 = vmatpush1.msra.mxu0 0.0
    %3128 = vmatprep.mubr.f32.mxu0 0.0
    %3129 = vmatmul.mubr.f32.gmra.mrb[0].mxu0 %v3040
    %v3130 = vpop.f32.mrb[0].mxu0
    %v3131 = vadd.f32 %v3062, %v3130
    %v3132 = vpop.f32.mrb[0].mxu0
    %3133 = vdwg.mxu0
    %v3134 = vld [vmem:[%s2] sm:$0xff]
    %v3135 = vld [vmem:[#allocation2] sm:$0x1]
    %v3136 = vld [vmem:[%s9] sm:$0x1]
    %vm3137 = vcmp.eq.s32.totalorder %v3136, 0
    %vm3138 = vcmp.eq.s32.totalorder %v3136, 1
    %v3139 = vsub.f32 %v3131, %v3134
    %v3141 = vlaneseq
    %v3142 = vshrl.u32 %v3141, 7
    %v3143 = vsub.s32 0, %v3142
    %v3144 = vrot.slane %v3135, %v3143
    %3145 = vset.pattern.permute.xlu0 0
    %3146 = vperm.xlu0 %3145, %v3144
    %v3147 = vpop.permute.xlu0 %3146
    %v3149 = vmul.f32 %v3139, %v3147
    %v3150 = vadd.f32 %v3134, %v3149
    %v3151 = vmul.f32 %v3131, %v3147
    %v3152 = vadd.f32 %v3134, %v3151
    %v3153 = vsel %vm3138, 1, 0
    %v3154 = vlaneseq
    %v3155 = vshrl.u32 %v3154, 7
    %v3156 = vsub.s32 0, %v3155
    %v3157 = vrot.slane %v3153, %v3156
    %vm3158 = vcmp.eq.s32.totalorder %v3157, 1
    %v3159 = vsel %vm3158, %v3150, %v3152
    %v3160 = vsel %vm3137, 1, 0
    %v3161 = vlaneseq
    %v3162 = vshrl.u32 %v3161, 7
    %v3163 = vsub.s32 0, %v3162
    %v3164 = vrot.slane %v3160, %v3163
    %vm3165 = vcmp.eq.s32.totalorder %v3164, 1
    %v3166 = vsel %vm3165, %v3131, %v3159
    %3167 = vst [vmem:[#allocation12] sm:$0xff] %v3166
    %3168 = vst [vmem:[#allocation13] sm:$0xff] %v3040
    // Predicated region
    $region66: #{tpu_custom_call.1} parent=1 // pred_check
      _
    $region67: #{tpu_custom_call.1} parent=1 // pred_check_branch
      %3170 = sbr.rel (0) target = $region69
    $region68: #{tpu_custom_call.1} parent=1 // pred_region
      %s3172 = ssub.s32 128, 128
      %3173 = vsyncadd [#allocation5], %s3172
      %s3175 = sshll.u32 [#allocation12], 4
      %s3176 = int_to_ptr.vmem [resolvable:$true] %s3175
      %3178 = dma.vmem_to_hbm [thread:$0]  %s3176, 128, %s11, [#allocation5]
    $region69: #{tpu_custom_call.1} parent=1 // pred_fallthru
      _
    // Predicated region
    $region70: #{tpu_custom_call.1} parent=1 // pred_check
      _
    $region71: #{tpu_custom_call.1} parent=1 // pred_check_branch
      %3180 = sbr.rel (0) target = $region73
    $region72: #{tpu_custom_call.1} parent=1 // pred_region
      %s3182 = ssub.s32 128, 128
      %3183 = vsyncadd [#allocation14], %s3182
      %s3185 = sshll.u32 [#allocation13], 4
      %s3186 = int_to_ptr.vmem [resolvable:$true] %s3185
      %3188 = dma.vmem_to_hbm [thread:$0]  %s3186, 128, %s12, [#allocation14]
    $region73: #{tpu_custom_call.1} parent=1 // pred_fallthru
      _
    // Predicated region
    $region74: #{tpu_custom_call.1} parent=1 // pred_check
      _
    $region75: #{tpu_custom_call.1} parent=1 // pred_check_branch
      %3190 = sbr.rel (0) target = $region77
    $region76: #{tpu_custom_call.1} parent=1 // pred_region
      %3191 = dma.done [#allocation5], 128
    $region77: #{tpu_custom_call.1} parent=1 // pred_fallthru
      _
    // Predicated region
    $region78: #{tpu_custom_call.1} parent=1 // pred_check
      _
    $region79: #{tpu_custom_call.1} parent=1 // pred_check_branch
      %3193 = sbr.rel (0) target = $region81
    $region80: #{tpu_custom_call.1} parent=1 // pred_region
      %3194 = dma.done [#allocation14], 128
    $region81: #{tpu_custom_call.1} parent=1 // pred_fallthru
      _
    %3195 = vsyncpa [#allocation4], 1
    %3196 = vsyncpa [#allocation7], 1
    %3197 = vsyncpa [#allocation10], 1
    %3198 = vsyncpa [#allocation5], 1
    %3199 = vsyncpa [#allocation14], 1

</llo_original>
